<compile_context>
chip_gen: v7x
topology: tpu7x:2x2x1
jax: 0.10.0
libtpu: 0.0.40
codegen_flags: <defaults>
</compile_context>

<pallas_src>
import math

import jax
import jax.numpy as jnp
from jax.experimental import pallas as pl
from jax.experimental.pallas import tpu as pltpu


def _elu(x):
    # PyTorch nn.ELU(alpha=1.0); clamp so the discarded branch never produces inf.
    return jnp.where(x > 0, x, jnp.exp(jnp.minimum(x, 0.0)) - 1.0)


# ----------------------------- the fused kernel -----------------------------

def atcnet_fused_call(x_t, kp, cfg):
    """x_t: (B, T, n_chans) time-major input -> (B, 1, n_outputs) softmax probs."""
    B, T, C = x_t.shape
    F2 = cfg["F2"]
    K1, K2 = cfg["k1"], cfg["k2"]
    p1, p2 = cfg["pool1"], cfg["pool2"]
    T1 = T // p1
    Tc = T1 // p2
    nw, Tw = cfg["n_windows"], cfg["Tw"]
    H, Dh = cfg["num_heads"], cfg["head_dim"]
    E = H * Dh
    K, depth = cfg["tcn_k"], cfg["tcn_depth"]
    n_layers = depth * 2
    n_out = cfg["n_outputs"]

    # PyTorch 'same' padding convention for even kernels: extra pad goes right.
    lp1 = (K1 - 1) // 2
    rp1 = (K1 - 1) - lp1
    lp2 = (K2 - 1) // 2
    rp2 = (K2 - 1) - lp2

    # packed-slab geometry (must match pack_params)
    Rw = max(K1 * C, K2 * F2)                 # conv slab weight rows
    Rm = max(F2, E)                           # per-window mats slab rows
    WM = 3 * E + F2 + n_out                   # wqkv | wo | final_w lanes
    WT = n_layers * F2 + 2 * F2               # tcn weights | tcn scale | tcn shift lanes
    LV = 3 * F2 + 3 * E + n_out               # ln_g|ln_b|bqkv|bo|final_b lanes
    inv_sqrt = 1.0 / math.sqrt(Dh)

    def kernel(x_ref, conv_ref, mats_ref, tcn_ref, vec_ref, out_ref, pool_ref):
        # ---- conv-block parameters (one packed slab) ----
        wm1 = conv_ref[0:K1 * C, 0:F2]        # conv1∘bn1∘conv2 folded (K1*C, F2)
        w3m = conv_ref[0:K2 * F2, F2:2 * F2]  # conv3 im2col weight     (K2*F2, F2)
        s1 = conv_ref[Rw:Rw + 1, 0:F2]        # bn2 scale
        b1 = conv_ref[Rw + 1:Rw + 2, 0:F2]    # bn2 shift (+ folded constants)
        s3 = conv_ref[Rw:Rw + 1, F2:2 * F2]   # bn3 scale
        b3 = conv_ref[Rw + 1:Rw + 2, F2:2 * F2]

        x = x_ref[0]                          # (T, C) this batch element

        # ---- stage 1: merged temporal+spatial conv, bn2, ELU, avg-pool p1 ----
        xp = jnp.concatenate(
            [jnp.zeros((lp1, C), jnp.float32), x, jnp.zeros((rp1, C), jnp.float32)],
            axis=0)                                                   # (T+K1-1, C)
        cols = jnp.concatenate([xp[k:k + T, :] for k in range(K1)], axis=-1)
        h = _elu(jnp.dot(cols, wm1, preferred_element_type=jnp.float32) * s1 + b1)
        pool_ref[...] = h                                             # (T, F2)
        hp = pool_ref[pl.ds(0, T1, stride=p1)]
        for r in range(1, p1):
            hp = hp + pool_ref[pl.ds(r, T1, stride=p1)]
        h = hp * (1.0 / p1)                                           # (T1, F2)

        # ---- stage 2: conv3, bn3, ELU, avg-pool p2 ----
        hpad = jnp.concatenate(
            [jnp.zeros((lp2, F2), jnp.float32), h, jnp.zeros((rp2, F2), jnp.float32)],
            axis=0)                                                   # (T1+K2-1, F2)
        cols2 = jnp.concatenate([hpad[k:k + T1, :] for k in range(K2)], axis=-1)
        h2 = _elu(jnp.dot(cols2, w3m, preferred_element_type=jnp.float32) * s3 + b3)
        pool_ref[0:T1, :] = h2
        pp = pool_ref[pl.ds(0, Tc, stride=p2)]
        for r in range(1, p2):
            pp = pp + pool_ref[pl.ds(r, Tc, stride=p2)]
        pooled = pp * (1.0 / p2)                                      # (Tc, F2)

        # ---- sliding windows: LN + MHA + residual, TCN stack, per-window head ----
        acc = jnp.zeros((1, n_out), jnp.float32)
        for w in range(nw):                   # static unroll (nw small)
            mats = mats_ref[w]                # (Rm, WM)
            tcn = tcn_ref[w]                  # (K*F2, WT)
            vec = vec_ref[w]                  # (1, LV)
            wqkv = mats[0:F2, 0:3 * E]
            wo = mats[0:E, 3 * E:3 * E + F2]
            fw = mats[0:F2, 3 * E + F2:3 * E + F2 + n_out]
            ln_g = vec[:, 0:F2]
            ln_b = vec[:, F2:2 * F2]
            bqkv = vec[:, 2 * F2:2 * F2 + 3 * E]
            bo = vec[:, 2 * F2 + 3 * E:3 * F2 + 3 * E]
            fb = vec[:, 3 * F2 + 3 * E:LV]
            ts = tcn[0:n_layers, n_layers * F2:n_layers * F2 + F2]    # folded BN scale
            tb = tcn[0:n_layers, n_layers * F2 + F2:WT]               # folded BN shift+bias

            xw = pooled[w:w + Tw, :]                                  # (Tw, F2)

            # attention block: LayerNorm(eps=1e-6) + MHA (fused QKV) + residual
            mu = jnp.mean(xw, axis=-1, keepdims=True)
            var = jnp.mean((xw - mu) ** 2, axis=-1, keepdims=True)
            xn = (xw - mu) * jax.lax.rsqrt(var + 1e-6) * ln_g + ln_b
            qkv = jnp.dot(xn, wqkv, preferred_element_type=jnp.float32) + bqkv
            heads = []
            # H=2: kept as a 2-iteration static loop -- batching the heads into one
            # dot_general would need cross-lane transposes that cost more than the
            # single saved MXU push at Dh=4.
            for hh in range(H):
                q = qkv[:, hh * Dh:(hh + 1) * Dh]
                k = qkv[:, E + hh * Dh:E + (hh + 1) * Dh]
                v = qkv[:, 2 * E + hh * Dh:2 * E + (hh + 1) * Dh]
                s = jax.lax.dot_general(q, k, (((1,), (1,)), ((), ())),
                                        preferred_element_type=jnp.float32) * inv_sqrt
                s = s - jnp.max(s, axis=-1, keepdims=True)
                e = jnp.exp(s)
                a = e * pl.reciprocal(jnp.sum(e, axis=-1, keepdims=True), approx=True)
                heads.append(jnp.dot(a, v, preferred_element_type=jnp.float32))
            att = jnp.dot(jnp.concatenate(heads, axis=-1), wo,
                          preferred_element_type=jnp.float32) + bo
            cur = xw + att                     # residual on pre-LN input

            # TCN residual blocks: causal dilated convs as one matmul each
            for d in range(depth):
                dil = 2 ** d
                pad = (K - 1) * dil
                residual = cur
                hin = cur
                for j in range(2):
                    idx = d * 2 + j
                    xpad = jnp.concatenate(
                        [jnp.zeros((pad, F2), jnp.float32), hin], axis=0)
                    cols_t = jnp.concatenate(
                        [xpad[kk * dil:kk * dil + Tw, :] for kk in range(K)], axis=-1)
                    wmat = tcn[:, idx * F2:(idx + 1) * F2]            # (K*F2, F2)
                    y = jnp.dot(cols_t, wmat, preferred_element_type=jnp.float32)
                    hin = _elu(y * ts[idx:idx + 1, :] + tb[idx:idx + 1, :])
                cur = _elu(residual + hin)     # reshaping_conv = Identity (in == out == F2)

            # per-window MaxNormLinear head on the last time step, accumulated
            feat = cur[Tw - 1:Tw, :]                                   # (1, F2)
            acc = acc + jnp.dot(feat, fw, preferred_element_type=jnp.float32) + fb

        # mean over windows + softmax over classes
        z = acc * (1.0 / nw)
        z = z - jnp.max(z, axis=-1, keepdims=True)
        e = jnp.exp(z)
        out_ref[0] = e * pl.reciprocal(jnp.sum(e, axis=-1, keepdims=True), approx=True)

    return pl.pallas_call(
        kernel,
        out_shape=jax.ShapeDtypeStruct((B, 1, n_out), jnp.float32),
        grid=(B,),
        in_specs=[
            pl.BlockSpec((1, T, C), lambda b: (b, 0, 0)),
            pl.BlockSpec((Rw + 2, 2 * F2), lambda b: (0, 0)),
            pl.BlockSpec((nw, Rm, WM), lambda b: (0, 0, 0)),
            pl.BlockSpec((nw, K * F2, WT), lambda b: (0, 0, 0)),
            pl.BlockSpec((nw, 1, LV), lambda b: (0, 0, 0)),
        ],
        out_specs=pl.BlockSpec((1, 1, n_out), lambda b: (b, 0, 0)),
        scratch_shapes=[pltpu.VMEM((T, F2), jnp.float32)],
        compiler_params=pltpu.CompilerParams(dimension_semantics=("parallel",)),
    )(x_t, kp["conv"], kp["mats"], kp["tcn"], kp["vec"])


# ----------------------------- parameter setup -----------------------------

class ParamGen:
    def __init__(self, key):
        self.key = key

    def normal(self, shape, scale=0.1):
        self.key, sub = jax.random.split(self.key)
        return scale * jax.random.normal(sub, shape, jnp.float32)

    def uniform(self, shape, lo, hi):
        self.key, sub = jax.random.split(self.key)
        return jax.random.uniform(sub, shape, jnp.float32, lo, hi)

    def bn(self, c):
        return dict(gamma=1.0 + self.normal((c,)), beta=self.normal((c,)),
                    mean=self.normal((c,)), var=self.uniform((c,), 0.5, 1.5))


def bn_affine(p, eps):
    scale = p["gamma"] / jnp.sqrt(p["var"] + eps)
    shift = p["beta"] - p["mean"] * scale
    return scale.reshape(1, -1), shift.reshape(1, -1)


def max_norm_weight(w_torch, max_norm_val, eps=1e-5):
    # braindecode MaxNormLinear renorm (weight shape (out, in), norm over dim=0)
    norm = jnp.sqrt(jnp.sum(w_torch ** 2, axis=0, keepdims=True))
    norm = jnp.maximum(norm, max_norm_val / 2.0)
    desired = jnp.minimum(norm, max_norm_val)
    return w_torch * desired / (eps + norm)


def init_params(gen, cfg):
    F1, F2 = cfg["F1"], cfg["F2"]
    C = cfg["n_chans"]
    K1, K2, Ktcn = cfg["k1"], cfg["k2"], cfg["tcn_k"]
    E = cfg["num_heads"] * cfg["head_dim"]
    n_out = cfg["n_outputs"]

    conv_block = dict(
        w1=gen.normal((K1, F1)),            # Conv2d(1,F1,(K1,1)) taps
        bn1=gen.bn(F1),
        w2=gen.normal((F2, C)),             # depthwise Conv2d(F1,F2,(1,C),groups=F1)
        bn2=gen.bn(F2),
        w3=gen.normal((K2, F2, F2)),        # Conv2d(F2,F2,(K2,1)) tap-major
        bn3=gen.bn(F2),
    )

    attn = []
    for _ in range(cfg["n_windows"]):
        attn.append(dict(
            ln_g=1.0 + gen.normal((F2,)), ln_b=gen.normal((F2,)),
            wq=gen.normal((F2, E)), bq=gen.normal((E,)),
            wk=gen.normal((F2, E)), bk=gen.normal((E,)),
            wv=gen.normal((F2, E)), bv=gen.normal((E,)),
            wo=gen.normal((E, F2)), bo=gen.normal((F2,)),
        ))

    tcn = []
    for _ in range(cfg["n_windows"]):
        blocks = []
        for _ in range(cfg["tcn_depth"]):
            blocks.append(dict(
                w1=gen.normal((Ktcn, F2, F2)), b1=gen.normal((F2,)), bn1=gen.bn(F2),
                w2=gen.normal((Ktcn, F2, F2)), b2=gen.normal((F2,)), bn2=gen.bn(F2),
            ))
        tcn.append(blocks)

    final = []
    for _ in range(cfg["n_windows"]):
        w_t = gen.normal((n_out, F2), scale=0.3)          # torch layout (out, in)
        w_t = max_norm_weight(w_t, cfg["max_norm"])
        final.append(dict(w=w_t.T, b=gen.normal((n_out,))))

    return dict(conv_block=conv_block, attn=attn, tcn=tcn, final=final)


def pack_params(params, cfg):
    """Fold BatchNorms / biases and pack everything into 4 lane-dense kernel slabs."""
    F2, dm = cfg["F2"], cfg["depth_mult"]
    C = cfg["n_chans"]
    K1, K2, Ktcn = cfg["k1"], cfg["k2"], cfg["tcn_k"]
    E = cfg["num_heads"] * cfg["head_dim"]
    n_out = cfg["n_outputs"]
    nw, depth = cfg["n_windows"], cfg["tcn_depth"]
    n_layers = depth * 2

    cb = params["conv_block"]
    sA, shA = bn_affine(cb["bn1"], 1e-4)                  # (1, F1)
    sB, shB = bn_affine(cb["bn2"], 1e-4)                  # (1, F2)
    sC, shC = bn_affine(cb["bn3"], 1e-4)
    f_parent = jnp.arange(F2) // dm                       # depthwise group of each output
    # conv1 ∘ bn1 ∘ conv2 folded into one (K1*C -> F2) tap conv (all linear, exact).
    w1_per_out = cb["w1"][:, f_parent] * sA[0, f_parent][None, :]      # (K1, F2)
    w_eff = w1_per_out[:, None, :] * cb["w2"].T[None, :, :]            # (K1, C, F2)
    wm1 = w_eff.reshape(K1 * C, F2)
    beff = shA[0, f_parent] * jnp.sum(cb["w2"], axis=1)                # (F2,)
    w3m = cb["w3"].reshape(K2 * F2, F2)

    Rw = max(K1 * C, K2 * F2)
    conv_slab = jnp.zeros((Rw + 2, 2 * F2), jnp.float32)
    conv_slab = conv_slab.at[:K1 * C, :F2].set(wm1)
    conv_slab = conv_slab.at[:K2 * F2, F2:].set(w3m)
    conv_slab = conv_slab.at[Rw, :F2].set(sB[0])
    conv_slab = conv_slab.at[Rw + 1, :F2].set(shB[0] + sB[0] * beff)
    conv_slab = conv_slab.at[Rw, F2:].set(sC[0])
    conv_slab = conv_slab.at[Rw + 1, F2:].set(shC[0])

    # per-window attention / final-layer matrices + bias/LN vectors
    Rm = max(F2, E)
    WM = 3 * E + F2 + n_out
    mats = jnp.zeros((nw, Rm, WM), jnp.float32)
    vec_rows = []
    for w, a in enumerate(params["attn"]):
        wqkv = jnp.concatenate([a["wq"], a["wk"], a["wv"]], axis=1)    # (F2, 3E)
        mats = mats.at[w, :F2, :3 * E].set(wqkv)
        mats = mats.at[w, :E, 3 * E:3 * E + F2].set(a["wo"])
        mats = mats.at[w, :F2, 3 * E + F2:].set(params["final"][w]["w"])
        vec_rows.append(jnp.concatenate(
            [a["ln_g"], a["ln_b"], a["bq"], a["bk"], a["bv"], a["bo"],
             params["final"][w]["b"]])[None, :])
    vec = jnp.stack(vec_rows)                                          # (nw, 1, LV)

    # per-window TCN weights (lane-major, 4 sublane tiles/window instead of 16)
    WT = n_layers * F2 + 2 * F2
    tcn_slab = jnp.zeros((nw, Ktcn * F2, WT), jnp.float32)
    for w in range(nw):
        for d in range(depth):
            blk = params["tcn"][w][d]
            for j, (wname, bname, bnname) in enumerate((("w1", "b1", "bn1"),
                                                        ("w2", "b2", "bn2"))):
                idx = d * 2 + j
                s, sh = bn_affine(blk[bnname], 1e-5)
                wm = blk[wname].reshape(Ktcn * F2, F2)
                tcn_slab = tcn_slab.at[w, :, idx * F2:(idx + 1) * F2].set(wm)
                tcn_slab = tcn_slab.at[w, idx, n_layers * F2:n_layers * F2 + F2].set(s[0])
                tcn_slab = tcn_slab.at[w, idx, n_layers * F2 + F2:].set(
                    sh[0] + s[0] * blk[bname])        # fold conv bias through BN
    return dict(conv=conv_slab, mats=mats, tcn=tcn_slab, vec=vec)


# ----------------------------- forward pass -----------------------------

def atcnet_forward(x, kp, cfg):
    """x: (B, n_chans, T) float32 -> softmax class probabilities (B, n_outputs)."""
    B = x.shape[0]
    x_t = jnp.transpose(x, (0, 2, 1)).astype(jnp.float32)    # (B, T, n_chans)
    probs = atcnet_fused_call(x_t, kp, cfg)                  # (B, 1, n_out)
    return probs.reshape(B, cfg["n_outputs"])


# ----------------------------- driver -----------------------------

if __name__ == "__main__":
    cfg = dict(n_chans=4, n_outputs=3,
               F1=4, depth_mult=2, F2=8,
               k1=8, k2=4, pool1=2, pool2=2,
               n_windows=3, head_dim=4, num_heads=2,
               tcn_depth=2, tcn_k=4, max_norm=0.25,
               input_window_seconds=2, sfreq=16.0)
    T = int(cfg["input_window_seconds"] * cfg["sfreq"])            # 32 time samples
    cfg["T"] = T
    cfg["Tc"] = T // (cfg["pool1"] * cfg["pool2"])                 # 8
    cfg["Tw"] = cfg["Tc"] - cfg["n_windows"] + 1                   # 6

    key = jax.random.PRNGKey(0)
    kx, kparam = jax.random.split(key)
    x = jax.random.normal(kx, (2, cfg["n_chans"], T), jnp.float32)

    params = init_params(ParamGen(kparam), cfg)
    kernel_params = pack_params(params, cfg)

    fwd = jax.jit(lambda xin: atcnet_forward(xin, kernel_params, cfg))
    out = jax.block_until_ready(fwd(x))

    assert out.shape == (2, cfg["n_outputs"])
    assert bool(jnp.all(jnp.isfinite(out)))
    # TODO(synk): Dropout/Dropout2d are train-mode stochastic in PyTorch; here they are
    # identity (eval semantics), and BatchNorm uses synthetic running statistics.
    print("KERNEL_OK")
</pallas_src>

<mosaic_0001>
module attributes {stable_mosaic.version = 11 : i64} {
  func.func @kernel(%arg0: i32, %arg1: memref<1x32x4xf32, #tpu.memory_space<vmem>>, %arg2: memref<34x16xf32, #tpu.memory_space<vmem>>, %arg3: memref<3x8x35xf32, #tpu.memory_space<vmem>>, %arg4: memref<3x32x48xf32, #tpu.memory_space<vmem>>, %arg5: memref<3x1x51xf32, #tpu.memory_space<vmem>>, %arg6: memref<1x1x3xf32, #tpu.memory_space<vmem>>, %arg7: memref<32x8xf32, #tpu.memory_space<vmem>>) attributes {dimension_semantics = [#tpu.dimension_semantics<parallel>], iteration_bounds = array<i64: 2>, scalar_prefetch = 0 : i64, scratch_operands = 1 : i64, tpu.core_type = #tpu.core_type<tc>, window_params = [{transform_indices = @transform_0, window_bounds = array<i64: 1, 32, 4>}, {pipeline_mode = #tpu.pipeline_mode<synchronous>, transform_indices = @transform_1, window_bounds = array<i64: 34, 16>}, {pipeline_mode = #tpu.pipeline_mode<synchronous>, transform_indices = @transform_2, window_bounds = array<i64: 3, 8, 35>}, {pipeline_mode = #tpu.pipeline_mode<synchronous>, transform_indices = @transform_3, window_bounds = array<i64: 3, 32, 48>}, {pipeline_mode = #tpu.pipeline_mode<synchronous>, transform_indices = @transform_4, window_bounds = array<i64: 3, 1, 51>}, {transform_indices = @transform_5, window_bounds = array<i64: 1, 1, 3>}]} {
    %c0 = arith.constant 0 : index
    %c0_0 = arith.constant 0 : index
    %0 = vector.load %arg2[%c0, %c0_0] : memref<34x16xf32, #tpu.memory_space<vmem>>, vector<32x8xf32>
    %c0_1 = arith.constant 0 : index
    %c8 = arith.constant 8 : index
    %1 = vector.load %arg2[%c0_1, %c8] : memref<34x16xf32, #tpu.memory_space<vmem>>, vector<32x8xf32>
    %c32 = arith.constant 32 : index
    %c0_2 = arith.constant 0 : index
    %2 = vector.load %arg2[%c32, %c0_2] : memref<34x16xf32, #tpu.memory_space<vmem>>, vector<1x8xf32>
    %c33 = arith.constant 33 : index
    %c0_3 = arith.constant 0 : index
    %3 = vector.load %arg2[%c33, %c0_3] : memref<34x16xf32, #tpu.memory_space<vmem>>, vector<1x8xf32>
    %c32_4 = arith.constant 32 : index
    %c8_5 = arith.constant 8 : index
    %4 = vector.load %arg2[%c32_4, %c8_5] : memref<34x16xf32, #tpu.memory_space<vmem>>, vector<1x8xf32>
    %c33_6 = arith.constant 33 : index
    %c8_7 = arith.constant 8 : index
    %5 = vector.load %arg2[%c33_6, %c8_7] : memref<34x16xf32, #tpu.memory_space<vmem>>, vector<1x8xf32>
    %c0_8 = arith.constant 0 : index
    %c0_9 = arith.constant 0 : index
    %c0_10 = arith.constant 0 : index
    %6 = vector.load %arg1[%c0_8, %c0_9, %c0_10] : memref<1x32x4xf32, #tpu.memory_space<vmem>>, vector<1x32x4xf32>
    %7 = vector.shape_cast %6 : vector<1x32x4xf32> to vector<32x4xf32>
    %cst = arith.constant 0.000000e+00 : f32
    %8 = vector.broadcast %cst : f32 to vector<3x4xf32>
    %cst_11 = arith.constant 0.000000e+00 : f32
    %9 = vector.broadcast %cst_11 : f32 to vector<4x4xf32>
    %10 = tpu.concatenate %8, %7, %9 in 0 : vector<3x4xf32>, vector<32x4xf32>, vector<4x4xf32> -> vector<39x4xf32>
    %11 = vector.extract_strided_slice %10 {offsets = [0, 0], sizes = [32, 4], strides = [1, 1]} : vector<39x4xf32> to vector<32x4xf32>
    %12 = vector.extract_strided_slice %10 {offsets = [1, 0], sizes = [32, 4], strides = [1, 1]} : vector<39x4xf32> to vector<32x4xf32>
    %13 = vector.extract_strided_slice %10 {offsets = [2, 0], sizes = [32, 4], strides = [1, 1]} : vector<39x4xf32> to vector<32x4xf32>
    %14 = vector.extract_strided_slice %10 {offsets = [3, 0], sizes = [32, 4], strides = [1, 1]} : vector<39x4xf32> to vector<32x4xf32>
    %15 = vector.extract_strided_slice %10 {offsets = [4, 0], sizes = [32, 4], strides = [1, 1]} : vector<39x4xf32> to vector<32x4xf32>
    %16 = vector.extract_strided_slice %10 {offsets = [5, 0], sizes = [32, 4], strides = [1, 1]} : vector<39x4xf32> to vector<32x4xf32>
    %17 = vector.extract_strided_slice %10 {offsets = [6, 0], sizes = [32, 4], strides = [1, 1]} : vector<39x4xf32> to vector<32x4xf32>
    %18 = vector.extract_strided_slice %10 {offsets = [7, 0], sizes = [32, 4], strides = [1, 1]} : vector<39x4xf32> to vector<32x4xf32>
    %19 = tpu.concatenate %11, %12, %13, %14, %15, %16, %17, %18 in 1 : vector<32x4xf32>, vector<32x4xf32>, vector<32x4xf32>, vector<32x4xf32>, vector<32x4xf32>, vector<32x4xf32>, vector<32x4xf32>, vector<32x4xf32> -> vector<32x32xf32>
    %cst_12 = arith.constant dense<0.000000e+00> : vector<32x8xf32>
    %20 = tpu.matmul %19, %0, %cst_12 {dimension_numbers = #tpu.dot_dimension_numbers<[1], [0], [0], [1], [0, 0, 1, 1], [], []>} : vector<32x32xf32>, vector<32x8xf32>, vector<32x8xf32> -> vector<32x8xf32>
    %21 = vector.broadcast %2 : vector<1x8xf32> to vector<32x8xf32>
    %22 = arith.mulf %20, %21 : vector<32x8xf32>
    %23 = vector.broadcast %3 : vector<1x8xf32> to vector<32x8xf32>
    %24 = arith.addf %22, %23 : vector<32x8xf32>
    %cst_13 = arith.constant 0.000000e+00 : f32
    %25 = vector.broadcast %cst_13 : f32 to vector<32x8xf32>
    %26 = arith.cmpf ogt, %24, %25 : vector<32x8xf32>
    %cst_14 = arith.constant 0.000000e+00 : f32
    %27 = vector.broadcast %cst_14 : f32 to vector<32x8xf32>
    %28 = arith.minimumf %24, %27 : vector<32x8xf32>
    %29 = math.exp %28 : vector<32x8xf32>
    %cst_15 = arith.constant 1.000000e+00 : f32
    %30 = vector.broadcast %cst_15 : f32 to vector<32x8xf32>
    %31 = arith.subf %29, %30 : vector<32x8xf32>
    %32 = arith.select %26, %24, %31 : vector<32x8xi1>, vector<32x8xf32>
    %c0_16 = arith.constant 0 : index
    %c0_17 = arith.constant 0 : index
    %33 = vector.load %arg7[%c0_16, %c0_17] : memref<32x8xf32, #tpu.memory_space<vmem>>, vector<32x8xf32>
    tpu.vector_store %arg7[%c0_16, %c0_17], %32 {strides = array<i32>} : memref<32x8xf32, #tpu.memory_space<vmem>>, vector<32x8xf32>,
    %c0_18 = arith.constant 0 : index
    %c0_19 = arith.constant 0 : index
    %34 = tpu.strided_load %arg7[%c0_18, %c0_19] {strides = array<i32: 2, 1>} : memref<32x8xf32, #tpu.memory_space<vmem>>, vector<16x8xf32>
    %c1 = arith.constant 1 : index
    %c0_20 = arith.constant 0 : index
    %35 = tpu.strided_load %arg7[%c1, %c0_20] {strides = array<i32: 2, 1>} : memref<32x8xf32, #tpu.memory_space<vmem>>, vector<16x8xf32>
    %36 = arith.addf %34, %35 : vector<16x8xf32>
    %cst_21 = arith.constant 5.000000e-01 : f32
    %37 = vector.broadcast %cst_21 : f32 to vector<16x8xf32>
    %38 = arith.mulf %36, %37 : vector<16x8xf32>
    %cst_22 = arith.constant 0.000000e+00 : f32
    %39 = vector.broadcast %cst_22 : f32 to vector<1x8xf32>
    %cst_23 = arith.constant 0.000000e+00 : f32
    %40 = vector.broadcast %cst_23 : f32 to vector<2x8xf32>
    %41 = tpu.concatenate %39, %38, %40 in 0 : vector<1x8xf32>, vector<16x8xf32>, vector<2x8xf32> -> vector<19x8xf32>
    %42 = vector.extract_strided_slice %41 {offsets = [0, 0], sizes = [16, 8], strides = [1, 1]} : vector<19x8xf32> to vector<16x8xf32>
    %43 = vector.extract_strided_slice %41 {offsets = [1, 0], sizes = [16, 8], strides = [1, 1]} : vector<19x8xf32> to vector<16x8xf32>
    %44 = vector.extract_strided_slice %41 {offsets = [2, 0], sizes = [16, 8], strides = [1, 1]} : vector<19x8xf32> to vector<16x8xf32>
    %45 = vector.extract_strided_slice %41 {offsets = [3, 0], sizes = [16, 8], strides = [1, 1]} : vector<19x8xf32> to vector<16x8xf32>
    %46 = tpu.concatenate %42, %43, %44, %45 in 1 : vector<16x8xf32>, vector<16x8xf32>, vector<16x8xf32>, vector<16x8xf32> -> vector<16x32xf32>
    %cst_24 = arith.constant dense<0.000000e+00> : vector<16x8xf32>
    %47 = tpu.matmul %46, %1, %cst_24 {dimension_numbers = #tpu.dot_dimension_numbers<[1], [0], [0], [1], [0, 0, 1, 1], [], []>} : vector<16x32xf32>, vector<32x8xf32>, vector<16x8xf32> -> vector<16x8xf32>
    %48 = vector.broadcast %4 : vector<1x8xf32> to vector<16x8xf32>
    %49 = arith.mulf %47, %48 : vector<16x8xf32>
    %50 = vector.broadcast %5 : vector<1x8xf32> to vector<16x8xf32>
    %51 = arith.addf %49, %50 : vector<16x8xf32>
    %cst_25 = arith.constant 0.000000e+00 : f32
    %52 = vector.broadcast %cst_25 : f32 to vector<16x8xf32>
    %53 = arith.cmpf ogt, %51, %52 : vector<16x8xf32>
    %cst_26 = arith.constant 0.000000e+00 : f32
    %54 = vector.broadcast %cst_26 : f32 to vector<16x8xf32>
    %55 = arith.minimumf %51, %54 : vector<16x8xf32>
    %56 = math.exp %55 : vector<16x8xf32>
    %cst_27 = arith.constant 1.000000e+00 : f32
    %57 = vector.broadcast %cst_27 : f32 to vector<16x8xf32>
    %58 = arith.subf %56, %57 : vector<16x8xf32>
    %59 = arith.select %53, %51, %58 : vector<16x8xi1>, vector<16x8xf32>
    %c0_28 = arith.constant 0 : index
    %c0_29 = arith.constant 0 : index
    %60 = vector.load %arg7[%c0_28, %c0_29] : memref<32x8xf32, #tpu.memory_space<vmem>>, vector<16x8xf32>
    tpu.vector_store %arg7[%c0_28, %c0_29], %59 {strides = array<i32>} : memref<32x8xf32, #tpu.memory_space<vmem>>, vector<16x8xf32>,
    %c0_30 = arith.constant 0 : index
    %c0_31 = arith.constant 0 : index
    %61 = tpu.strided_load %arg7[%c0_30, %c0_31] {strides = array<i32: 2, 1>} : memref<32x8xf32, #tpu.memory_space<vmem>>, vector<8x8xf32>
    %c1_32 = arith.constant 1 : index
    %c0_33 = arith.constant 0 : index
    %62 = tpu.strided_load %arg7[%c1_32, %c0_33] {strides = array<i32: 2, 1>} : memref<32x8xf32, #tpu.memory_space<vmem>>, vector<8x8xf32>
    %63 = arith.addf %61, %62 : vector<8x8xf32>
    %cst_34 = arith.constant 5.000000e-01 : f32
    %64 = vector.broadcast %cst_34 : f32 to vector<8x8xf32>
    %65 = arith.mulf %63, %64 : vector<8x8xf32>
    %cst_35 = arith.constant 0.000000e+00 : f32
    %66 = vector.broadcast %cst_35 : f32 to vector<1x3xf32>
    %c0_36 = arith.constant 0 : index
    %c0_37 = arith.constant 0 : index
    %c0_38 = arith.constant 0 : index
    %67 = vector.load %arg3[%c0_36, %c0_37, %c0_38] : memref<3x8x35xf32, #tpu.memory_space<vmem>>, vector<1x8x35xf32>
    %68 = vector.shape_cast %67 : vector<1x8x35xf32> to vector<8x35xf32>
    %c0_39 = arith.constant 0 : index
    %c0_40 = arith.constant 0 : index
    %c0_41 = arith.constant 0 : index
    %69 = vector.load %arg4[%c0_39, %c0_40, %c0_41] : memref<3x32x48xf32, #tpu.memory_space<vmem>>, vector<1x32x48xf32>
    %70 = vector.shape_cast %69 : vector<1x32x48xf32> to vector<32x48xf32>
    %c0_42 = arith.constant 0 : index
    %c0_43 = arith.constant 0 : index
    %c0_44 = arith.constant 0 : index
    %71 = vector.load %arg5[%c0_42, %c0_43, %c0_44] : memref<3x1x51xf32, #tpu.memory_space<vmem>>, vector<1x1x51xf32>
    %72 = vector.shape_cast %71 : vector<1x1x51xf32> to vector<1x51xf32>
    %73 = vector.extract_strided_slice %68 {offsets = [0, 0], sizes = [8, 24], strides = [1, 1]} : vector<8x35xf32> to vector<8x24xf32>
    %74 = vector.extract_strided_slice %68 {offsets = [0, 24], sizes = [8, 8], strides = [1, 1]} : vector<8x35xf32> to vector<8x8xf32>
    %75 = vector.extract_strided_slice %68 {offsets = [0, 32], sizes = [8, 3], strides = [1, 1]} : vector<8x35xf32> to vector<8x3xf32>
    %76 = vector.extract_strided_slice %72 {offsets = [0, 0], sizes = [1, 8], strides = [1, 1]} : vector<1x51xf32> to vector<1x8xf32>
    %77 = vector.extract_strided_slice %72 {offsets = [0, 8], sizes = [1, 8], strides = [1, 1]} : vector<1x51xf32> to vector<1x8xf32>
    %78 = vector.extract_strided_slice %72 {offsets = [0, 16], sizes = [1, 24], strides = [1, 1]} : vector<1x51xf32> to vector<1x24xf32>
    %79 = vector.extract_strided_slice %72 {offsets = [0, 40], sizes = [1, 8], strides = [1, 1]} : vector<1x51xf32> to vector<1x8xf32>
    %80 = vector.extract_strided_slice %72 {offsets = [0, 48], sizes = [1, 3], strides = [1, 1]} : vector<1x51xf32> to vector<1x3xf32>
    %81 = vector.extract_strided_slice %70 {offsets = [0, 32], sizes = [4, 8], strides = [1, 1]} : vector<32x48xf32> to vector<4x8xf32>
    %82 = vector.extract_strided_slice %70 {offsets = [0, 40], sizes = [4, 8], strides = [1, 1]} : vector<32x48xf32> to vector<4x8xf32>
    %83 = vector.extract_strided_slice %65 {offsets = [0, 0], sizes = [6, 8], strides = [1, 1]} : vector<8x8xf32> to vector<6x8xf32>
    %cst_45 = arith.constant dense<0.000000e+00> : vector<6xf32>
    %84 = vector.multi_reduction <add>, %83, %cst_45 [1] : vector<6x8xf32> to vector<6xf32>
    %85 = vector.shape_cast %84 : vector<6xf32> to vector<6x1xf32>
    %cst_46 = arith.constant 8.000000e+00 : f32
    %86 = vector.broadcast %cst_46 : f32 to vector<6x1xf32>
    %87 = arith.divf %85, %86 : vector<6x1xf32>
    %88 = vector.broadcast %87 : vector<6x1xf32> to vector<6x8xf32>
    %89 = arith.subf %83, %88 : vector<6x8xf32>
    %90 = arith.mulf %89, %89 : vector<6x8xf32>
    %cst_47 = arith.constant dense<0.000000e+00> : vector<6xf32>
    %91 = vector.multi_reduction <add>, %90, %cst_47 [1] : vector<6x8xf32> to vector<6xf32>
    %92 = vector.shape_cast %91 : vector<6xf32> to vector<6x1xf32>
    %cst_48 = arith.constant 8.000000e+00 : f32
    %93 = vector.broadcast %cst_48 : f32 to vector<6x1xf32>
    %94 = arith.divf %92, %93 : vector<6x1xf32>
    %95 = vector.broadcast %87 : vector<6x1xf32> to vector<6x8xf32>
    %96 = arith.subf %83, %95 : vector<6x8xf32>
    %cst_49 = arith.constant 9.99999997E-7 : f32
    %97 = vector.broadcast %cst_49 : f32 to vector<6x1xf32>
    %98 = arith.addf %94, %97 : vector<6x1xf32>
    %99 = math.rsqrt %98 : vector<6x1xf32>
    %100 = vector.broadcast %99 : vector<6x1xf32> to vector<6x8xf32>
    %101 = arith.mulf %96, %100 : vector<6x8xf32>
    %102 = vector.broadcast %76 : vector<1x8xf32> to vector<6x8xf32>
    %103 = arith.mulf %101, %102 : vector<6x8xf32>
    %104 = vector.broadcast %77 : vector<1x8xf32> to vector<6x8xf32>
    %105 = arith.addf %103, %104 : vector<6x8xf32>
    %cst_50 = arith.constant dense<0.000000e+00> : vector<6x24xf32>
    %106 = tpu.matmul %105, %73, %cst_50 {dimension_numbers = #tpu.dot_dimension_numbers<[1], [0], [0], [1], [0, 0, 1, 1], [], []>} : vector<6x8xf32>, vector<8x24xf32>, vector<6x24xf32> -> vector<6x24xf32>
    %107 = vector.broadcast %78 : vector<1x24xf32> to vector<6x24xf32>
    %108 = arith.addf %106, %107 : vector<6x24xf32>
    %109 = vector.extract_strided_slice %108 {offsets = [0, 0], sizes = [6, 4], strides = [1, 1]} : vector<6x24xf32> to vector<6x4xf32>
    %110 = vector.extract_strided_slice %108 {offsets = [0, 8], sizes = [6, 4], strides = [1, 1]} : vector<6x24xf32> to vector<6x4xf32>
    %111 = vector.extract_strided_slice %108 {offsets = [0, 16], sizes = [6, 4], strides = [1, 1]} : vector<6x24xf32> to vector<6x4xf32>
    %cst_51 = arith.constant dense<0.000000e+00> : vector<6x6xf32>
    %112 = tpu.matmul %109, %110, %cst_51 {dimension_numbers = #tpu.dot_dimension_numbers<[1], [1], [0], [0], [0, 0, 1, 0], [], []>} : vector<6x4xf32>, vector<6x4xf32>, vector<6x6xf32> -> vector<6x6xf32>
    %cst_52 = arith.constant 5.000000e-01 : f32
    %113 = vector.broadcast %cst_52 : f32 to vector<6x6xf32>
    %114 = arith.mulf %112, %113 : vector<6x6xf32>
    %cst_53 = arith.constant dense<0xFF800000> : vector<6xf32>
    %115 = vector.multi_reduction <maximumf>, %114, %cst_53 [1] : vector<6x6xf32> to vector<6xf32>
    %116 = vector.shape_cast %115 : vector<6xf32> to vector<6x1xf32>
    %117 = vector.broadcast %116 : vector<6x1xf32> to vector<6x6xf32>
    %118 = arith.subf %114, %117 : vector<6x6xf32>
    %119 = math.exp %118 : vector<6x6xf32>
    %cst_54 = arith.constant dense<0.000000e+00> : vector<6xf32>
    %120 = vector.multi_reduction <add>, %119, %cst_54 [1] : vector<6x6xf32> to vector<6xf32>
    %121 = vector.shape_cast %120 : vector<6xf32> to vector<6x1xf32>
    %122 = tpu.reciprocal %121 {approx = true} : vector<6x1xf32> -> vector<6x1xf32>
    %123 = vector.broadcast %122 : vector<6x1xf32> to vector<6x6xf32>
    %124 = arith.mulf %119, %123 : vector<6x6xf32>
    %cst_55 = arith.constant dense<0.000000e+00> : vector<6x4xf32>
    %125 = tpu.matmul %124, %111, %cst_55 {dimension_numbers = #tpu.dot_dimension_numbers<[1], [0], [0], [1], [0, 0, 1, 1], [], []>} : vector<6x6xf32>, vector<6x4xf32>, vector<6x4xf32> -> vector<6x4xf32>
    %126 = vector.extract_strided_slice %108 {offsets = [0, 4], sizes = [6, 4], strides = [1, 1]} : vector<6x24xf32> to vector<6x4xf32>
    %127 = vector.extract_strided_slice %108 {offsets = [0, 12], sizes = [6, 4], strides = [1, 1]} : vector<6x24xf32> to vector<6x4xf32>
    %128 = vector.extract_strided_slice %108 {offsets = [0, 20], sizes = [6, 4], strides = [1, 1]} : vector<6x24xf32> to vector<6x4xf32>
    %cst_56 = arith.constant dense<0.000000e+00> : vector<6x6xf32>
    %129 = tpu.matmul %126, %127, %cst_56 {dimension_numbers = #tpu.dot_dimension_numbers<[1], [1], [0], [0], [0, 0, 1, 0], [], []>} : vector<6x4xf32>, vector<6x4xf32>, vector<6x6xf32> -> vector<6x6xf32>
    %cst_57 = arith.constant 5.000000e-01 : f32
    %130 = vector.broadcast %cst_57 : f32 to vector<6x6xf32>
    %131 = arith.mulf %129, %130 : vector<6x6xf32>
    %cst_58 = arith.constant dense<0xFF800000> : vector<6xf32>
    %132 = vector.multi_reduction <maximumf>, %131, %cst_58 [1] : vector<6x6xf32> to vector<6xf32>
    %133 = vector.shape_cast %132 : vector<6xf32> to vector<6x1xf32>
    %134 = vector.broadcast %133 : vector<6x1xf32> to vector<6x6xf32>
    %135 = arith.subf %131, %134 : vector<6x6xf32>
    %136 = math.exp %135 : vector<6x6xf32>
    %cst_59 = arith.constant dense<0.000000e+00> : vector<6xf32>
    %137 = vector.multi_reduction <add>, %136, %cst_59 [1] : vector<6x6xf32> to vector<6xf32>
    %138 = vector.shape_cast %137 : vector<6xf32> to vector<6x1xf32>
    %139 = tpu.reciprocal %138 {approx = true} : vector<6x1xf32> -> vector<6x1xf32>
    %140 = vector.broadcast %139 : vector<6x1xf32> to vector<6x6xf32>
    %141 = arith.mulf %136, %140 : vector<6x6xf32>
    %cst_60 = arith.constant dense<0.000000e+00> : vector<6x4xf32>
    %142 = tpu.matmul %141, %128, %cst_60 {dimension_numbers = #tpu.dot_dimension_numbers<[1], [0], [0], [1], [0, 0, 1, 1], [], []>} : vector<6x6xf32>, vector<6x4xf32>, vector<6x4xf32> -> vector<6x4xf32>
    %143 = tpu.concatenate %125, %142 in 1 : vector<6x4xf32>, vector<6x4xf32> -> vector<6x8xf32>
    %cst_61 = arith.constant dense<0.000000e+00> : vector<6x8xf32>
    %144 = tpu.matmul %143, %74, %cst_61 {dimension_numbers = #tpu.dot_dimension_numbers<[1], [0], [0], [1], [0, 0, 1, 1], [], []>} : vector<6x8xf32>, vector<8x8xf32>, vector<6x8xf32> -> vector<6x8xf32>
    %145 = vector.broadcast %79 : vector<1x8xf32> to vector<6x8xf32>
    %146 = arith.addf %144, %145 : vector<6x8xf32>
    %147 = arith.addf %83, %146 : vector<6x8xf32>
    %cst_62 = arith.constant 0.000000e+00 : f32
    %148 = vector.broadcast %cst_62 : f32 to vector<3x8xf32>
    %149 = tpu.concatenate %148, %147 in 0 : vector<3x8xf32>, vector<6x8xf32> -> vector<9x8xf32>
    %150 = vector.extract_strided_slice %149 {offsets = [0, 0], sizes = [6, 8], strides = [1, 1]} : vector<9x8xf32> to vector<6x8xf32>
    %151 = vector.extract_strided_slice %149 {offsets = [1, 0], sizes = [6, 8], strides = [1, 1]} : vector<9x8xf32> to vector<6x8xf32>
    %152 = vector.extract_strided_slice %149 {offsets = [2, 0], sizes = [6, 8], strides = [1, 1]} : vector<9x8xf32> to vector<6x8xf32>
    %153 = vector.extract_strided_slice %149 {offsets = [3, 0], sizes = [6, 8], strides = [1, 1]} : vector<9x8xf32> to vector<6x8xf32>
    %154 = tpu.concatenate %150, %151, %152, %153 in 1 : vector<6x8xf32>, vector<6x8xf32>, vector<6x8xf32>, vector<6x8xf32> -> vector<6x32xf32>
    %155 = vector.extract_strided_slice %70 {offsets = [0, 0], sizes = [32, 8], strides = [1, 1]} : vector<32x48xf32> to vector<32x8xf32>
    %cst_63 = arith.constant dense<0.000000e+00> : vector<6x8xf32>
    %156 = tpu.matmul %154, %155, %cst_63 {dimension_numbers = #tpu.dot_dimension_numbers<[1], [0], [0], [1], [0, 0, 1, 1], [], []>} : vector<6x32xf32>, vector<32x8xf32>, vector<6x8xf32> -> vector<6x8xf32>
    %157 = vector.extract_strided_slice %81 {offsets = [0, 0], sizes = [1, 8], strides = [1, 1]} : vector<4x8xf32> to vector<1x8xf32>
    %158 = vector.broadcast %157 : vector<1x8xf32> to vector<6x8xf32>
    %159 = arith.mulf %156, %158 : vector<6x8xf32>
    %160 = vector.extract_strided_slice %82 {offsets = [0, 0], sizes = [1, 8], strides = [1, 1]} : vector<4x8xf32> to vector<1x8xf32>
    %161 = vector.broadcast %160 : vector<1x8xf32> to vector<6x8xf32>
    %162 = arith.addf %159, %161 : vector<6x8xf32>
    %cst_64 = arith.constant 0.000000e+00 : f32
    %163 = vector.broadcast %cst_64 : f32 to vector<6x8xf32>
    %164 = arith.cmpf ogt, %162, %163 : vector<6x8xf32>
    %cst_65 = arith.constant 0.000000e+00 : f32
    %165 = vector.broadcast %cst_65 : f32 to vector<6x8xf32>
    %166 = arith.minimumf %162, %165 : vector<6x8xf32>
    %167 = math.exp %166 : vector<6x8xf32>
    %cst_66 = arith.constant 1.000000e+00 : f32
    %168 = vector.broadcast %cst_66 : f32 to vector<6x8xf32>
    %169 = arith.subf %167, %168 : vector<6x8xf32>
    %170 = arith.select %164, %162, %169 : vector<6x8xi1>, vector<6x8xf32>
    %cst_67 = arith.constant 0.000000e+00 : f32
    %171 = vector.broadcast %cst_67 : f32 to vector<3x8xf32>
    %172 = tpu.concatenate %171, %170 in 0 : vector<3x8xf32>, vector<6x8xf32> -> vector<9x8xf32>
    %173 = vector.extract_strided_slice %172 {offsets = [0, 0], sizes = [6, 8], strides = [1, 1]} : vector<9x8xf32> to vector<6x8xf32>
    %174 = vector.extract_strided_slice %172 {offsets = [1, 0], sizes = [6, 8], strides = [1, 1]} : vector<9x8xf32> to vector<6x8xf32>
    %175 = vector.extract_strided_slice %172 {offsets = [2, 0], sizes = [6, 8], strides = [1, 1]} : vector<9x8xf32> to vector<6x8xf32>
    %176 = vector.extract_strided_slice %172 {offsets = [3, 0], sizes = [6, 8], strides = [1, 1]} : vector<9x8xf32> to vector<6x8xf32>
    %177 = tpu.concatenate %173, %174, %175, %176 in 1 : vector<6x8xf32>, vector<6x8xf32>, vector<6x8xf32>, vector<6x8xf32> -> vector<6x32xf32>
    %178 = vector.extract_strided_slice %70 {offsets = [0, 8], sizes = [32, 8], strides = [1, 1]} : vector<32x48xf32> to vector<32x8xf32>
    %cst_68 = arith.constant dense<0.000000e+00> : vector<6x8xf32>
    %179 = tpu.matmul %177, %178, %cst_68 {dimension_numbers = #tpu.dot_dimension_numbers<[1], [0], [0], [1], [0, 0, 1, 1], [], []>} : vector<6x32xf32>, vector<32x8xf32>, vector<6x8xf32> -> vector<6x8xf32>
    %180 = vector.extract_strided_slice %81 {offsets = [1, 0], sizes = [1, 8], strides = [1, 1]} : vector<4x8xf32> to vector<1x8xf32>
    %181 = vector.broadcast %180 : vector<1x8xf32> to vector<6x8xf32>
    %182 = arith.mulf %179, %181 : vector<6x8xf32>
    %183 = vector.extract_strided_slice %82 {offsets = [1, 0], sizes = [1, 8], strides = [1, 1]} : vector<4x8xf32> to vector<1x8xf32>
    %184 = vector.broadcast %183 : vector<1x8xf32> to vector<6x8xf32>
    %185 = arith.addf %182, %184 : vector<6x8xf32>
    %cst_69 = arith.constant 0.000000e+00 : f32
    %186 = vector.broadcast %cst_69 : f32 to vector<6x8xf32>
    %187 = arith.cmpf ogt, %185, %186 : vector<6x8xf32>
    %cst_70 = arith.constant 0.000000e+00 : f32
    %188 = vector.broadcast %cst_70 : f32 to vector<6x8xf32>
    %189 = arith.minimumf %185, %188 : vector<6x8xf32>
    %190 = math.exp %189 : vector<6x8xf32>
    %cst_71 = arith.constant 1.000000e+00 : f32
    %191 = vector.broadcast %cst_71 : f32 to vector<6x8xf32>
    %192 = arith.subf %190, %191 : vector<6x8xf32>
    %193 = arith.select %187, %185, %192 : vector<6x8xi1>, vector<6x8xf32>
    %194 = arith.addf %147, %193 : vector<6x8xf32>
    %cst_72 = arith.constant 0.000000e+00 : f32
    %195 = vector.broadcast %cst_72 : f32 to vector<6x8xf32>
    %196 = arith.cmpf ogt, %194, %195 : vector<6x8xf32>
    %cst_73 = arith.constant 0.000000e+00 : f32
    %197 = vector.broadcast %cst_73 : f32 to vector<6x8xf32>
    %198 = arith.minimumf %194, %197 : vector<6x8xf32>
    %199 = math.exp %198 : vector<6x8xf32>
    %cst_74 = arith.constant 1.000000e+00 : f32
    %200 = vector.broadcast %cst_74 : f32 to vector<6x8xf32>
    %201 = arith.subf %199, %200 : vector<6x8xf32>
    %202 = arith.select %196, %194, %201 : vector<6x8xi1>, vector<6x8xf32>
    %cst_75 = arith.constant 0.000000e+00 : f32
    %203 = vector.broadcast %cst_75 : f32 to vector<6x8xf32>
    %204 = tpu.concatenate %203, %202 in 0 : vector<6x8xf32>, vector<6x8xf32> -> vector<12x8xf32>
    %205 = vector.extract_strided_slice %204 {offsets = [0, 0], sizes = [6, 8], strides = [1, 1]} : vector<12x8xf32> to vector<6x8xf32>
    %206 = vector.extract_strided_slice %204 {offsets = [2, 0], sizes = [6, 8], strides = [1, 1]} : vector<12x8xf32> to vector<6x8xf32>
    %207 = vector.extract_strided_slice %204 {offsets = [4, 0], sizes = [6, 8], strides = [1, 1]} : vector<12x8xf32> to vector<6x8xf32>
    %208 = vector.extract_strided_slice %204 {offsets = [6, 0], sizes = [6, 8], strides = [1, 1]} : vector<12x8xf32> to vector<6x8xf32>
    %209 = tpu.concatenate %205, %206, %207, %208 in 1 : vector<6x8xf32>, vector<6x8xf32>, vector<6x8xf32>, vector<6x8xf32> -> vector<6x32xf32>
    %210 = vector.extract_strided_slice %70 {offsets = [0, 16], sizes = [32, 8], strides = [1, 1]} : vector<32x48xf32> to vector<32x8xf32>
    %cst_76 = arith.constant dense<0.000000e+00> : vector<6x8xf32>
    %211 = tpu.matmul %209, %210, %cst_76 {dimension_numbers = #tpu.dot_dimension_numbers<[1], [0], [0], [1], [0, 0, 1, 1], [], []>} : vector<6x32xf32>, vector<32x8xf32>, vector<6x8xf32> -> vector<6x8xf32>
    %212 = vector.extract_strided_slice %81 {offsets = [2, 0], sizes = [1, 8], strides = [1, 1]} : vector<4x8xf32> to vector<1x8xf32>
    %213 = vector.broadcast %212 : vector<1x8xf32> to vector<6x8xf32>
    %214 = arith.mulf %211, %213 : vector<6x8xf32>
    %215 = vector.extract_strided_slice %82 {offsets = [2, 0], sizes = [1, 8], strides = [1, 1]} : vector<4x8xf32> to vector<1x8xf32>
    %216 = vector.broadcast %215 : vector<1x8xf32> to vector<6x8xf32>
    %217 = arith.addf %214, %216 : vector<6x8xf32>
    %cst_77 = arith.constant 0.000000e+00 : f32
    %218 = vector.broadcast %cst_77 : f32 to vector<6x8xf32>
    %219 = arith.cmpf ogt, %217, %218 : vector<6x8xf32>
    %cst_78 = arith.constant 0.000000e+00 : f32
    %220 = vector.broadcast %cst_78 : f32 to vector<6x8xf32>
    %221 = arith.minimumf %217, %220 : vector<6x8xf32>
    %222 = math.exp %221 : vector<6x8xf32>
    %cst_79 = arith.constant 1.000000e+00 : f32
    %223 = vector.broadcast %cst_79 : f32 to vector<6x8xf32>
    %224 = arith.subf %222, %223 : vector<6x8xf32>
    %225 = arith.select %219, %217, %224 : vector<6x8xi1>, vector<6x8xf32>
    %cst_80 = arith.constant 0.000000e+00 : f32
    %226 = vector.broadcast %cst_80 : f32 to vector<6x8xf32>
    %227 = tpu.concatenate %226, %225 in 0 : vector<6x8xf32>, vector<6x8xf32> -> vector<12x8xf32>
    %228 = vector.extract_strided_slice %227 {offsets = [0, 0], sizes = [6, 8], strides = [1, 1]} : vector<12x8xf32> to vector<6x8xf32>
    %229 = vector.extract_strided_slice %227 {offsets = [2, 0], sizes = [6, 8], strides = [1, 1]} : vector<12x8xf32> to vector<6x8xf32>
    %230 = vector.extract_strided_slice %227 {offsets = [4, 0], sizes = [6, 8], strides = [1, 1]} : vector<12x8xf32> to vector<6x8xf32>
    %231 = vector.extract_strided_slice %227 {offsets = [6, 0], sizes = [6, 8], strides = [1, 1]} : vector<12x8xf32> to vector<6x8xf32>
    %232 = tpu.concatenate %228, %229, %230, %231 in 1 : vector<6x8xf32>, vector<6x8xf32>, vector<6x8xf32>, vector<6x8xf32> -> vector<6x32xf32>
    %233 = vector.extract_strided_slice %70 {offsets = [0, 24], sizes = [32, 8], strides = [1, 1]} : vector<32x48xf32> to vector<32x8xf32>
    %cst_81 = arith.constant dense<0.000000e+00> : vector<6x8xf32>
    %234 = tpu.matmul %232, %233, %cst_81 {dimension_numbers = #tpu.dot_dimension_numbers<[1], [0], [0], [1], [0, 0, 1, 1], [], []>} : vector<6x32xf32>, vector<32x8xf32>, vector<6x8xf32> -> vector<6x8xf32>
    %235 = vector.extract_strided_slice %81 {offsets = [3, 0], sizes = [1, 8], strides = [1, 1]} : vector<4x8xf32> to vector<1x8xf32>
    %236 = vector.broadcast %235 : vector<1x8xf32> to vector<6x8xf32>
    %237 = arith.mulf %234, %236 : vector<6x8xf32>
    %238 = vector.extract_strided_slice %82 {offsets = [3, 0], sizes = [1, 8], strides = [1, 1]} : vector<4x8xf32> to vector<1x8xf32>
    %239 = vector.broadcast %238 : vector<1x8xf32> to vector<6x8xf32>
    %240 = arith.addf %237, %239 : vector<6x8xf32>
    %cst_82 = arith.constant 0.000000e+00 : f32
    %241 = vector.broadcast %cst_82 : f32 to vector<6x8xf32>
    %242 = arith.cmpf ogt, %240, %241 : vector<6x8xf32>
    %cst_83 = arith.constant 0.000000e+00 : f32
    %243 = vector.broadcast %cst_83 : f32 to vector<6x8xf32>
    %244 = arith.minimumf %240, %243 : vector<6x8xf32>
    %245 = math.exp %244 : vector<6x8xf32>
    %cst_84 = arith.constant 1.000000e+00 : f32
    %246 = vector.broadcast %cst_84 : f32 to vector<6x8xf32>
    %247 = arith.subf %245, %246 : vector<6x8xf32>
    %248 = arith.select %242, %240, %247 : vector<6x8xi1>, vector<6x8xf32>
    %249 = arith.addf %202, %248 : vector<6x8xf32>
    %cst_85 = arith.constant 0.000000e+00 : f32
    %250 = vector.broadcast %cst_85 : f32 to vector<6x8xf32>
    %251 = arith.cmpf ogt, %249, %250 : vector<6x8xf32>
    %cst_86 = arith.constant 0.000000e+00 : f32
    %252 = vector.broadcast %cst_86 : f32 to vector<6x8xf32>
    %253 = arith.minimumf %249, %252 : vector<6x8xf32>
    %254 = math.exp %253 : vector<6x8xf32>
    %cst_87 = arith.constant 1.000000e+00 : f32
    %255 = vector.broadcast %cst_87 : f32 to vector<6x8xf32>
    %256 = arith.subf %254, %255 : vector<6x8xf32>
    %257 = arith.select %251, %249, %256 : vector<6x8xi1>, vector<6x8xf32>
    %258 = vector.extract_strided_slice %257 {offsets = [5, 0], sizes = [1, 8], strides = [1, 1]} : vector<6x8xf32> to vector<1x8xf32>
    %cst_88 = arith.constant dense<0.000000e+00> : vector<1x3xf32>
    %259 = tpu.matmul %258, %75, %cst_88 {dimension_numbers = #tpu.dot_dimension_numbers<[1], [0], [0], [1], [0, 0, 1, 1], [], []>} : vector<1x8xf32>, vector<8x3xf32>, vector<1x3xf32> -> vector<1x3xf32>
    %260 = arith.addf %66, %259 : vector<1x3xf32>
    %261 = arith.addf %260, %80 : vector<1x3xf32>
    %c1_89 = arith.constant 1 : index
    %c0_90 = arith.constant 0 : index
    %c0_91 = arith.constant 0 : index
    %262 = vector.load %arg3[%c1_89, %c0_90, %c0_91] : memref<3x8x35xf32, #tpu.memory_space<vmem>>, vector<1x8x35xf32>
    %263 = vector.shape_cast %262 : vector<1x8x35xf32> to vector<8x35xf32>
    %c1_92 = arith.constant 1 : index
    %c0_93 = arith.constant 0 : index
    %c0_94 = arith.constant 0 : index
    %264 = vector.load %arg4[%c1_92, %c0_93, %c0_94] : memref<3x32x48xf32, #tpu.memory_space<vmem>>, vector<1x32x48xf32>
    %265 = vector.shape_cast %264 : vector<1x32x48xf32> to vector<32x48xf32>
    %c1_95 = arith.constant 1 : index
    %c0_96 = arith.constant 0 : index
    %c0_97 = arith.constant 0 : index
    %266 = vector.load %arg5[%c1_95, %c0_96, %c0_97] : memref<3x1x51xf32, #tpu.memory_space<vmem>>, vector<1x1x51xf32>
    %267 = vector.shape_cast %266 : vector<1x1x51xf32> to vector<1x51xf32>
    %268 = vector.extract_strided_slice %263 {offsets = [0, 0], sizes = [8, 24], strides = [1, 1]} : vector<8x35xf32> to vector<8x24xf32>
    %269 = vector.extract_strided_slice %263 {offsets = [0, 24], sizes = [8, 8], strides = [1, 1]} : vector<8x35xf32> to vector<8x8xf32>
    %270 = vector.extract_strided_slice %263 {offsets = [0, 32], sizes = [8, 3], strides = [1, 1]} : vector<8x35xf32> to vector<8x3xf32>
    %271 = vector.extract_strided_slice %267 {offsets = [0, 0], sizes = [1, 8], strides = [1, 1]} : vector<1x51xf32> to vector<1x8xf32>
    %272 = vector.extract_strided_slice %267 {offsets = [0, 8], sizes = [1, 8], strides = [1, 1]} : vector<1x51xf32> to vector<1x8xf32>
    %273 = vector.extract_strided_slice %267 {offsets = [0, 16], sizes = [1, 24], strides = [1, 1]} : vector<1x51xf32> to vector<1x24xf32>
    %274 = vector.extract_strided_slice %267 {offsets = [0, 40], sizes = [1, 8], strides = [1, 1]} : vector<1x51xf32> to vector<1x8xf32>
    %275 = vector.extract_strided_slice %267 {offsets = [0, 48], sizes = [1, 3], strides = [1, 1]} : vector<1x51xf32> to vector<1x3xf32>
    %276 = vector.extract_strided_slice %265 {offsets = [0, 32], sizes = [4, 8], strides = [1, 1]} : vector<32x48xf32> to vector<4x8xf32>
    %277 = vector.extract_strided_slice %265 {offsets = [0, 40], sizes = [4, 8], strides = [1, 1]} : vector<32x48xf32> to vector<4x8xf32>
    %278 = vector.extract_strided_slice %65 {offsets = [1, 0], sizes = [6, 8], strides = [1, 1]} : vector<8x8xf32> to vector<6x8xf32>
    %cst_98 = arith.constant dense<0.000000e+00> : vector<6xf32>
    %279 = vector.multi_reduction <add>, %278, %cst_98 [1] : vector<6x8xf32> to vector<6xf32>
    %280 = vector.shape_cast %279 : vector<6xf32> to vector<6x1xf32>
    %cst_99 = arith.constant 8.000000e+00 : f32
    %281 = vector.broadcast %cst_99 : f32 to vector<6x1xf32>
    %282 = arith.divf %280, %281 : vector<6x1xf32>
    %283 = vector.broadcast %282 : vector<6x1xf32> to vector<6x8xf32>
    %284 = arith.subf %278, %283 : vector<6x8xf32>
    %285 = arith.mulf %284, %284 : vector<6x8xf32>
    %cst_100 = arith.constant dense<0.000000e+00> : vector<6xf32>
    %286 = vector.multi_reduction <add>, %285, %cst_100 [1] : vector<6x8xf32> to vector<6xf32>
    %287 = vector.shape_cast %286 : vector<6xf32> to vector<6x1xf32>
    %cst_101 = arith.constant 8.000000e+00 : f32
    %288 = vector.broadcast %cst_101 : f32 to vector<6x1xf32>
    %289 = arith.divf %287, %288 : vector<6x1xf32>
    %290 = vector.broadcast %282 : vector<6x1xf32> to vector<6x8xf32>
    %291 = arith.subf %278, %290 : vector<6x8xf32>
    %cst_102 = arith.constant 9.99999997E-7 : f32
    %292 = vector.broadcast %cst_102 : f32 to vector<6x1xf32>
    %293 = arith.addf %289, %292 : vector<6x1xf32>
    %294 = math.rsqrt %293 : vector<6x1xf32>
    %295 = vector.broadcast %294 : vector<6x1xf32> to vector<6x8xf32>
    %296 = arith.mulf %291, %295 : vector<6x8xf32>
    %297 = vector.broadcast %271 : vector<1x8xf32> to vector<6x8xf32>
    %298 = arith.mulf %296, %297 : vector<6x8xf32>
    %299 = vector.broadcast %272 : vector<1x8xf32> to vector<6x8xf32>
    %300 = arith.addf %298, %299 : vector<6x8xf32>
    %cst_103 = arith.constant dense<0.000000e+00> : vector<6x24xf32>
    %301 = tpu.matmul %300, %268, %cst_103 {dimension_numbers = #tpu.dot_dimension_numbers<[1], [0], [0], [1], [0, 0, 1, 1], [], []>} : vector<6x8xf32>, vector<8x24xf32>, vector<6x24xf32> -> vector<6x24xf32>
    %302 = vector.broadcast %273 : vector<1x24xf32> to vector<6x24xf32>
    %303 = arith.addf %301, %302 : vector<6x24xf32>
    %304 = vector.extract_strided_slice %303 {offsets = [0, 0], sizes = [6, 4], strides = [1, 1]} : vector<6x24xf32> to vector<6x4xf32>
    %305 = vector.extract_strided_slice %303 {offsets = [0, 8], sizes = [6, 4], strides = [1, 1]} : vector<6x24xf32> to vector<6x4xf32>
    %306 = vector.extract_strided_slice %303 {offsets = [0, 16], sizes = [6, 4], strides = [1, 1]} : vector<6x24xf32> to vector<6x4xf32>
    %cst_104 = arith.constant dense<0.000000e+00> : vector<6x6xf32>
    %307 = tpu.matmul %304, %305, %cst_104 {dimension_numbers = #tpu.dot_dimension_numbers<[1], [1], [0], [0], [0, 0, 1, 0], [], []>} : vector<6x4xf32>, vector<6x4xf32>, vector<6x6xf32> -> vector<6x6xf32>
    %cst_105 = arith.constant 5.000000e-01 : f32
    %308 = vector.broadcast %cst_105 : f32 to vector<6x6xf32>
    %309 = arith.mulf %307, %308 : vector<6x6xf32>
    %cst_106 = arith.constant dense<0xFF800000> : vector<6xf32>
    %310 = vector.multi_reduction <maximumf>, %309, %cst_106 [1] : vector<6x6xf32> to vector<6xf32>
    %311 = vector.shape_cast %310 : vector<6xf32> to vector<6x1xf32>
    %312 = vector.broadcast %311 : vector<6x1xf32> to vector<6x6xf32>
    %313 = arith.subf %309, %312 : vector<6x6xf32>
    %314 = math.exp %313 : vector<6x6xf32>
    %cst_107 = arith.constant dense<0.000000e+00> : vector<6xf32>
    %315 = vector.multi_reduction <add>, %314, %cst_107 [1] : vector<6x6xf32> to vector<6xf32>
    %316 = vector.shape_cast %315 : vector<6xf32> to vector<6x1xf32>
    %317 = tpu.reciprocal %316 {approx = true} : vector<6x1xf32> -> vector<6x1xf32>
    %318 = vector.broadcast %317 : vector<6x1xf32> to vector<6x6xf32>
    %319 = arith.mulf %314, %318 : vector<6x6xf32>
    %cst_108 = arith.constant dense<0.000000e+00> : vector<6x4xf32>
    %320 = tpu.matmul %319, %306, %cst_108 {dimension_numbers = #tpu.dot_dimension_numbers<[1], [0], [0], [1], [0, 0, 1, 1], [], []>} : vector<6x6xf32>, vector<6x4xf32>, vector<6x4xf32> -> vector<6x4xf32>
    %321 = vector.extract_strided_slice %303 {offsets = [0, 4], sizes = [6, 4], strides = [1, 1]} : vector<6x24xf32> to vector<6x4xf32>
    %322 = vector.extract_strided_slice %303 {offsets = [0, 12], sizes = [6, 4], strides = [1, 1]} : vector<6x24xf32> to vector<6x4xf32>
    %323 = vector.extract_strided_slice %303 {offsets = [0, 20], sizes = [6, 4], strides = [1, 1]} : vector<6x24xf32> to vector<6x4xf32>
    %cst_109 = arith.constant dense<0.000000e+00> : vector<6x6xf32>
    %324 = tpu.matmul %321, %322, %cst_109 {dimension_numbers = #tpu.dot_dimension_numbers<[1], [1], [0], [0], [0, 0, 1, 0], [], []>} : vector<6x4xf32>, vector<6x4xf32>, vector<6x6xf32> -> vector<6x6xf32>
    %cst_110 = arith.constant 5.000000e-01 : f32
    %325 = vector.broadcast %cst_110 : f32 to vector<6x6xf32>
    %326 = arith.mulf %324, %325 : vector<6x6xf32>
    %cst_111 = arith.constant dense<0xFF800000> : vector<6xf32>
    %327 = vector.multi_reduction <maximumf>, %326, %cst_111 [1] : vector<6x6xf32> to vector<6xf32>
    %328 = vector.shape_cast %327 : vector<6xf32> to vector<6x1xf32>
    %329 = vector.broadcast %328 : vector<6x1xf32> to vector<6x6xf32>
    %330 = arith.subf %326, %329 : vector<6x6xf32>
    %331 = math.exp %330 : vector<6x6xf32>
    %cst_112 = arith.constant dense<0.000000e+00> : vector<6xf32>
    %332 = vector.multi_reduction <add>, %331, %cst_112 [1] : vector<6x6xf32> to vector<6xf32>
    %333 = vector.shape_cast %332 : vector<6xf32> to vector<6x1xf32>
    %334 = tpu.reciprocal %333 {approx = true} : vector<6x1xf32> -> vector<6x1xf32>
    %335 = vector.broadcast %334 : vector<6x1xf32> to vector<6x6xf32>
    %336 = arith.mulf %331, %335 : vector<6x6xf32>
    %cst_113 = arith.constant dense<0.000000e+00> : vector<6x4xf32>
    %337 = tpu.matmul %336, %323, %cst_113 {dimension_numbers = #tpu.dot_dimension_numbers<[1], [0], [0], [1], [0, 0, 1, 1], [], []>} : vector<6x6xf32>, vector<6x4xf32>, vector<6x4xf32> -> vector<6x4xf32>
    %338 = tpu.concatenate %320, %337 in 1 : vector<6x4xf32>, vector<6x4xf32> -> vector<6x8xf32>
    %cst_114 = arith.constant dense<0.000000e+00> : vector<6x8xf32>
    %339 = tpu.matmul %338, %269, %cst_114 {dimension_numbers = #tpu.dot_dimension_numbers<[1], [0], [0], [1], [0, 0, 1, 1], [], []>} : vector<6x8xf32>, vector<8x8xf32>, vector<6x8xf32> -> vector<6x8xf32>
    %340 = vector.broadcast %274 : vector<1x8xf32> to vector<6x8xf32>
    %341 = arith.addf %339, %340 : vector<6x8xf32>
    %342 = arith.addf %278, %341 : vector<6x8xf32>
    %cst_115 = arith.constant 0.000000e+00 : f32
    %343 = vector.broadcast %cst_115 : f32 to vector<3x8xf32>
    %344 = tpu.concatenate %343, %342 in 0 : vector<3x8xf32>, vector<6x8xf32> -> vector<9x8xf32>
    %345 = vector.extract_strided_slice %344 {offsets = [0, 0], sizes = [6, 8], strides = [1, 1]} : vector<9x8xf32> to vector<6x8xf32>
    %346 = vector.extract_strided_slice %344 {offsets = [1, 0], sizes = [6, 8], strides = [1, 1]} : vector<9x8xf32> to vector<6x8xf32>
    %347 = vector.extract_strided_slice %344 {offsets = [2, 0], sizes = [6, 8], strides = [1, 1]} : vector<9x8xf32> to vector<6x8xf32>
    %348 = vector.extract_strided_slice %344 {offsets = [3, 0], sizes = [6, 8], strides = [1, 1]} : vector<9x8xf32> to vector<6x8xf32>
    %349 = tpu.concatenate %345, %346, %347, %348 in 1 : vector<6x8xf32>, vector<6x8xf32>, vector<6x8xf32>, vector<6x8xf32> -> vector<6x32xf32>
    %350 = vector.extract_strided_slice %265 {offsets = [0, 0], sizes = [32, 8], strides = [1, 1]} : vector<32x48xf32> to vector<32x8xf32>
    %cst_116 = arith.constant dense<0.000000e+00> : vector<6x8xf32>
    %351 = tpu.matmul %349, %350, %cst_116 {dimension_numbers = #tpu.dot_dimension_numbers<[1], [0], [0], [1], [0, 0, 1, 1], [], []>} : vector<6x32xf32>, vector<32x8xf32>, vector<6x8xf32> -> vector<6x8xf32>
    %352 = vector.extract_strided_slice %276 {offsets = [0, 0], sizes = [1, 8], strides = [1, 1]} : vector<4x8xf32> to vector<1x8xf32>
    %353 = vector.broadcast %352 : vector<1x8xf32> to vector<6x8xf32>
    %354 = arith.mulf %351, %353 : vector<6x8xf32>
    %355 = vector.extract_strided_slice %277 {offsets = [0, 0], sizes = [1, 8], strides = [1, 1]} : vector<4x8xf32> to vector<1x8xf32>
    %356 = vector.broadcast %355 : vector<1x8xf32> to vector<6x8xf32>
    %357 = arith.addf %354, %356 : vector<6x8xf32>
    %cst_117 = arith.constant 0.000000e+00 : f32
    %358 = vector.broadcast %cst_117 : f32 to vector<6x8xf32>
    %359 = arith.cmpf ogt, %357, %358 : vector<6x8xf32>
    %cst_118 = arith.constant 0.000000e+00 : f32
    %360 = vector.broadcast %cst_118 : f32 to vector<6x8xf32>
    %361 = arith.minimumf %357, %360 : vector<6x8xf32>
    %362 = math.exp %361 : vector<6x8xf32>
    %cst_119 = arith.constant 1.000000e+00 : f32
    %363 = vector.broadcast %cst_119 : f32 to vector<6x8xf32>
    %364 = arith.subf %362, %363 : vector<6x8xf32>
    %365 = arith.select %359, %357, %364 : vector<6x8xi1>, vector<6x8xf32>
    %cst_120 = arith.constant 0.000000e+00 : f32
    %366 = vector.broadcast %cst_120 : f32 to vector<3x8xf32>
    %367 = tpu.concatenate %366, %365 in 0 : vector<3x8xf32>, vector<6x8xf32> -> vector<9x8xf32>
    %368 = vector.extract_strided_slice %367 {offsets = [0, 0], sizes = [6, 8], strides = [1, 1]} : vector<9x8xf32> to vector<6x8xf32>
    %369 = vector.extract_strided_slice %367 {offsets = [1, 0], sizes = [6, 8], strides = [1, 1]} : vector<9x8xf32> to vector<6x8xf32>
    %370 = vector.extract_strided_slice %367 {offsets = [2, 0], sizes = [6, 8], strides = [1, 1]} : vector<9x8xf32> to vector<6x8xf32>
    %371 = vector.extract_strided_slice %367 {offsets = [3, 0], sizes = [6, 8], strides = [1, 1]} : vector<9x8xf32> to vector<6x8xf32>
    %372 = tpu.concatenate %368, %369, %370, %371 in 1 : vector<6x8xf32>, vector<6x8xf32>, vector<6x8xf32>, vector<6x8xf32> -> vector<6x32xf32>
    %373 = vector.extract_strided_slice %265 {offsets = [0, 8], sizes = [32, 8], strides = [1, 1]} : vector<32x48xf32> to vector<32x8xf32>
    %cst_121 = arith.constant dense<0.000000e+00> : vector<6x8xf32>
    %374 = tpu.matmul %372, %373, %cst_121 {dimension_numbers = #tpu.dot_dimension_numbers<[1], [0], [0], [1], [0, 0, 1, 1], [], []>} : vector<6x32xf32>, vector<32x8xf32>, vector<6x8xf32> -> vector<6x8xf32>
    %375 = vector.extract_strided_slice %276 {offsets = [1, 0], sizes = [1, 8], strides = [1, 1]} : vector<4x8xf32> to vector<1x8xf32>
    %376 = vector.broadcast %375 : vector<1x8xf32> to vector<6x8xf32>
    %377 = arith.mulf %374, %376 : vector<6x8xf32>
    %378 = vector.extract_strided_slice %277 {offsets = [1, 0], sizes = [1, 8], strides = [1, 1]} : vector<4x8xf32> to vector<1x8xf32>
    %379 = vector.broadcast %378 : vector<1x8xf32> to vector<6x8xf32>
    %380 = arith.addf %377, %379 : vector<6x8xf32>
    %cst_122 = arith.constant 0.000000e+00 : f32
    %381 = vector.broadcast %cst_122 : f32 to vector<6x8xf32>
    %382 = arith.cmpf ogt, %380, %381 : vector<6x8xf32>
    %cst_123 = arith.constant 0.000000e+00 : f32
    %383 = vector.broadcast %cst_123 : f32 to vector<6x8xf32>
    %384 = arith.minimumf %380, %383 : vector<6x8xf32>
    %385 = math.exp %384 : vector<6x8xf32>
    %cst_124 = arith.constant 1.000000e+00 : f32
    %386 = vector.broadcast %cst_124 : f32 to vector<6x8xf32>
    %387 = arith.subf %385, %386 : vector<6x8xf32>
    %388 = arith.select %382, %380, %387 : vector<6x8xi1>, vector<6x8xf32>
    %389 = arith.addf %342, %388 : vector<6x8xf32>
    %cst_125 = arith.constant 0.000000e+00 : f32
    %390 = vector.broadcast %cst_125 : f32 to vector<6x8xf32>
    %391 = arith.cmpf ogt, %389, %390 : vector<6x8xf32>
    %cst_126 = arith.constant 0.000000e+00 : f32
    %392 = vector.broadcast %cst_126 : f32 to vector<6x8xf32>
    %393 = arith.minimumf %389, %392 : vector<6x8xf32>
    %394 = math.exp %393 : vector<6x8xf32>
    %cst_127 = arith.constant 1.000000e+00 : f32
    %395 = vector.broadcast %cst_127 : f32 to vector<6x8xf32>
    %396 = arith.subf %394, %395 : vector<6x8xf32>
    %397 = arith.select %391, %389, %396 : vector<6x8xi1>, vector<6x8xf32>
    %cst_128 = arith.constant 0.000000e+00 : f32
    %398 = vector.broadcast %cst_128 : f32 to vector<6x8xf32>
    %399 = tpu.concatenate %398, %397 in 0 : vector<6x8xf32>, vector<6x8xf32> -> vector<12x8xf32>
    %400 = vector.extract_strided_slice %399 {offsets = [0, 0], sizes = [6, 8], strides = [1, 1]} : vector<12x8xf32> to vector<6x8xf32>
    %401 = vector.extract_strided_slice %399 {offsets = [2, 0], sizes = [6, 8], strides = [1, 1]} : vector<12x8xf32> to vector<6x8xf32>
    %402 = vector.extract_strided_slice %399 {offsets = [4, 0], sizes = [6, 8], strides = [1, 1]} : vector<12x8xf32> to vector<6x8xf32>
    %403 = vector.extract_strided_slice %399 {offsets = [6, 0], sizes = [6, 8], strides = [1, 1]} : vector<12x8xf32> to vector<6x8xf32>
    %404 = tpu.concatenate %400, %401, %402, %403 in 1 : vector<6x8xf32>, vector<6x8xf32>, vector<6x8xf32>, vector<6x8xf32> -> vector<6x32xf32>
    %405 = vector.extract_strided_slice %265 {offsets = [0, 16], sizes = [32, 8], strides = [1, 1]} : vector<32x48xf32> to vector<32x8xf32>
    %cst_129 = arith.constant dense<0.000000e+00> : vector<6x8xf32>
    %406 = tpu.matmul %404, %405, %cst_129 {dimension_numbers = #tpu.dot_dimension_numbers<[1], [0], [0], [1], [0, 0, 1, 1], [], []>} : vector<6x32xf32>, vector<32x8xf32>, vector<6x8xf32> -> vector<6x8xf32>
    %407 = vector.extract_strided_slice %276 {offsets = [2, 0], sizes = [1, 8], strides = [1, 1]} : vector<4x8xf32> to vector<1x8xf32>
    %408 = vector.broadcast %407 : vector<1x8xf32> to vector<6x8xf32>
    %409 = arith.mulf %406, %408 : vector<6x8xf32>
    %410 = vector.extract_strided_slice %277 {offsets = [2, 0], sizes = [1, 8], strides = [1, 1]} : vector<4x8xf32> to vector<1x8xf32>
    %411 = vector.broadcast %410 : vector<1x8xf32> to vector<6x8xf32>
    %412 = arith.addf %409, %411 : vector<6x8xf32>
    %cst_130 = arith.constant 0.000000e+00 : f32
    %413 = vector.broadcast %cst_130 : f32 to vector<6x8xf32>
    %414 = arith.cmpf ogt, %412, %413 : vector<6x8xf32>
    %cst_131 = arith.constant 0.000000e+00 : f32
    %415 = vector.broadcast %cst_131 : f32 to vector<6x8xf32>
    %416 = arith.minimumf %412, %415 : vector<6x8xf32>
    %417 = math.exp %416 : vector<6x8xf32>
    %cst_132 = arith.constant 1.000000e+00 : f32
    %418 = vector.broadcast %cst_132 : f32 to vector<6x8xf32>
    %419 = arith.subf %417, %418 : vector<6x8xf32>
    %420 = arith.select %414, %412, %419 : vector<6x8xi1>, vector<6x8xf32>
    %cst_133 = arith.constant 0.000000e+00 : f32
    %421 = vector.broadcast %cst_133 : f32 to vector<6x8xf32>
    %422 = tpu.concatenate %421, %420 in 0 : vector<6x8xf32>, vector<6x8xf32> -> vector<12x8xf32>
    %423 = vector.extract_strided_slice %422 {offsets = [0, 0], sizes = [6, 8], strides = [1, 1]} : vector<12x8xf32> to vector<6x8xf32>
    %424 = vector.extract_strided_slice %422 {offsets = [2, 0], sizes = [6, 8], strides = [1, 1]} : vector<12x8xf32> to vector<6x8xf32>
    %425 = vector.extract_strided_slice %422 {offsets = [4, 0], sizes = [6, 8], strides = [1, 1]} : vector<12x8xf32> to vector<6x8xf32>
    %426 = vector.extract_strided_slice %422 {offsets = [6, 0], sizes = [6, 8], strides = [1, 1]} : vector<12x8xf32> to vector<6x8xf32>
    %427 = tpu.concatenate %423, %424, %425, %426 in 1 : vector<6x8xf32>, vector<6x8xf32>, vector<6x8xf32>, vector<6x8xf32> -> vector<6x32xf32>
    %428 = vector.extract_strided_slice %265 {offsets = [0, 24], sizes = [32, 8], strides = [1, 1]} : vector<32x48xf32> to vector<32x8xf32>
    %cst_134 = arith.constant dense<0.000000e+00> : vector<6x8xf32>
    %429 = tpu.matmul %427, %428, %cst_134 {dimension_numbers = #tpu.dot_dimension_numbers<[1], [0], [0], [1], [0, 0, 1, 1], [], []>} : vector<6x32xf32>, vector<32x8xf32>, vector<6x8xf32> -> vector<6x8xf32>
    %430 = vector.extract_strided_slice %276 {offsets = [3, 0], sizes = [1, 8], strides = [1, 1]} : vector<4x8xf32> to vector<1x8xf32>
    %431 = vector.broadcast %430 : vector<1x8xf32> to vector<6x8xf32>
    %432 = arith.mulf %429, %431 : vector<6x8xf32>
    %433 = vector.extract_strided_slice %277 {offsets = [3, 0], sizes = [1, 8], strides = [1, 1]} : vector<4x8xf32> to vector<1x8xf32>
    %434 = vector.broadcast %433 : vector<1x8xf32> to vector<6x8xf32>
    %435 = arith.addf %432, %434 : vector<6x8xf32>
    %cst_135 = arith.constant 0.000000e+00 : f32
    %436 = vector.broadcast %cst_135 : f32 to vector<6x8xf32>
    %437 = arith.cmpf ogt, %435, %436 : vector<6x8xf32>
    %cst_136 = arith.constant 0.000000e+00 : f32
    %438 = vector.broadcast %cst_136 : f32 to vector<6x8xf32>
    %439 = arith.minimumf %435, %438 : vector<6x8xf32>
    %440 = math.exp %439 : vector<6x8xf32>
    %cst_137 = arith.constant 1.000000e+00 : f32
    %441 = vector.broadcast %cst_137 : f32 to vector<6x8xf32>
    %442 = arith.subf %440, %441 : vector<6x8xf32>
    %443 = arith.select %437, %435, %442 : vector<6x8xi1>, vector<6x8xf32>
    %444 = arith.addf %397, %443 : vector<6x8xf32>
    %cst_138 = arith.constant 0.000000e+00 : f32
    %445 = vector.broadcast %cst_138 : f32 to vector<6x8xf32>
    %446 = arith.cmpf ogt, %444, %445 : vector<6x8xf32>
    %cst_139 = arith.constant 0.000000e+00 : f32
    %447 = vector.broadcast %cst_139 : f32 to vector<6x8xf32>
    %448 = arith.minimumf %444, %447 : vector<6x8xf32>
    %449 = math.exp %448 : vector<6x8xf32>
    %cst_140 = arith.constant 1.000000e+00 : f32
    %450 = vector.broadcast %cst_140 : f32 to vector<6x8xf32>
    %451 = arith.subf %449, %450 : vector<6x8xf32>
    %452 = arith.select %446, %444, %451 : vector<6x8xi1>, vector<6x8xf32>
    %453 = vector.extract_strided_slice %452 {offsets = [5, 0], sizes = [1, 8], strides = [1, 1]} : vector<6x8xf32> to vector<1x8xf32>
    %cst_141 = arith.constant dense<0.000000e+00> : vector<1x3xf32>
    %454 = tpu.matmul %453, %270, %cst_141 {dimension_numbers = #tpu.dot_dimension_numbers<[1], [0], [0], [1], [0, 0, 1, 1], [], []>} : vector<1x8xf32>, vector<8x3xf32>, vector<1x3xf32> -> vector<1x3xf32>
    %455 = arith.addf %261, %454 : vector<1x3xf32>
    %456 = arith.addf %455, %275 : vector<1x3xf32>
    %c2 = arith.constant 2 : index
    %c0_142 = arith.constant 0 : index
    %c0_143 = arith.constant 0 : index
    %457 = vector.load %arg3[%c2, %c0_142, %c0_143] : memref<3x8x35xf32, #tpu.memory_space<vmem>>, vector<1x8x35xf32>
    %458 = vector.shape_cast %457 : vector<1x8x35xf32> to vector<8x35xf32>
    %c2_144 = arith.constant 2 : index
    %c0_145 = arith.constant 0 : index
    %c0_146 = arith.constant 0 : index
    %459 = vector.load %arg4[%c2_144, %c0_145, %c0_146] : memref<3x32x48xf32, #tpu.memory_space<vmem>>, vector<1x32x48xf32>
    %460 = vector.shape_cast %459 : vector<1x32x48xf32> to vector<32x48xf32>
    %c2_147 = arith.constant 2 : index
    %c0_148 = arith.constant 0 : index
    %c0_149 = arith.constant 0 : index
    %461 = vector.load %arg5[%c2_147, %c0_148, %c0_149] : memref<3x1x51xf32, #tpu.memory_space<vmem>>, vector<1x1x51xf32>
    %462 = vector.shape_cast %461 : vector<1x1x51xf32> to vector<1x51xf32>
    %463 = vector.extract_strided_slice %458 {offsets = [0, 0], sizes = [8, 24], strides = [1, 1]} : vector<8x35xf32> to vector<8x24xf32>
    %464 = vector.extract_strided_slice %458 {offsets = [0, 24], sizes = [8, 8], strides = [1, 1]} : vector<8x35xf32> to vector<8x8xf32>
    %465 = vector.extract_strided_slice %458 {offsets = [0, 32], sizes = [8, 3], strides = [1, 1]} : vector<8x35xf32> to vector<8x3xf32>
    %466 = vector.extract_strided_slice %462 {offsets = [0, 0], sizes = [1, 8], strides = [1, 1]} : vector<1x51xf32> to vector<1x8xf32>
    %467 = vector.extract_strided_slice %462 {offsets = [0, 8], sizes = [1, 8], strides = [1, 1]} : vector<1x51xf32> to vector<1x8xf32>
    %468 = vector.extract_strided_slice %462 {offsets = [0, 16], sizes = [1, 24], strides = [1, 1]} : vector<1x51xf32> to vector<1x24xf32>
    %469 = vector.extract_strided_slice %462 {offsets = [0, 40], sizes = [1, 8], strides = [1, 1]} : vector<1x51xf32> to vector<1x8xf32>
    %470 = vector.extract_strided_slice %462 {offsets = [0, 48], sizes = [1, 3], strides = [1, 1]} : vector<1x51xf32> to vector<1x3xf32>
    %471 = vector.extract_strided_slice %460 {offsets = [0, 32], sizes = [4, 8], strides = [1, 1]} : vector<32x48xf32> to vector<4x8xf32>
    %472 = vector.extract_strided_slice %460 {offsets = [0, 40], sizes = [4, 8], strides = [1, 1]} : vector<32x48xf32> to vector<4x8xf32>
    %473 = vector.extract_strided_slice %65 {offsets = [2, 0], sizes = [6, 8], strides = [1, 1]} : vector<8x8xf32> to vector<6x8xf32>
    %cst_150 = arith.constant dense<0.000000e+00> : vector<6xf32>
    %474 = vector.multi_reduction <add>, %473, %cst_150 [1] : vector<6x8xf32> to vector<6xf32>
    %475 = vector.shape_cast %474 : vector<6xf32> to vector<6x1xf32>
    %cst_151 = arith.constant 8.000000e+00 : f32
    %476 = vector.broadcast %cst_151 : f32 to vector<6x1xf32>
    %477 = arith.divf %475, %476 : vector<6x1xf32>
    %478 = vector.broadcast %477 : vector<6x1xf32> to vector<6x8xf32>
    %479 = arith.subf %473, %478 : vector<6x8xf32>
    %480 = arith.mulf %479, %479 : vector<6x8xf32>
    %cst_152 = arith.constant dense<0.000000e+00> : vector<6xf32>
    %481 = vector.multi_reduction <add>, %480, %cst_152 [1] : vector<6x8xf32> to vector<6xf32>
    %482 = vector.shape_cast %481 : vector<6xf32> to vector<6x1xf32>
    %cst_153 = arith.constant 8.000000e+00 : f32
    %483 = vector.broadcast %cst_153 : f32 to vector<6x1xf32>
    %484 = arith.divf %482, %483 : vector<6x1xf32>
    %485 = vector.broadcast %477 : vector<6x1xf32> to vector<6x8xf32>
    %486 = arith.subf %473, %485 : vector<6x8xf32>
    %cst_154 = arith.constant 9.99999997E-7 : f32
    %487 = vector.broadcast %cst_154 : f32 to vector<6x1xf32>
    %488 = arith.addf %484, %487 : vector<6x1xf32>
    %489 = math.rsqrt %488 : vector<6x1xf32>
    %490 = vector.broadcast %489 : vector<6x1xf32> to vector<6x8xf32>
    %491 = arith.mulf %486, %490 : vector<6x8xf32>
    %492 = vector.broadcast %466 : vector<1x8xf32> to vector<6x8xf32>
    %493 = arith.mulf %491, %492 : vector<6x8xf32>
    %494 = vector.broadcast %467 : vector<1x8xf32> to vector<6x8xf32>
    %495 = arith.addf %493, %494 : vector<6x8xf32>
    %cst_155 = arith.constant dense<0.000000e+00> : vector<6x24xf32>
    %496 = tpu.matmul %495, %463, %cst_155 {dimension_numbers = #tpu.dot_dimension_numbers<[1], [0], [0], [1], [0, 0, 1, 1], [], []>} : vector<6x8xf32>, vector<8x24xf32>, vector<6x24xf32> -> vector<6x24xf32>
    %497 = vector.broadcast %468 : vector<1x24xf32> to vector<6x24xf32>
    %498 = arith.addf %496, %497 : vector<6x24xf32>
    %499 = vector.extract_strided_slice %498 {offsets = [0, 0], sizes = [6, 4], strides = [1, 1]} : vector<6x24xf32> to vector<6x4xf32>
    %500 = vector.extract_strided_slice %498 {offsets = [0, 8], sizes = [6, 4], strides = [1, 1]} : vector<6x24xf32> to vector<6x4xf32>
    %501 = vector.extract_strided_slice %498 {offsets = [0, 16], sizes = [6, 4], strides = [1, 1]} : vector<6x24xf32> to vector<6x4xf32>
    %cst_156 = arith.constant dense<0.000000e+00> : vector<6x6xf32>
    %502 = tpu.matmul %499, %500, %cst_156 {dimension_numbers = #tpu.dot_dimension_numbers<[1], [1], [0], [0], [0, 0, 1, 0], [], []>} : vector<6x4xf32>, vector<6x4xf32>, vector<6x6xf32> -> vector<6x6xf32>
    %cst_157 = arith.constant 5.000000e-01 : f32
    %503 = vector.broadcast %cst_157 : f32 to vector<6x6xf32>
    %504 = arith.mulf %502, %503 : vector<6x6xf32>
    %cst_158 = arith.constant dense<0xFF800000> : vector<6xf32>
    %505 = vector.multi_reduction <maximumf>, %504, %cst_158 [1] : vector<6x6xf32> to vector<6xf32>
    %506 = vector.shape_cast %505 : vector<6xf32> to vector<6x1xf32>
    %507 = vector.broadcast %506 : vector<6x1xf32> to vector<6x6xf32>
    %508 = arith.subf %504, %507 : vector<6x6xf32>
    %509 = math.exp %508 : vector<6x6xf32>
    %cst_159 = arith.constant dense<0.000000e+00> : vector<6xf32>
    %510 = vector.multi_reduction <add>, %509, %cst_159 [1] : vector<6x6xf32> to vector<6xf32>
    %511 = vector.shape_cast %510 : vector<6xf32> to vector<6x1xf32>
    %512 = tpu.reciprocal %511 {approx = true} : vector<6x1xf32> -> vector<6x1xf32>
    %513 = vector.broadcast %512 : vector<6x1xf32> to vector<6x6xf32>
    %514 = arith.mulf %509, %513 : vector<6x6xf32>
    %cst_160 = arith.constant dense<0.000000e+00> : vector<6x4xf32>
    %515 = tpu.matmul %514, %501, %cst_160 {dimension_numbers = #tpu.dot_dimension_numbers<[1], [0], [0], [1], [0, 0, 1, 1], [], []>} : vector<6x6xf32>, vector<6x4xf32>, vector<6x4xf32> -> vector<6x4xf32>
    %516 = vector.extract_strided_slice %498 {offsets = [0, 4], sizes = [6, 4], strides = [1, 1]} : vector<6x24xf32> to vector<6x4xf32>
    %517 = vector.extract_strided_slice %498 {offsets = [0, 12], sizes = [6, 4], strides = [1, 1]} : vector<6x24xf32> to vector<6x4xf32>
    %518 = vector.extract_strided_slice %498 {offsets = [0, 20], sizes = [6, 4], strides = [1, 1]} : vector<6x24xf32> to vector<6x4xf32>
    %cst_161 = arith.constant dense<0.000000e+00> : vector<6x6xf32>
    %519 = tpu.matmul %516, %517, %cst_161 {dimension_numbers = #tpu.dot_dimension_numbers<[1], [1], [0], [0], [0, 0, 1, 0], [], []>} : vector<6x4xf32>, vector<6x4xf32>, vector<6x6xf32> -> vector<6x6xf32>
    %cst_162 = arith.constant 5.000000e-01 : f32
    %520 = vector.broadcast %cst_162 : f32 to vector<6x6xf32>
    %521 = arith.mulf %519, %520 : vector<6x6xf32>
    %cst_163 = arith.constant dense<0xFF800000> : vector<6xf32>
    %522 = vector.multi_reduction <maximumf>, %521, %cst_163 [1] : vector<6x6xf32> to vector<6xf32>
    %523 = vector.shape_cast %522 : vector<6xf32> to vector<6x1xf32>
    %524 = vector.broadcast %523 : vector<6x1xf32> to vector<6x6xf32>
    %525 = arith.subf %521, %524 : vector<6x6xf32>
    %526 = math.exp %525 : vector<6x6xf32>
    %cst_164 = arith.constant dense<0.000000e+00> : vector<6xf32>
    %527 = vector.multi_reduction <add>, %526, %cst_164 [1] : vector<6x6xf32> to vector<6xf32>
    %528 = vector.shape_cast %527 : vector<6xf32> to vector<6x1xf32>
    %529 = tpu.reciprocal %528 {approx = true} : vector<6x1xf32> -> vector<6x1xf32>
    %530 = vector.broadcast %529 : vector<6x1xf32> to vector<6x6xf32>
    %531 = arith.mulf %526, %530 : vector<6x6xf32>
    %cst_165 = arith.constant dense<0.000000e+00> : vector<6x4xf32>
    %532 = tpu.matmul %531, %518, %cst_165 {dimension_numbers = #tpu.dot_dimension_numbers<[1], [0], [0], [1], [0, 0, 1, 1], [], []>} : vector<6x6xf32>, vector<6x4xf32>, vector<6x4xf32> -> vector<6x4xf32>
    %533 = tpu.concatenate %515, %532 in 1 : vector<6x4xf32>, vector<6x4xf32> -> vector<6x8xf32>
    %cst_166 = arith.constant dense<0.000000e+00> : vector<6x8xf32>
    %534 = tpu.matmul %533, %464, %cst_166 {dimension_numbers = #tpu.dot_dimension_numbers<[1], [0], [0], [1], [0, 0, 1, 1], [], []>} : vector<6x8xf32>, vector<8x8xf32>, vector<6x8xf32> -> vector<6x8xf32>
    %535 = vector.broadcast %469 : vector<1x8xf32> to vector<6x8xf32>
    %536 = arith.addf %534, %535 : vector<6x8xf32>
    %537 = arith.addf %473, %536 : vector<6x8xf32>
    %cst_167 = arith.constant 0.000000e+00 : f32
    %538 = vector.broadcast %cst_167 : f32 to vector<3x8xf32>
    %539 = tpu.concatenate %538, %537 in 0 : vector<3x8xf32>, vector<6x8xf32> -> vector<9x8xf32>
    %540 = vector.extract_strided_slice %539 {offsets = [0, 0], sizes = [6, 8], strides = [1, 1]} : vector<9x8xf32> to vector<6x8xf32>
    %541 = vector.extract_strided_slice %539 {offsets = [1, 0], sizes = [6, 8], strides = [1, 1]} : vector<9x8xf32> to vector<6x8xf32>
    %542 = vector.extract_strided_slice %539 {offsets = [2, 0], sizes = [6, 8], strides = [1, 1]} : vector<9x8xf32> to vector<6x8xf32>
    %543 = vector.extract_strided_slice %539 {offsets = [3, 0], sizes = [6, 8], strides = [1, 1]} : vector<9x8xf32> to vector<6x8xf32>
    %544 = tpu.concatenate %540, %541, %542, %543 in 1 : vector<6x8xf32>, vector<6x8xf32>, vector<6x8xf32>, vector<6x8xf32> -> vector<6x32xf32>
    %545 = vector.extract_strided_slice %460 {offsets = [0, 0], sizes = [32, 8], strides = [1, 1]} : vector<32x48xf32> to vector<32x8xf32>
    %cst_168 = arith.constant dense<0.000000e+00> : vector<6x8xf32>
    %546 = tpu.matmul %544, %545, %cst_168 {dimension_numbers = #tpu.dot_dimension_numbers<[1], [0], [0], [1], [0, 0, 1, 1], [], []>} : vector<6x32xf32>, vector<32x8xf32>, vector<6x8xf32> -> vector<6x8xf32>
    %547 = vector.extract_strided_slice %471 {offsets = [0, 0], sizes = [1, 8], strides = [1, 1]} : vector<4x8xf32> to vector<1x8xf32>
    %548 = vector.broadcast %547 : vector<1x8xf32> to vector<6x8xf32>
    %549 = arith.mulf %546, %548 : vector<6x8xf32>
    %550 = vector.extract_strided_slice %472 {offsets = [0, 0], sizes = [1, 8], strides = [1, 1]} : vector<4x8xf32> to vector<1x8xf32>
    %551 = vector.broadcast %550 : vector<1x8xf32> to vector<6x8xf32>
    %552 = arith.addf %549, %551 : vector<6x8xf32>
    %cst_169 = arith.constant 0.000000e+00 : f32
    %553 = vector.broadcast %cst_169 : f32 to vector<6x8xf32>
    %554 = arith.cmpf ogt, %552, %553 : vector<6x8xf32>
    %cst_170 = arith.constant 0.000000e+00 : f32
    %555 = vector.broadcast %cst_170 : f32 to vector<6x8xf32>
    %556 = arith.minimumf %552, %555 : vector<6x8xf32>
    %557 = math.exp %556 : vector<6x8xf32>
    %cst_171 = arith.constant 1.000000e+00 : f32
    %558 = vector.broadcast %cst_171 : f32 to vector<6x8xf32>
    %559 = arith.subf %557, %558 : vector<6x8xf32>
    %560 = arith.select %554, %552, %559 : vector<6x8xi1>, vector<6x8xf32>
    %cst_172 = arith.constant 0.000000e+00 : f32
    %561 = vector.broadcast %cst_172 : f32 to vector<3x8xf32>
    %562 = tpu.concatenate %561, %560 in 0 : vector<3x8xf32>, vector<6x8xf32> -> vector<9x8xf32>
    %563 = vector.extract_strided_slice %562 {offsets = [0, 0], sizes = [6, 8], strides = [1, 1]} : vector<9x8xf32> to vector<6x8xf32>
    %564 = vector.extract_strided_slice %562 {offsets = [1, 0], sizes = [6, 8], strides = [1, 1]} : vector<9x8xf32> to vector<6x8xf32>
    %565 = vector.extract_strided_slice %562 {offsets = [2, 0], sizes = [6, 8], strides = [1, 1]} : vector<9x8xf32> to vector<6x8xf32>
    %566 = vector.extract_strided_slice %562 {offsets = [3, 0], sizes = [6, 8], strides = [1, 1]} : vector<9x8xf32> to vector<6x8xf32>
    %567 = tpu.concatenate %563, %564, %565, %566 in 1 : vector<6x8xf32>, vector<6x8xf32>, vector<6x8xf32>, vector<6x8xf32> -> vector<6x32xf32>
    %568 = vector.extract_strided_slice %460 {offsets = [0, 8], sizes = [32, 8], strides = [1, 1]} : vector<32x48xf32> to vector<32x8xf32>
    %cst_173 = arith.constant dense<0.000000e+00> : vector<6x8xf32>
    %569 = tpu.matmul %567, %568, %cst_173 {dimension_numbers = #tpu.dot_dimension_numbers<[1], [0], [0], [1], [0, 0, 1, 1], [], []>} : vector<6x32xf32>, vector<32x8xf32>, vector<6x8xf32> -> vector<6x8xf32>
    %570 = vector.extract_strided_slice %471 {offsets = [1, 0], sizes = [1, 8], strides = [1, 1]} : vector<4x8xf32> to vector<1x8xf32>
    %571 = vector.broadcast %570 : vector<1x8xf32> to vector<6x8xf32>
    %572 = arith.mulf %569, %571 : vector<6x8xf32>
    %573 = vector.extract_strided_slice %472 {offsets = [1, 0], sizes = [1, 8], strides = [1, 1]} : vector<4x8xf32> to vector<1x8xf32>
    %574 = vector.broadcast %573 : vector<1x8xf32> to vector<6x8xf32>
    %575 = arith.addf %572, %574 : vector<6x8xf32>
    %cst_174 = arith.constant 0.000000e+00 : f32
    %576 = vector.broadcast %cst_174 : f32 to vector<6x8xf32>
    %577 = arith.cmpf ogt, %575, %576 : vector<6x8xf32>
    %cst_175 = arith.constant 0.000000e+00 : f32
    %578 = vector.broadcast %cst_175 : f32 to vector<6x8xf32>
    %579 = arith.minimumf %575, %578 : vector<6x8xf32>
    %580 = math.exp %579 : vector<6x8xf32>
    %cst_176 = arith.constant 1.000000e+00 : f32
    %581 = vector.broadcast %cst_176 : f32 to vector<6x8xf32>
    %582 = arith.subf %580, %581 : vector<6x8xf32>
    %583 = arith.select %577, %575, %582 : vector<6x8xi1>, vector<6x8xf32>
    %584 = arith.addf %537, %583 : vector<6x8xf32>
    %cst_177 = arith.constant 0.000000e+00 : f32
    %585 = vector.broadcast %cst_177 : f32 to vector<6x8xf32>
    %586 = arith.cmpf ogt, %584, %585 : vector<6x8xf32>
    %cst_178 = arith.constant 0.000000e+00 : f32
    %587 = vector.broadcast %cst_178 : f32 to vector<6x8xf32>
    %588 = arith.minimumf %584, %587 : vector<6x8xf32>
    %589 = math.exp %588 : vector<6x8xf32>
    %cst_179 = arith.constant 1.000000e+00 : f32
    %590 = vector.broadcast %cst_179 : f32 to vector<6x8xf32>
    %591 = arith.subf %589, %590 : vector<6x8xf32>
    %592 = arith.select %586, %584, %591 : vector<6x8xi1>, vector<6x8xf32>
    %cst_180 = arith.constant 0.000000e+00 : f32
    %593 = vector.broadcast %cst_180 : f32 to vector<6x8xf32>
    %594 = tpu.concatenate %593, %592 in 0 : vector<6x8xf32>, vector<6x8xf32> -> vector<12x8xf32>
    %595 = vector.extract_strided_slice %594 {offsets = [0, 0], sizes = [6, 8], strides = [1, 1]} : vector<12x8xf32> to vector<6x8xf32>
    %596 = vector.extract_strided_slice %594 {offsets = [2, 0], sizes = [6, 8], strides = [1, 1]} : vector<12x8xf32> to vector<6x8xf32>
    %597 = vector.extract_strided_slice %594 {offsets = [4, 0], sizes = [6, 8], strides = [1, 1]} : vector<12x8xf32> to vector<6x8xf32>
    %598 = vector.extract_strided_slice %594 {offsets = [6, 0], sizes = [6, 8], strides = [1, 1]} : vector<12x8xf32> to vector<6x8xf32>
    %599 = tpu.concatenate %595, %596, %597, %598 in 1 : vector<6x8xf32>, vector<6x8xf32>, vector<6x8xf32>, vector<6x8xf32> -> vector<6x32xf32>
    %600 = vector.extract_strided_slice %460 {offsets = [0, 16], sizes = [32, 8], strides = [1, 1]} : vector<32x48xf32> to vector<32x8xf32>
    %cst_181 = arith.constant dense<0.000000e+00> : vector<6x8xf32>
    %601 = tpu.matmul %599, %600, %cst_181 {dimension_numbers = #tpu.dot_dimension_numbers<[1], [0], [0], [1], [0, 0, 1, 1], [], []>} : vector<6x32xf32>, vector<32x8xf32>, vector<6x8xf32> -> vector<6x8xf32>
    %602 = vector.extract_strided_slice %471 {offsets = [2, 0], sizes = [1, 8], strides = [1, 1]} : vector<4x8xf32> to vector<1x8xf32>
    %603 = vector.broadcast %602 : vector<1x8xf32> to vector<6x8xf32>
    %604 = arith.mulf %601, %603 : vector<6x8xf32>
    %605 = vector.extract_strided_slice %472 {offsets = [2, 0], sizes = [1, 8], strides = [1, 1]} : vector<4x8xf32> to vector<1x8xf32>
    %606 = vector.broadcast %605 : vector<1x8xf32> to vector<6x8xf32>
    %607 = arith.addf %604, %606 : vector<6x8xf32>
    %cst_182 = arith.constant 0.000000e+00 : f32
    %608 = vector.broadcast %cst_182 : f32 to vector<6x8xf32>
    %609 = arith.cmpf ogt, %607, %608 : vector<6x8xf32>
    %cst_183 = arith.constant 0.000000e+00 : f32
    %610 = vector.broadcast %cst_183 : f32 to vector<6x8xf32>
    %611 = arith.minimumf %607, %610 : vector<6x8xf32>
    %612 = math.exp %611 : vector<6x8xf32>
    %cst_184 = arith.constant 1.000000e+00 : f32
    %613 = vector.broadcast %cst_184 : f32 to vector<6x8xf32>
    %614 = arith.subf %612, %613 : vector<6x8xf32>
    %615 = arith.select %609, %607, %614 : vector<6x8xi1>, vector<6x8xf32>
    %cst_185 = arith.constant 0.000000e+00 : f32
    %616 = vector.broadcast %cst_185 : f32 to vector<6x8xf32>
    %617 = tpu.concatenate %616, %615 in 0 : vector<6x8xf32>, vector<6x8xf32> -> vector<12x8xf32>
    %618 = vector.extract_strided_slice %617 {offsets = [0, 0], sizes = [6, 8], strides = [1, 1]} : vector<12x8xf32> to vector<6x8xf32>
    %619 = vector.extract_strided_slice %617 {offsets = [2, 0], sizes = [6, 8], strides = [1, 1]} : vector<12x8xf32> to vector<6x8xf32>
    %620 = vector.extract_strided_slice %617 {offsets = [4, 0], sizes = [6, 8], strides = [1, 1]} : vector<12x8xf32> to vector<6x8xf32>
    %621 = vector.extract_strided_slice %617 {offsets = [6, 0], sizes = [6, 8], strides = [1, 1]} : vector<12x8xf32> to vector<6x8xf32>
    %622 = tpu.concatenate %618, %619, %620, %621 in 1 : vector<6x8xf32>, vector<6x8xf32>, vector<6x8xf32>, vector<6x8xf32> -> vector<6x32xf32>
    %623 = vector.extract_strided_slice %460 {offsets = [0, 24], sizes = [32, 8], strides = [1, 1]} : vector<32x48xf32> to vector<32x8xf32>
    %cst_186 = arith.constant dense<0.000000e+00> : vector<6x8xf32>
    %624 = tpu.matmul %622, %623, %cst_186 {dimension_numbers = #tpu.dot_dimension_numbers<[1], [0], [0], [1], [0, 0, 1, 1], [], []>} : vector<6x32xf32>, vector<32x8xf32>, vector<6x8xf32> -> vector<6x8xf32>
    %625 = vector.extract_strided_slice %471 {offsets = [3, 0], sizes = [1, 8], strides = [1, 1]} : vector<4x8xf32> to vector<1x8xf32>
    %626 = vector.broadcast %625 : vector<1x8xf32> to vector<6x8xf32>
    %627 = arith.mulf %624, %626 : vector<6x8xf32>
    %628 = vector.extract_strided_slice %472 {offsets = [3, 0], sizes = [1, 8], strides = [1, 1]} : vector<4x8xf32> to vector<1x8xf32>
    %629 = vector.broadcast %628 : vector<1x8xf32> to vector<6x8xf32>
    %630 = arith.addf %627, %629 : vector<6x8xf32>
    %cst_187 = arith.constant 0.000000e+00 : f32
    %631 = vector.broadcast %cst_187 : f32 to vector<6x8xf32>
    %632 = arith.cmpf ogt, %630, %631 : vector<6x8xf32>
    %cst_188 = arith.constant 0.000000e+00 : f32
    %633 = vector.broadcast %cst_188 : f32 to vector<6x8xf32>
    %634 = arith.minimumf %630, %633 : vector<6x8xf32>
    %635 = math.exp %634 : vector<6x8xf32>
    %cst_189 = arith.constant 1.000000e+00 : f32
    %636 = vector.broadcast %cst_189 : f32 to vector<6x8xf32>
    %637 = arith.subf %635, %636 : vector<6x8xf32>
    %638 = arith.select %632, %630, %637 : vector<6x8xi1>, vector<6x8xf32>
    %639 = arith.addf %592, %638 : vector<6x8xf32>
    %cst_190 = arith.constant 0.000000e+00 : f32
    %640 = vector.broadcast %cst_190 : f32 to vector<6x8xf32>
    %641 = arith.cmpf ogt, %639, %640 : vector<6x8xf32>
    %cst_191 = arith.constant 0.000000e+00 : f32
    %642 = vector.broadcast %cst_191 : f32 to vector<6x8xf32>
    %643 = arith.minimumf %639, %642 : vector<6x8xf32>
    %644 = math.exp %643 : vector<6x8xf32>
    %cst_192 = arith.constant 1.000000e+00 : f32
    %645 = vector.broadcast %cst_192 : f32 to vector<6x8xf32>
    %646 = arith.subf %644, %645 : vector<6x8xf32>
    %647 = arith.select %641, %639, %646 : vector<6x8xi1>, vector<6x8xf32>
    %648 = vector.extract_strided_slice %647 {offsets = [5, 0], sizes = [1, 8], strides = [1, 1]} : vector<6x8xf32> to vector<1x8xf32>
    %cst_193 = arith.constant dense<0.000000e+00> : vector<1x3xf32>
    %649 = tpu.matmul %648, %465, %cst_193 {dimension_numbers = #tpu.dot_dimension_numbers<[1], [0], [0], [1], [0, 0, 1, 1], [], []>} : vector<1x8xf32>, vector<8x3xf32>, vector<1x3xf32> -> vector<1x3xf32>
    %650 = arith.addf %456, %649 : vector<1x3xf32>
    %651 = arith.addf %650, %470 : vector<1x3xf32>
    %cst_194 = arith.constant 0.333333343 : f32
    %652 = vector.broadcast %cst_194 : f32 to vector<1x3xf32>
    %653 = arith.mulf %651, %652 : vector<1x3xf32>
    %cst_195 = arith.constant dense<0xFF800000> : vector<1xf32>
    %654 = vector.multi_reduction <maximumf>, %653, %cst_195 [1] : vector<1x3xf32> to vector<1xf32>
    %655 = vector.shape_cast %654 : vector<1xf32> to vector<1x1xf32>
    %656 = vector.broadcast %655 : vector<1x1xf32> to vector<1x3xf32>
    %657 = arith.subf %653, %656 : vector<1x3xf32>
    %658 = math.exp %657 : vector<1x3xf32>
    %cst_196 = arith.constant dense<0.000000e+00> : vector<1xf32>
    %659 = vector.multi_reduction <add>, %658, %cst_196 [1] : vector<1x3xf32> to vector<1xf32>
    %660 = vector.shape_cast %659 : vector<1xf32> to vector<1x1xf32>
    %661 = tpu.reciprocal %660 {approx = true} : vector<1x1xf32> -> vector<1x1xf32>
    %662 = vector.broadcast %661 : vector<1x1xf32> to vector<1x3xf32>
    %663 = arith.mulf %658, %662 : vector<1x3xf32>
    %c0_197 = arith.constant 0 : index
    %c0_198 = arith.constant 0 : index
    %c0_199 = arith.constant 0 : index
    %664 = vector.load %arg6[%c0_197, %c0_198, %c0_199] : memref<1x1x3xf32, #tpu.memory_space<vmem>>, vector<1x1x3xf32>
    %665 = vector.shape_cast %664 : vector<1x1x3xf32> to vector<1x3xf32>
    %666 = vector.shape_cast %663 : vector<1x3xf32> to vector<1x1x3xf32>
    tpu.vector_store %arg6[%c0_197, %c0_198, %c0_199], %666 {strides = array<i32>} : memref<1x1x3xf32, #tpu.memory_space<vmem>>, vector<1x1x3xf32>,
    return
  }
  func.func @transform_0(%arg0: i32) -> (i32, i32, i32) {
    %c0_i32 = arith.constant 0 : i32
    %c0_i32_0 = arith.constant 0 : i32
    %c0_i32_1 = arith.constant 0 : i32
    return %arg0, %c0_i32, %c0_i32_0 : i32, i32, i32
  }
  func.func @transform_1(%arg0: i32) -> (i32, i32) {
    %c0_i32 = arith.constant 0 : i32
    %c0_i32_0 = arith.constant 0 : i32
    %c0_i32_1 = arith.constant 0 : i32
    return %c0_i32, %c0_i32_0 : i32, i32
  }
  func.func @transform_2(%arg0: i32) -> (i32, i32, i32) {
    %c0_i32 = arith.constant 0 : i32
    %c0_i32_0 = arith.constant 0 : i32
    %c0_i32_1 = arith.constant 0 : i32
    %c0_i32_2 = arith.constant 0 : i32
    return %c0_i32, %c0_i32_0, %c0_i32_1 : i32, i32, i32
  }
  func.func @transform_3(%arg0: i32) -> (i32, i32, i32) {
    %c0_i32 = arith.constant 0 : i32
    %c0_i32_0 = arith.constant 0 : i32
    %c0_i32_1 = arith.constant 0 : i32
    %c0_i32_2 = arith.constant 0 : i32
    return %c0_i32, %c0_i32_0, %c0_i32_1 : i32, i32, i32
  }
  func.func @transform_4(%arg0: i32) -> (i32, i32, i32) {
    %c0_i32 = arith.constant 0 : i32
    %c0_i32_0 = arith.constant 0 : i32
    %c0_i32_1 = arith.constant 0 : i32
    %c0_i32_2 = arith.constant 0 : i32
    return %c0_i32, %c0_i32_0, %c0_i32_1 : i32, i32, i32
  }
  func.func @transform_5(%arg0: i32) -> (i32, i32, i32) {
    %c0_i32 = arith.constant 0 : i32
    %c0_i32_0 = arith.constant 0 : i32
    %c0_i32_1 = arith.constant 0 : i32
    return %arg0, %c0_i32, %c0_i32_0 : i32, i32, i32
  }
}

</mosaic_0001>

<llo_original>
// kernel: _lambda_.1
$region0: #{_lambda_.1}
  #allocation0 [shape = 'u32[]', space=smem, size = 0x4, offset = 0x4, fixed_abs, tag = 'smem constant byte address 0x4 - core index']
  #allocation1 [shape = 'u32[144,128]{1,0:T(1,128)}', space=vmem, size = 0x12000, scoped, tag = 'internal scratch']
  #allocation2 [shape = 'f32[32,8]{1,0:T(8,128)}', space=vmem, size = 0x4000, scoped, tag = 'scratch operand']
  %s0 = inlined_call_operand.vmem [shape: f32[2,32,4], index: 0, kind: input, shape index: {}]
  %s1 = inlined_call_operand.vmem [shape: f32[34,16], index: 1, kind: input, shape index: {}]
  %s2 = inlined_call_operand.vmem [shape: f32[3,8,35], index: 2, kind: input, shape index: {}]
  %s3 = inlined_call_operand.hbm [shape: f32[3,32,48], index: 3, kind: input, shape index: {}]
  %s4 = inlined_call_operand.vmem [shape: f32[3,1,51], index: 4, kind: input, shape index: {}]
  %s5 = inlined_call_operand.hbm [shape: f32[2,1,3], index: 5, kind: output, shape index: {}]
  %s6 = sld [smem:[#allocation0]]
  $region57: #{_lambda_.1} parent=0
    _
  %s8 = ssub.s32 1, %s6
  %s9 = scalar_select 0, %s8, %s6
  $region1: #{_lambda_.1} parent=0
    #allocation3 [shape = 'u8[49152]{0}', space=vmem, size = 0xc000, scoped, tag = 'input window, operand 3, single buffered']
    #allocation4 [shape = 's32[2]{0}', space=sflag, size = 0x8, scoped, tag = 'scoped memory for _lambda_.1']
    #allocation5 [shape = 's32[2]{0}', space=sflag, size = 0x8, scoped, tag = 'scoped memory for _lambda_.1']
    #allocation6 [shape = 'u8[1024]{0}', space=vmem, size = 0x400, scoped, tag = 'output window, operand 0']
    %10 = vsyncpa [#allocation4], 0
    %11 = vsyncpa [#allocation5], 0
    %s12 = scalar_lea.sflag [#allocation5], 1
    %13 = vsyncpa %s12, 0
    loop: start=0, step=1, limit=4
    $region2: #{_lambda_.1} parent=1 // loop_pre_header
      _
    $region3: #{_lambda_.1} parent=1 // loop_header
      %s15 = sphi 0, %s19
      %p16 = scmp.ge.s32.totalorder %s15, 4
      %s25 = sphi 0, %s27
      %s28 = sphi 0, %s25
      %s29 = sphi 0, %s28
      %s45 = sphi 0, %s29
      %s49 = sphi 0, %s49
      %s51 = sphi 0, %s49
      %s52 = sphi 0, %s51
      %s66 = sphi 0, %s52
      %s70 = sphi 0, %s70
      %s72 = sphi 0, %s70
      %s73 = sphi 0, %s72
      %s87 = sphi 0, %s73
      %s91 = sphi 0, %s91
      %s93 = sphi 0, %s91
      %s94 = sphi 0, %s93
      %s108 = sphi 0, %s94
      %s112 = sphi 0, %s112
      %s114 = sphi 0, %s112
      %s115 = sphi 0, %s114
      %s129 = sphi 0, %s115
      %s135 = sphi 0, %s137
      %s138 = sphi 0, %s135
      %s139 = sphi 0, %s138
      %s155 = sphi 0, %s139
    $region4: #{_lambda_.1} parent=1 // loop_header_branch
      %18 = sbr.rel (%p16) target = $region8
    $region5: #{_lambda_.1} parent=1 // loop_body
      %s20 = ssub.s32 %s15, 1
      %s21 = ssub.s32 %s15, 2
      %s22 = sadd.s32 %s15, 1
      %s23 = ssub.s32 %s15, %s22
      %p24 = scmp.eq.s32.totalorder %s23, 0
      %s26 = sadd.s32 %s25, 1
      %s27 = scalar_select %p24, %s25, %s26
      %p30 = pneg %p24
      %p31 = scmp.eq.s32.totalorder %s15, 1
      %p32 = por %p30, %p31
      %p33 = scmp.ne.s32.totalorder %s25, %s28
      %p34 = scmp.eq.s32.totalorder %s15, 0
      %p35 = por %p33, %p34
      %p36 = scmp.ne.s32.totalorder %s25, %s28
      %p37 = scmp.eq.s32.totalorder %s20, 1
      %p38 = por %p36, %p37
      %p39 = scmp.ne.s32.totalorder %s28, %s29
      %p40 = scmp.eq.s32.totalorder %s20, 0
      %p41 = por %p39, %p40
      %p42 = scmp.ne.s32.totalorder %s28, %s29
      %p43 = scmp.eq.s32.totalorder %s21, 1
      %p44 = por %p42, %p43
      %p46 = scmp.ne.s32.totalorder %s29, %s45
      %p47 = scmp.eq.s32.totalorder %s21, 0
      %p48 = por %p46, %p47
      %s50 = sadd.s32 %s49, 1
      %p53 = scmp.eq.s32.totalorder %s15, 1
      %p54 = scmp.ne.s32.totalorder %s49, %s51
      %p55 = scmp.eq.s32.totalorder %s15, 0
      %p56 = por %p54, %p55
      %p57 = scmp.ne.s32.totalorder %s49, %s51
      %p58 = scmp.eq.s32.totalorder %s20, 1
      %p59 = por %p57, %p58
      %p60 = scmp.ne.s32.totalorder %s51, %s52
      %p61 = scmp.eq.s32.totalorder %s20, 0
      %p62 = por %p60, %p61
      %p63 = scmp.ne.s32.totalorder %s51, %s52
      %p64 = scmp.eq.s32.totalorder %s21, 1
      %p65 = por %p63, %p64
      %p67 = scmp.ne.s32.totalorder %s52, %s66
      %p68 = scmp.eq.s32.totalorder %s21, 0
      %p69 = por %p67, %p68
      %s71 = sadd.s32 %s70, 1
      %p74 = scmp.eq.s32.totalorder %s15, 1
      %p75 = scmp.ne.s32.totalorder %s70, %s72
      %p76 = scmp.eq.s32.totalorder %s15, 0
      %p77 = por %p75, %p76
      %p78 = scmp.ne.s32.totalorder %s70, %s72
      %p79 = scmp.eq.s32.totalorder %s20, 1
      %p80 = por %p78, %p79
      %p81 = scmp.ne.s32.totalorder %s72, %s73
      %p82 = scmp.eq.s32.totalorder %s20, 0
      %p83 = por %p81, %p82
      %p84 = scmp.ne.s32.totalorder %s72, %s73
      %p85 = scmp.eq.s32.totalorder %s21, 1
      %p86 = por %p84, %p85
      %p88 = scmp.ne.s32.totalorder %s73, %s87
      %p89 = scmp.eq.s32.totalorder %s21, 0
      %p90 = por %p88, %p89
      %s92 = sadd.s32 %s91, 1
      %p95 = scmp.eq.s32.totalorder %s15, 1
      %p96 = scmp.ne.s32.totalorder %s91, %s93
      %p97 = scmp.eq.s32.totalorder %s15, 0
      %p98 = por %p96, %p97
      %p99 = scmp.ne.s32.totalorder %s91, %s93
      %p100 = scmp.eq.s32.totalorder %s20, 1
      %p101 = por %p99, %p100
      %p102 = scmp.ne.s32.totalorder %s93, %s94
      %p103 = scmp.eq.s32.totalorder %s20, 0
      %p104 = por %p102, %p103
      %p105 = scmp.ne.s32.totalorder %s93, %s94
      %p106 = scmp.eq.s32.totalorder %s21, 1
      %p107 = por %p105, %p106
      %p109 = scmp.ne.s32.totalorder %s94, %s108
      %p110 = scmp.eq.s32.totalorder %s21, 0
      %p111 = por %p109, %p110
      %s113 = sadd.s32 %s112, 1
      %p116 = scmp.eq.s32.totalorder %s15, 1
      %p117 = scmp.ne.s32.totalorder %s112, %s114
      %p118 = scmp.eq.s32.totalorder %s15, 0
      %p119 = por %p117, %p118
      %p120 = scmp.ne.s32.totalorder %s112, %s114
      %p121 = scmp.eq.s32.totalorder %s20, 1
      %p122 = por %p120, %p121
      %p123 = scmp.ne.s32.totalorder %s114, %s115
      %p124 = scmp.eq.s32.totalorder %s20, 0
      %p125 = por %p123, %p124
      %p126 = scmp.ne.s32.totalorder %s114, %s115
      %p127 = scmp.eq.s32.totalorder %s21, 1
      %p128 = por %p126, %p127
      %p130 = scmp.ne.s32.totalorder %s115, %s129
      %p131 = scmp.eq.s32.totalorder %s21, 0
      %p132 = por %p130, %p131
      %s133 = ssub.s32 %s15, %s22
      %p134 = scmp.eq.s32.totalorder %s133, 0
      %s136 = sadd.s32 %s135, 1
      %s137 = scalar_select %p134, %s135, %s136
      %p140 = pneg %p134
      %p141 = scmp.eq.s32.totalorder %s15, 1
      %p142 = por %p140, %p141
      %p143 = scmp.ne.s32.totalorder %s135, %s138
      %p144 = scmp.eq.s32.totalorder %s15, 0
      %p145 = por %p143, %p144
      %p146 = scmp.ne.s32.totalorder %s135, %s138
      %p147 = scmp.eq.s32.totalorder %s20, 1
      %p148 = por %p146, %p147
      %p149 = scmp.ne.s32.totalorder %s138, %s139
      %p150 = scmp.eq.s32.totalorder %s20, 0
      %p151 = por %p149, %p150
      %p152 = scmp.ne.s32.totalorder %s138, %s139
      %p153 = scmp.eq.s32.totalorder %s21, 1
      %p154 = por %p152, %p153
      %p156 = scmp.ne.s32.totalorder %s139, %s155
      %p157 = scmp.eq.s32.totalorder %s21, 0
      %p158 = por %p156, %p157
      %p159 = scmp.le.s32.totalorder 1, %s15
      %p160 = scmp.lt.s32.totalorder %s15, 3
      %p161 = pnand %p159, %p160
      %p162 = pneg %p161
      // Predicated region
      $region9: #{_lambda_.1} parent=5 // pred_check
        _
      $region10: #{_lambda_.1} parent=5 // pred_check_branch
        %164 = sbr.rel (%p161) target = $region12
      $region11: #{_lambda_.1} parent=5 // pred_region
        %s165 = ssub.s32 %s15, 1
        // Predicated region
        $region13: #{_lambda_.1} parent=11 // pred_check
          %p166 = pneg %p62
        $region14: #{_lambda_.1} parent=11 // pred_check_branch
          %168 = sbr.rel (%p166) target = $region16
        $region15: #{_lambda_.1} parent=11 // pred_region
          _
        $region16: #{_lambda_.1} parent=11 // pred_fallthru
          _
        // Predicated region
        $region17: #{_lambda_.1} parent=11 // pred_check
          %p169 = pneg %p83
        $region18: #{_lambda_.1} parent=11 // pred_check_branch
          %171 = sbr.rel (%p169) target = $region20
        $region19: #{_lambda_.1} parent=11 // pred_region
          _
        $region20: #{_lambda_.1} parent=11 // pred_fallthru
          _
        // Predicated region
        $region21: #{_lambda_.1} parent=11 // pred_check
          %p172 = pneg %p104
        $region22: #{_lambda_.1} parent=11 // pred_check_branch
          %174 = sbr.rel (%p172) target = $region24
        $region23: #{_lambda_.1} parent=11 // pred_region
          %s176 = ssub.s32 1536, 1536
          %177 = vsyncadd [#allocation4], %s176
          %s178 = sshll.u32 [#allocation3], 4
          %s179 = int_to_ptr.vmem [resolvable:$true] %s178
          %184 = dma.hbm_to_vmem [thread:$0]  %s3, 1536, %s179, [#allocation4], 128, 128, 8
        $region24: #{_lambda_.1} parent=11 // pred_fallthru
          _
        // Predicated region
        $region25: #{_lambda_.1} parent=11 // pred_check
          %p185 = pneg %p125
        $region26: #{_lambda_.1} parent=11 // pred_check_branch
          %187 = sbr.rel (%p185) target = $region28
        $region27: #{_lambda_.1} parent=11 // pred_region
          _
        $region28: #{_lambda_.1} parent=11 // pred_fallthru
          _
      $region12: #{_lambda_.1} parent=5 // pred_fallthru
        _
      %p188 = scmp.lt.s32.totalorder %s15, 2
      // Predicated region
      $region29: #{_lambda_.1} parent=5 // pred_check
        %p189 = pneg %p188
      $region30: #{_lambda_.1} parent=5 // pred_check_branch
        %191 = sbr.rel (%p189) target = $region32
      $region31: #{_lambda_.1} parent=5 // pred_region
        // Predicated region
        $region33: #{_lambda_.1} parent=31 // pred_check
          %p192 = pneg %p35
        $region34: #{_lambda_.1} parent=31 // pred_check_branch
          %194 = sbr.rel (%p192) target = $region36
        $region35: #{_lambda_.1} parent=31 // pred_region
          %p195 = scmp.lt.s32.totalorder %s15, 1
          %s196 = scalar_select %p195, %s15, 1
          %s197 = smul.addr %s196, 4
          %s198 = smul.addr %s197, 8
          %s199 = scalar_lea.vmem %s0, %s198
        $region36: #{_lambda_.1} parent=31 // pred_fallthru
          _
      $region32: #{_lambda_.1} parent=5 // pred_fallthru
        _
      %p200 = scmp.le.s32.totalorder 1, %s15
      %p201 = scmp.lt.s32.totalorder %s15, 3
      %p202 = pnand %p200, %p201
      %p203 = pneg %p202
      // Predicated region
      $region37: #{_lambda_.1} parent=5 // pred_check
        _
      $region38: #{_lambda_.1} parent=5 // pred_check_branch
        %205 = sbr.rel (%p202) target = $region40
      $region39: #{_lambda_.1} parent=5 // pred_region
        %s206 = ssub.s32 %s15, 1
        // Predicated region
        $region41: #{_lambda_.1} parent=39 // pred_check
          %p207 = pneg %p104
        $region42: #{_lambda_.1} parent=39 // pred_check_branch
          %209 = sbr.rel (%p207) target = $region44
        $region43: #{_lambda_.1} parent=39 // pred_region
          %210 = dma.done [#allocation4], 1536
        $region44: #{_lambda_.1} parent=39 // pred_fallthru
          _
        %p211 = scmp.lt.s32.totalorder %s20, 1
        %s212 = scalar_select %p211, %s20, 1
        %s213 = smul.addr %s212, 4
        %s214 = smul.addr %s213, 8
        %s215 = scalar_lea.vmem %s0, %s214
        %p216 = pneg %p41
        %p217 = pneg %p38
        %p218 = pneg %p62
        %p219 = pneg %p59
        %p220 = pneg %p83
        %p221 = pneg %p80
        %p222 = pneg %p104
        %p223 = pneg %p101
        %p224 = pneg %p125
        %p225 = pneg %p122
        %p226 = pneg %p151
        %p227 = pneg %p148
        %s228 = sand.u32 %s138, 1
        %s229 = scalar_lea.sflag [#allocation5], %s228
        %s230 = sand.u32 %s138, 1
        %s231 = scalar_lea.vmem [#allocation6], %s230
        %p232 = scmp.lt.s32.totalorder %s20, 1
        %s233 = scalar_select %p232, %s20, 1
        %s234 = smul.addr %s233, 4
        %s235 = smul.addr %s234, 8
        %s236 = scalar_lea.vmem %s0, %s235
        %v237 = vld [vmem:[%s1] sm:$0xff]
        %v238 = vld [vmem:[%s1 + $0x8] sm:$0xff]
        %v239 = vld [vmem:[%s1 + $0x10] sm:$0xff]
        %v240 = vld [vmem:[%s1 + $0x18] sm:$0xff]
        %v241 = vld [vmem:[%s1 + $0x20] sm:$0x1]
        %v242 = vld [vmem:[%s1 + $0x21] sm:$0x1]
        %v243 = vld [vmem:[%s236] sm:$0xff]
        %v244 = vld [vmem:[%s236 + $0x8] sm:$0xff]
        %v245 = vld [vmem:[%s236 + $0x10] sm:$0xff]
        %v246 = vld [vmem:[%s236 + $0x18] sm:$0xff]
        %vm251 = vcmask 1042432
        %v252 = vrot.slane %v243, 5
        %v253 = vrot.slane %v244, 5
        %v254 = vsel %vm251, %v252, %v253
        %v255 = vrot.slane %v245, 5
        %v256 = vsel %vm251, %v253, %v255
        %v257 = vrot.slane %v246, 5
        %v258 = vsel %vm251, %v255, %v257
        %v264 = vsel %vm251, 0.0, %v252
        %v265 = vsel %vm251, %v257, 0.0
        %vm268 = vcmask 1046528
        %v269 = vrot.slane %v264, 1
        %v270 = vrot.slane %v254, 1
        %v271 = vsel %vm268, %v269, %v270
        %v272 = vrot.slane %v256, 1
        %v273 = vsel %vm268, %v270, %v272
        %v274 = vrot.slane %v258, 1
        %v275 = vsel %vm268, %v272, %v274
        %v276 = vrot.slane %v265, 1
        %v277 = vsel %vm268, %v274, %v276
        %278 = vrot.lane.b32.xlu0 %v271, 4
        %v279 = vpop.permute.xlu0 %278
        %280 = vrot.lane.b32.xlu0 %v273, 4
        %v281 = vpop.permute.xlu0 %280
        %282 = vrot.lane.b32.xlu0 %v275, 4
        %v283 = vpop.permute.xlu0 %282
        %284 = vrot.lane.b32.xlu0 %v277, 4
        %v285 = vpop.permute.xlu0 %284
        %vm290 = vcmask 1045504
        %v291 = vrot.slane %v264, 2
        %v292 = vrot.slane %v254, 2
        %v293 = vsel %vm290, %v291, %v292
        %v294 = vrot.slane %v256, 2
        %v295 = vsel %vm290, %v292, %v294
        %v296 = vrot.slane %v258, 2
        %v297 = vsel %vm290, %v294, %v296
        %v298 = vrot.slane %v265, 2
        %v299 = vsel %vm290, %v296, %v298
        %300 = vrot.lane.b32.xlu0 %v293, 8
        %v301 = vpop.permute.xlu0 %300
        %302 = vrot.lane.b32.xlu0 %v295, 8
        %v303 = vpop.permute.xlu0 %302
        %304 = vrot.lane.b32.xlu0 %v297, 8
        %v305 = vpop.permute.xlu0 %304
        %306 = vrot.lane.b32.xlu0 %v299, 8
        %v307 = vpop.permute.xlu0 %306
        %vm312 = vcmask 1044480
        %v313 = vrot.slane %v264, 3
        %v314 = vrot.slane %v254, 3
        %v315 = vsel %vm312, %v313, %v314
        %v316 = vrot.slane %v256, 3
        %v317 = vsel %vm312, %v314, %v316
        %v318 = vrot.slane %v258, 3
        %v319 = vsel %vm312, %v316, %v318
        %v320 = vrot.slane %v265, 3
        %v321 = vsel %vm312, %v318, %v320
        %322 = vrot.lane.b32.xlu0 %v315, 12
        %v323 = vpop.permute.xlu0 %322
        %324 = vrot.lane.b32.xlu0 %v317, 12
        %v325 = vpop.permute.xlu0 %324
        %326 = vrot.lane.b32.xlu0 %v319, 12
        %v327 = vpop.permute.xlu0 %326
        %328 = vrot.lane.b32.xlu0 %v321, 12
        %v329 = vpop.permute.xlu0 %328
        %vm334 = vcmask 1043456
        %v335 = vrot.slane %v264, 4
        %v336 = vrot.slane %v254, 4
        %v337 = vsel %vm334, %v335, %v336
        %v338 = vrot.slane %v256, 4
        %v339 = vsel %vm334, %v336, %v338
        %v340 = vrot.slane %v258, 4
        %v341 = vsel %vm334, %v338, %v340
        %v342 = vrot.slane %v265, 4
        %v343 = vsel %vm334, %v340, %v342
        %344 = vrot.lane.b32.xlu0 %v337, 16
        %v345 = vpop.permute.xlu0 %344
        %346 = vrot.lane.b32.xlu0 %v339, 16
        %v347 = vpop.permute.xlu0 %346
        %348 = vrot.lane.b32.xlu0 %v341, 16
        %v349 = vpop.permute.xlu0 %348
        %350 = vrot.lane.b32.xlu0 %v343, 16
        %v351 = vpop.permute.xlu0 %350
        %v356 = vrot.slane %v264, 5
        %v357 = vrot.slane %v254, 5
        %v358 = vsel %vm251, %v356, %v357
        %v359 = vrot.slane %v256, 5
        %v360 = vsel %vm251, %v357, %v359
        %v361 = vrot.slane %v258, 5
        %v362 = vsel %vm251, %v359, %v361
        %v363 = vrot.slane %v265, 5
        %v364 = vsel %vm251, %v361, %v363
        %365 = vrot.lane.b32.xlu0 %v358, 20
        %v366 = vpop.permute.xlu0 %365
        %367 = vrot.lane.b32.xlu0 %v360, 20
        %v368 = vpop.permute.xlu0 %367
        %369 = vrot.lane.b32.xlu0 %v362, 20
        %v370 = vpop.permute.xlu0 %369
        %371 = vrot.lane.b32.xlu0 %v364, 20
        %v372 = vpop.permute.xlu0 %371
        %vm377 = vcmask 1041408
        %v378 = vrot.slane %v264, 6
        %v379 = vrot.slane %v254, 6
        %v380 = vsel %vm377, %v378, %v379
        %v381 = vrot.slane %v256, 6
        %v382 = vsel %vm377, %v379, %v381
        %v383 = vrot.slane %v258, 6
        %v384 = vsel %vm377, %v381, %v383
        %v385 = vrot.slane %v265, 6
        %v386 = vsel %vm377, %v383, %v385
        %387 = vrot.lane.b32.xlu0 %v380, 24
        %v388 = vpop.permute.xlu0 %387
        %389 = vrot.lane.b32.xlu0 %v382, 24
        %v390 = vpop.permute.xlu0 %389
        %391 = vrot.lane.b32.xlu0 %v384, 24
        %v392 = vpop.permute.xlu0 %391
        %393 = vrot.lane.b32.xlu0 %v386, 24
        %v394 = vpop.permute.xlu0 %393
        %vm399 = vcmask 1040384
        %v400 = vrot.slane %v264, 7
        %v401 = vrot.slane %v254, 7
        %v402 = vsel %vm399, %v400, %v401
        %v403 = vrot.slane %v256, 7
        %v404 = vsel %vm399, %v401, %v403
        %v405 = vrot.slane %v258, 7
        %v406 = vsel %vm399, %v403, %v405
        %v407 = vrot.slane %v265, 7
        %v408 = vsel %vm399, %v405, %v407
        %409 = vrot.lane.b32.xlu0 %v402, 28
        %v410 = vpop.permute.xlu0 %409
        %411 = vrot.lane.b32.xlu0 %v404, 28
        %v412 = vpop.permute.xlu0 %411
        %413 = vrot.lane.b32.xlu0 %v406, 28
        %v414 = vpop.permute.xlu0 %413
        %415 = vrot.lane.b32.xlu0 %v408, 28
        %v416 = vpop.permute.xlu0 %415
        %vm421 = vcmask 31744
        %v422 = vsel %vm421, %v264, %v279
        %v423 = vsel %vm421, %v254, %v281
        %v424 = vsel %vm421, %v256, %v283
        %v425 = vsel %vm421, %v258, %v285
        %vm426 = vcmask 64512
        %v427 = vsel %vm426, %v422, %v301
        %v428 = vsel %vm426, %v423, %v303
        %v429 = vsel %vm426, %v424, %v305
        %v430 = vsel %vm426, %v425, %v307
        %vm431 = vcmask 97280
        %v432 = vsel %vm431, %v427, %v323
        %v433 = vsel %vm431, %v428, %v325
        %v434 = vsel %vm431, %v429, %v327
        %v435 = vsel %vm431, %v430, %v329
        %vm436 = vcmask 130048
        %v437 = vsel %vm436, %v432, %v345
        %v438 = vsel %vm436, %v433, %v347
        %v439 = vsel %vm436, %v434, %v349
        %v440 = vsel %vm436, %v435, %v351
        %vm441 = vcmask 162816
        %v442 = vsel %vm441, %v437, %v366
        %v443 = vsel %vm441, %v438, %v368
        %v444 = vsel %vm441, %v439, %v370
        %v445 = vsel %vm441, %v440, %v372
        %vm446 = vcmask 195584
        %v447 = vsel %vm446, %v442, %v388
        %v448 = vsel %vm446, %v443, %v390
        %v449 = vsel %vm446, %v444, %v392
        %v450 = vsel %vm446, %v445, %v394
        %vm451 = vcmask 228352
        %v452 = vsel %vm451, %v447, %v410
        %v453 = vsel %vm451, %v448, %v412
        %v454 = vsel %vm451, %v449, %v414
        %v455 = vsel %vm451, %v450, %v416
        %vm456 = vcmask 261120
        %v458 = vsel %vm456, %v452, 0
        %v461 = vsel %vm456, %v453, 0
        %v464 = vsel %vm456, %v454, 0
        %v467 = vsel %vm456, %v455, 0
        %469 = vmatprep.subr.mxu0 0.0
        %470 = vmatpush1.msra.mxu0 %v237
        %471 = vmatprep.subr.mxu0 0.0
        %472 = vmatpush1.msra.mxu0 %v238
        %473 = vmatprep.subr.mxu0 0.0
        %474 = vmatpush1.msra.mxu0 %v239
        %475 = vmatprep.subr.mxu0 0.0
        %476 = vmatpush1.msra.mxu0 %v240
        %477 = vmatprep.subr.mxu0 0.0
        %478 = vmatpush1.msra.mxu0 0.0
        %479 = vmatprep.subr.mxu0 0.0
        %480 = vmatpush1.msra.mxu0 0.0
        %481 = vmatprep.subr.mxu0 0.0
        %482 = vmatpush1.msra.mxu0 0.0
        %483 = vmatprep.subr.mxu0 0.0
        %484 = vmatpush1.msra.mxu0 0.0
        %485 = vmatprep.subr.mxu0 0.0
        %486 = vmatpush1.msra.mxu0 0.0
        %487 = vmatprep.subr.mxu0 0.0
        %488 = vmatpush1.msra.mxu0 0.0
        %489 = vmatprep.subr.mxu0 0.0
        %490 = vmatpush1.msra.mxu0 0.0
        %491 = vmatprep.subr.mxu0 0.0
        %492 = vmatpush1.msra.mxu0 0.0
        %493 = vmatprep.subr.mxu0 0.0
        %494 = vmatpush1.msra.mxu0 0.0
        %495 = vmatprep.subr.mxu0 0.0
        %496 = vmatpush1.msra.mxu0 0.0
        %497 = vmatprep.subr.mxu0 0.0
        %498 = vmatpush1.msra.mxu0 0.0
        %499 = vmatprep.subr.mxu0 0.0
        %500 = vmatpush1.msra.mxu0 0.0
        %501 = vmatprep.subr.mxu0 0.0
        %502 = vmatpush1.msra.mxu0 0.0
        %503 = vmatprep.subr.mxu0 0.0
        %504 = vmatpush1.msra.mxu0 0.0
        %505 = vmatprep.subr.mxu0 0.0
        %506 = vmatpush1.msra.mxu0 0.0
        %507 = vmatprep.subr.mxu0 0.0
        %508 = vmatpush1.msra.mxu0 0.0
        %509 = vmatprep.subr.mxu0 0.0
        %510 = vmatpush1.msra.mxu0 0.0
        %511 = vmatprep.subr.mxu0 0.0
        %512 = vmatpush1.msra.mxu0 0.0
        %513 = vmatprep.subr.mxu0 0.0
        %514 = vmatpush1.msra.mxu0 0.0
        %515 = vmatprep.subr.mxu0 0.0
        %516 = vmatpush1.msra.mxu0 0.0
        %517 = vmatprep.subr.mxu0 0.0
        %518 = vmatpush1.msra.mxu0 0.0
        %519 = vmatprep.subr.mxu0 0.0
        %520 = vmatpush1.msra.mxu0 0.0
        %521 = vmatprep.subr.mxu0 0.0
        %522 = vmatpush1.msra.mxu0 0.0
        %523 = vmatprep.subr.mxu0 0.0
        %524 = vmatpush1.msra.mxu0 0.0
        %525 = vmatprep.subr.mxu0 0.0
        %526 = vmatpush1.msra.mxu0 0.0
        %527 = vmatprep.subr.mxu0 0.0
        %528 = vmatpush1.msra.mxu0 0.0
        %529 = vmatprep.subr.mxu0 0.0
        %530 = vmatpush1.msra.mxu0 0.0
        %531 = vmatprep.subr.mxu0 0.0
        %532 = vmatpush1.msra.mxu0 0.0
        %533 = vmatprep.mubr.f32.mxu0 0.0
        %534 = vmatmul.mubr.f32.gmra.mrb[0].mxu0 %v458
        %v535 = vpop.f32.mrb[0].mxu0
        %v536 = vadd.f32 0.0, %v535
        %v537 = vpop.f32.mrb[0].mxu0
        %538 = vmatprep.mubr.f32.mxu0 0.0
        %539 = vmatmul.mubr.f32.gmra.mrb[0].mxu0 %v461
        %v540 = vpop.f32.mrb[0].mxu0
        %v541 = vadd.f32 0.0, %v540
        %v542 = vpop.f32.mrb[0].mxu0
        %543 = vmatprep.mubr.f32.mxu0 0.0
        %544 = vmatmul.mubr.f32.gmra.mrb[0].mxu0 %v464
        %v545 = vpop.f32.mrb[0].mxu0
        %v546 = vadd.f32 0.0, %v545
        %v547 = vpop.f32.mrb[0].mxu0
        %548 = vmatprep.mubr.f32.mxu0 0.0
        %549 = vmatmul.mubr.f32.gmra.mrb[0].mxu0 %v467
        %v550 = vpop.f32.mrb[0].mxu0
        %v551 = vadd.f32 0.0, %v550
        %v552 = vpop.f32.mrb[0].mxu0
        %553 = vdwg.mxu0
        %v554 = vlaneseq
        %v555 = vshrl.u32 %v554, 7
        %v556 = vsub.s32 0, %v555
        %v557 = vrot.slane %v241, %v556
        %v558 = vmul.f32 %v536, %v557
        %v559 = vmul.f32 %v541, %v557
        %v560 = vmul.f32 %v546, %v557
        %v561 = vmul.f32 %v551, %v557
        %v562 = vlaneseq
        %v563 = vshrl.u32 %v562, 7
        %v564 = vsub.s32 0, %v563
        %v565 = vrot.slane %v242, %v564
        %v566 = vadd.f32 %v558, %v565
        %v567 = vadd.f32 %v559, %v565
        %v568 = vadd.f32 %v560, %v565
        %v569 = vadd.f32 %v561, %v565
        %vm570 = vcmp.gt.f32.partialorder %v566, 0.0
        %vm571 = vcmp.gt.f32.partialorder %v567, 0.0
        %vm572 = vcmp.gt.f32.partialorder %v568, 0.0
        %vm573 = vcmp.gt.f32.partialorder %v569, 0.0
        %v574 = vmin.f32 %v566, 0.0
        %v575 = vmin.f32 %v567, 0.0
        %v576 = vmin.f32 %v568, 0.0
        %v577 = vmin.f32 %v569, 0.0
        %v578 = vmul.f32 %v574, 1.442695
        %v579 = vpow.pop %v578
        %v580 = vmul.f32 %v575, 1.442695
        %v581 = vpow.pop %v580
        %v582 = vmul.f32 %v576, 1.442695
        %v583 = vpow.pop %v582
        %v584 = vmul.f32 %v577, 1.442695
        %v585 = vpow.pop %v584
        %v586 = vsub.f32 %v579, 1.0
        %v587 = vsub.f32 %v581, 1.0
        %v588 = vsub.f32 %v583, 1.0
        %v589 = vsub.f32 %v585, 1.0
        %v590 = vsel %vm570, %v566, %v586
        %v591 = vsel %vm571, %v567, %v587
        %v592 = vsel %vm572, %v568, %v588
        %v593 = vsel %vm573, %v569, %v589
        %594 = vst.msk [vmem:[#allocation2] sm:$0xff] %vm426, %v590
        %595 = vst.msk [vmem:[#allocation2 + $0x8] sm:$0xff] %vm426, %v591
        %596 = vst.msk [vmem:[#allocation2 + $0x10] sm:$0xff] %vm426, %v592
        %597 = vst.msk [vmem:[#allocation2 + $0x18] sm:$0xff] %vm426, %v593
        %v598 = vld [vmem:[#allocation2] ss:$2 sm:$0xff]
        %s599 = scalar_lea.vmem [#allocation2], 16
        %v600 = vld [vmem:[%s599] ss:$2 sm:$0xff]
        %s601 = scalar_lea.vmem [#allocation2], 1
        %v602 = vld [vmem:[%s601] ss:$2 sm:$0xff]
        %s603 = scalar_lea.vmem [#allocation2], 17
        %v604 = vld [vmem:[%s603] ss:$2 sm:$0xff]
        %v605 = vadd.f32 %v598, %v602
        %v606 = vadd.f32 %v600, %v604
        %v607 = vmul.f32 %v605, 0.5
        %v608 = vmul.f32 %v606, 0.5
        %v611 = vrot.slane %v607, 7
        %v612 = vrot.slane %v608, 7
        %v613 = vsel %vm399, %v611, %v612
        %v617 = vsel %vm399, 0.0, %v611
        %v618 = vsel %vm399, %v612, 0.0
        %v621 = vrot.slane %v617, 1
        %v622 = vrot.slane %v613, 1
        %v623 = vsel %vm268, %v621, %v622
        %v624 = vrot.slane %v618, 1
        %v625 = vsel %vm268, %v622, %v624
        %626 = vrot.lane.b32.xlu0 %v623, 8
        %v627 = vpop.permute.xlu0 %626
        %628 = vrot.lane.b32.xlu0 %v625, 8
        %v629 = vpop.permute.xlu0 %628
        %v632 = vrot.slane %v617, 2
        %v633 = vrot.slane %v613, 2
        %v634 = vsel %vm290, %v632, %v633
        %v635 = vrot.slane %v618, 2
        %v636 = vsel %vm290, %v633, %v635
        %637 = vrot.lane.b32.xlu0 %v634, 16
        %v638 = vpop.permute.xlu0 %637
        %639 = vrot.lane.b32.xlu0 %v636, 16
        %v640 = vpop.permute.xlu0 %639
        %v643 = vrot.slane %v617, 3
        %v644 = vrot.slane %v613, 3
        %v645 = vsel %vm312, %v643, %v644
        %v646 = vrot.slane %v618, 3
        %v647 = vsel %vm312, %v644, %v646
        %648 = vrot.lane.b32.xlu0 %v645, 24
        %v649 = vpop.permute.xlu0 %648
        %650 = vrot.lane.b32.xlu0 %v647, 24
        %v651 = vpop.permute.xlu0 %650
        %v654 = vsel %vm426, %v617, %v627
        %v655 = vsel %vm426, %v613, %v629
        %v656 = vsel %vm436, %v654, %v638
        %v657 = vsel %vm436, %v655, %v640
        %v658 = vsel %vm446, %v656, %v649
        %v659 = vsel %vm446, %v657, %v651
        %664 = vrot.lane.b32.xlu0 %v237, 120
        %v665 = vpop.permute.xlu0 %664
        %666 = vrot.lane.b32.xlu0 %v238, 120
        %v667 = vpop.permute.xlu0 %666
        %668 = vrot.lane.b32.xlu0 %v239, 120
        %v669 = vpop.permute.xlu0 %668
        %670 = vrot.lane.b32.xlu0 %v240, 120
        %v671 = vpop.permute.xlu0 %670
        %v677 = vsel %vm456, %v658, 0
        %v680 = vsel %vm456, %v659, 0
        %682 = vmatprep.subr.mxu0 0.0
        %683 = vmatpush1.msra.mxu0 %v665
        %684 = vmatprep.subr.mxu0 0.0
        %685 = vmatpush1.msra.mxu0 %v667
        %686 = vmatprep.subr.mxu0 0.0
        %687 = vmatpush1.msra.mxu0 %v669
        %688 = vmatprep.subr.mxu0 0.0
        %689 = vmatpush1.msra.mxu0 %v671
        %690 = vmatprep.subr.mxu0 0.0
        %691 = vmatpush1.msra.mxu0 0.0
        %692 = vmatprep.subr.mxu0 0.0
        %693 = vmatpush1.msra.mxu0 0.0
        %694 = vmatprep.subr.mxu0 0.0
        %695 = vmatpush1.msra.mxu0 0.0
        %696 = vmatprep.subr.mxu0 0.0
        %697 = vmatpush1.msra.mxu0 0.0
        %698 = vmatprep.subr.mxu0 0.0
        %699 = vmatpush1.msra.mxu0 0.0
        %700 = vmatprep.subr.mxu0 0.0
        %701 = vmatpush1.msra.mxu0 0.0
        %702 = vmatprep.subr.mxu0 0.0
        %703 = vmatpush1.msra.mxu0 0.0
        %704 = vmatprep.subr.mxu0 0.0
        %705 = vmatpush1.msra.mxu0 0.0
        %706 = vmatprep.subr.mxu0 0.0
        %707 = vmatpush1.msra.mxu0 0.0
        %708 = vmatprep.subr.mxu0 0.0
        %709 = vmatpush1.msra.mxu0 0.0
        %710 = vmatprep.subr.mxu0 0.0
        %711 = vmatpush1.msra.mxu0 0.0
        %712 = vmatprep.subr.mxu0 0.0
        %713 = vmatpush1.msra.mxu0 0.0
        %714 = vmatprep.subr.mxu0 0.0
        %715 = vmatpush1.msra.mxu0 0.0
        %716 = vmatprep.subr.mxu0 0.0
        %717 = vmatpush1.msra.mxu0 0.0
        %718 = vmatprep.subr.mxu0 0.0
        %719 = vmatpush1.msra.mxu0 0.0
        %720 = vmatprep.subr.mxu0 0.0
        %721 = vmatpush1.msra.mxu0 0.0
        %722 = vmatprep.subr.mxu0 0.0
        %723 = vmatpush1.msra.mxu0 0.0
        %724 = vmatprep.subr.mxu0 0.0
        %725 = vmatpush1.msra.mxu0 0.0
        %726 = vmatprep.subr.mxu0 0.0
        %727 = vmatpush1.msra.mxu0 0.0
        %728 = vmatprep.subr.mxu0 0.0
        %729 = vmatpush1.msra.mxu0 0.0
        %730 = vmatprep.subr.mxu0 0.0
        %731 = vmatpush1.msra.mxu0 0.0
        %732 = vmatprep.subr.mxu0 0.0
        %733 = vmatpush1.msra.mxu0 0.0
        %734 = vmatprep.subr.mxu0 0.0
        %735 = vmatpush1.msra.mxu0 0.0
        %736 = vmatprep.subr.mxu0 0.0
        %737 = vmatpush1.msra.mxu0 0.0
        %738 = vmatprep.subr.mxu0 0.0
        %739 = vmatpush1.msra.mxu0 0.0
        %740 = vmatprep.subr.mxu0 0.0
        %741 = vmatpush1.msra.mxu0 0.0
        %742 = vmatprep.subr.mxu0 0.0
        %743 = vmatpush1.msra.mxu0 0.0
        %744 = vmatprep.subr.mxu0 0.0
        %745 = vmatpush1.msra.mxu0 0.0
        %746 = vmatprep.mubr.f32.mxu0 0.0
        %747 = vmatmul.mubr.f32.gmra.mrb[0].mxu0 %v677
        %v748 = vpop.f32.mrb[0].mxu0
        %v749 = vadd.f32 0.0, %v748
        %v750 = vpop.f32.mrb[0].mxu0
        %751 = vmatprep.mubr.f32.mxu0 0.0
        %752 = vmatmul.mubr.f32.gmra.mrb[0].mxu0 %v680
        %v753 = vpop.f32.mrb[0].mxu0
        %v754 = vadd.f32 0.0, %v753
        %v755 = vpop.f32.mrb[0].mxu0
        %756 = vdwg.mxu0
        %758 = vrot.lane.b32.xlu0 %v557, 120
        %v759 = vpop.permute.xlu0 %758
        %v761 = vmul.f32 %v749, %v759
        %v762 = vmul.f32 %v754, %v759
        %764 = vrot.lane.b32.xlu0 %v565, 120
        %v765 = vpop.permute.xlu0 %764
        %v767 = vadd.f32 %v761, %v765
        %v768 = vadd.f32 %v762, %v765
        %vm769 = vcmp.gt.f32.partialorder %v767, 0.0
        %vm770 = vcmp.gt.f32.partialorder %v768, 0.0
        %v771 = vmin.f32 %v767, 0.0
        %v772 = vmin.f32 %v768, 0.0
        %v773 = vmul.f32 %v771, 1.442695
        %v774 = vpow.pop %v773
        %v775 = vmul.f32 %v772, 1.442695
        %v776 = vpow.pop %v775
        %v777 = vsub.f32 %v774, 1.0
        %v778 = vsub.f32 %v776, 1.0
        %v779 = vsel %vm769, %v767, %v777
        %v780 = vsel %vm770, %v768, %v778
        %781 = vst.msk [vmem:[#allocation2] sm:$0xff] %vm426, %v779
        %782 = vst.msk [vmem:[#allocation2 + $0x8] sm:$0xff] %vm426, %v780
        %v783 = vld [vmem:[#allocation2] ss:$2 sm:$0xff]
        %v784 = vld [vmem:[%s601] ss:$2 sm:$0xff]
        %v785 = vadd.f32 %v783, %v784
        %v786 = vmul.f32 %v785, 0.5
        %v787 = vld [vmem:[%s2] sm:$0xff]
        %v788 = vld [vmem:[#allocation3] sm:$0xff]
        %v789 = vld [vmem:[#allocation3 + $0x8] sm:$0xff]
        %v790 = vld [vmem:[#allocation3 + $0x10] sm:$0xff]
        %v791 = vld [vmem:[#allocation3 + $0x18] sm:$0xff]
        %v792 = vld [vmem:[%s4] sm:$0x1]
        %vm793 = vcmask 62464
        %v794 = vsel %vm793, %v786, 0.0
        %795 = vadd.xlane.f32.xlu0 %v794
        %v796 = vpop.xlane.xlu0 %795
        %v797 = vrcp.pop 8.0
        %v798 = vmul.f32 %v796, %v797
        %v799 = vsub.f32 %v786, %v798
        %v800 = vmul.f32 %v799, %v799
        %v801 = vsel %vm793, %v800, 0.0
        %802 = vadd.xlane.f32.xlu0 %v801
        %v803 = vpop.xlane.xlu0 %802
        %v804 = vmul.f32 %v803, %v797
        %v805 = vadd.f32 %v804, 1e-06
        %v806 = vrsqrt.pop %v805
        %v807 = vmul.f32 %v799, %v806
        %v809 = vlaneseq
        %v810 = vshrl.u32 %v809, 7
        %v811 = vsub.s32 0, %v810
        %v812 = vrot.slane %v792, %v811
        %v814 = vmul.f32 %v807, %v812
        %815 = vrot.lane.b32.xlu0 %v812, 120
        %v816 = vpop.permute.xlu0 %815
        %v818 = vadd.f32 %v814, %v816
        %819 = vrot.lane.b32.xlu0 %v812, 112
        %v820 = vpop.permute.xlu0 %819
        %v823 = vsel %vm426, %v818, 0
        %825 = vmatprep.subr.mxu0 0.0
        %826 = vmatpush1.msra.mxu0 %v787
        %827 = vmatprep.subr.mxu0 0.0
        %828 = vmatpush1.msra.mxu0 0.0
        %829 = vmatprep.subr.mxu0 0.0
        %830 = vmatpush1.msra.mxu0 0.0
        %831 = vmatprep.subr.mxu0 0.0
        %832 = vmatpush1.msra.mxu0 0.0
        %833 = vmatprep.subr.mxu0 0.0
        %834 = vmatpush1.msra.mxu0 0.0
        %835 = vmatprep.subr.mxu0 0.0
        %836 = vmatpush1.msra.mxu0 0.0
        %837 = vmatprep.subr.mxu0 0.0
        %838 = vmatpush1.msra.mxu0 0.0
        %839 = vmatprep.subr.mxu0 0.0
        %840 = vmatpush1.msra.mxu0 0.0
        %841 = vmatprep.subr.mxu0 0.0
        %842 = vmatpush1.msra.mxu0 0.0
        %843 = vmatprep.subr.mxu0 0.0
        %844 = vmatpush1.msra.mxu0 0.0
        %845 = vmatprep.subr.mxu0 0.0
        %846 = vmatpush1.msra.mxu0 0.0
        %847 = vmatprep.subr.mxu0 0.0
        %848 = vmatpush1.msra.mxu0 0.0
        %849 = vmatprep.subr.mxu0 0.0
        %850 = vmatpush1.msra.mxu0 0.0
        %851 = vmatprep.subr.mxu0 0.0
        %852 = vmatpush1.msra.mxu0 0.0
        %853 = vmatprep.subr.mxu0 0.0
        %854 = vmatpush1.msra.mxu0 0.0
        %855 = vmatprep.subr.mxu0 0.0
        %856 = vmatpush1.msra.mxu0 0.0
        %857 = vmatprep.subr.mxu0 0.0
        %858 = vmatpush1.msra.mxu0 0.0
        %859 = vmatprep.subr.mxu0 0.0
        %860 = vmatpush1.msra.mxu0 0.0
        %861 = vmatprep.subr.mxu0 0.0
        %862 = vmatpush1.msra.mxu0 0.0
        %863 = vmatprep.subr.mxu0 0.0
        %864 = vmatpush1.msra.mxu0 0.0
        %865 = vmatprep.subr.mxu0 0.0
        %866 = vmatpush1.msra.mxu0 0.0
        %867 = vmatprep.subr.mxu0 0.0
        %868 = vmatpush1.msra.mxu0 0.0
        %869 = vmatprep.subr.mxu0 0.0
        %870 = vmatpush1.msra.mxu0 0.0
        %871 = vmatprep.subr.mxu0 0.0
        %872 = vmatpush1.msra.mxu0 0.0
        %873 = vmatprep.subr.mxu0 0.0
        %874 = vmatpush1.msra.mxu0 0.0
        %875 = vmatprep.subr.mxu0 0.0
        %876 = vmatpush1.msra.mxu0 0.0
        %877 = vmatprep.subr.mxu0 0.0
        %878 = vmatpush1.msra.mxu0 0.0
        %879 = vmatprep.subr.mxu0 0.0
        %880 = vmatpush1.msra.mxu0 0.0
        %881 = vmatprep.subr.mxu0 0.0
        %882 = vmatpush1.msra.mxu0 0.0
        %883 = vmatprep.subr.mxu0 0.0
        %884 = vmatpush1.msra.mxu0 0.0
        %885 = vmatprep.subr.mxu0 0.0
        %886 = vmatpush1.msra.mxu0 0.0
        %887 = vmatprep.subr.mxu0 0.0
        %888 = vmatpush1.msra.mxu0 0.0
        %889 = vmatprep.mubr.f32.mxu0 0.0
        %890 = vmatmul.mubr.f32.gmra.mrb[0].mxu0 %v823
        %v891 = vpop.f32.mrb[0].mxu0
        %v892 = vadd.f32 %v820, %v891
        %v893 = vpop.f32.mrb[0].mxu0
        %894 = vdwg.mxu0
        %896 = vrot.lane.b32.xlu0 %v892, 120
        %v897 = vpop.permute.xlu0 %896
        %v898 = vsel %vm421, %v892, 0
        %v900 = vsel %vm421, %v897, 0
        %902 = vmatprep.subr.mxu0 0.0
        %903 = vmatpush1.xpose.msra.mxu0 %v900
        %904 = vmatprep.subr.mxu0 0.0
        %905 = vmatpush1.xpose.msra.mxu0 0.0
        %906 = vmatprep.subr.mxu0 0.0
        %907 = vmatpush1.xpose.msra.mxu0 0.0
        %908 = vmatprep.subr.mxu0 0.0
        %909 = vmatpush1.xpose.msra.mxu0 0.0
        %910 = vmatprep.subr.mxu0 0.0
        %911 = vmatpush1.xpose.msra.mxu0 0.0
        %912 = vmatprep.subr.mxu0 0.0
        %913 = vmatpush1.xpose.msra.mxu0 0.0
        %914 = vmatprep.subr.mxu0 0.0
        %915 = vmatpush1.xpose.msra.mxu0 0.0
        %916 = vmatprep.subr.mxu0 0.0
        %917 = vmatpush1.xpose.msra.mxu0 0.0
        %918 = vmatprep.subr.mxu0 0.0
        %919 = vmatpush1.xpose.msra.mxu0 0.0
        %920 = vmatprep.subr.mxu0 0.0
        %921 = vmatpush1.xpose.msra.mxu0 0.0
        %922 = vmatprep.subr.mxu0 0.0
        %923 = vmatpush1.xpose.msra.mxu0 0.0
        %924 = vmatprep.subr.mxu0 0.0
        %925 = vmatpush1.xpose.msra.mxu0 0.0
        %926 = vmatprep.subr.mxu0 0.0
        %927 = vmatpush1.xpose.msra.mxu0 0.0
        %928 = vmatprep.subr.mxu0 0.0
        %929 = vmatpush1.xpose.msra.mxu0 0.0
        %930 = vmatprep.subr.mxu0 0.0
        %931 = vmatpush1.xpose.msra.mxu0 0.0
        %932 = vmatprep.subr.mxu0 0.0
        %933 = vmatpush1.xpose.msra.mxu0 0.0
        %934 = vmatprep.subr.mxu0 0.0
        %935 = vmatpush1.xpose.msra.mxu0 0.0
        %936 = vmatprep.subr.mxu0 0.0
        %937 = vmatpush1.xpose.msra.mxu0 0.0
        %938 = vmatprep.subr.mxu0 0.0
        %939 = vmatpush1.xpose.msra.mxu0 0.0
        %940 = vmatprep.subr.mxu0 0.0
        %941 = vmatpush1.xpose.msra.mxu0 0.0
        %942 = vmatprep.subr.mxu0 0.0
        %943 = vmatpush1.xpose.msra.mxu0 0.0
        %944 = vmatprep.subr.mxu0 0.0
        %945 = vmatpush1.xpose.msra.mxu0 0.0
        %946 = vmatprep.subr.mxu0 0.0
        %947 = vmatpush1.xpose.msra.mxu0 0.0
        %948 = vmatprep.subr.mxu0 0.0
        %949 = vmatpush1.xpose.msra.mxu0 0.0
        %950 = vmatprep.subr.mxu0 0.0
        %951 = vmatpush1.xpose.msra.mxu0 0.0
        %952 = vmatprep.subr.mxu0 0.0
        %953 = vmatpush1.xpose.msra.mxu0 0.0
        %954 = vmatprep.subr.mxu0 0.0
        %955 = vmatpush1.xpose.msra.mxu0 0.0
        %956 = vmatprep.subr.mxu0 0.0
        %957 = vmatpush1.xpose.msra.mxu0 0.0
        %958 = vmatprep.subr.mxu0 0.0
        %959 = vmatpush1.xpose.msra.mxu0 0.0
        %960 = vmatprep.subr.mxu0 0.0
        %961 = vmatpush1.xpose.msra.mxu0 0.0
        %962 = vmatprep.subr.mxu0 0.0
        %963 = vmatpush1.xpose.msra.mxu0 0.0
        %964 = vmatprep.subr.mxu0 0.0
        %965 = vmatpush1.xpose.msra.mxu0 0.0
        %966 = vmatprep.mubr.f32.mxu0 0.0
        %967 = vmatmul.mubr.f32.gmra.mrb[0].mxu0 %v898
        %v968 = vpop.f32.mrb[0].mxu0
        %v969 = vadd.f32 0.0, %v968
        %v970 = vpop.f32.mrb[0].mxu0
        %971 = vdwg.mxu0
        %v972 = vmul.f32 %v969, 0.5
        %vm973 = vcmask 46080
        %v974 = vsel %vm973, %v972, -inf
        %975 = vmax.xlane.f32.xlu0 %v974
        %v976 = vpop.xlane.xlu0 %975
        %v977 = vsub.f32 %v972, %v976
        %v978 = vmul.f32 %v977, 1.442695
        %v979 = vpow.pop %v978
        %v980 = vsel %vm973, %v979, 0.0
        %981 = vadd.xlane.f32.xlu0 %v980
        %v982 = vpop.xlane.xlu0 %981
        %v983 = vrcp.pop %v982
        %v984 = vmul.f32 %v979, %v983
        %985 = vrot.lane.b32.xlu0 %v892, 112
        %v986 = vpop.permute.xlu0 %985
        %vm987 = vcmask 48128
        %v989 = vsel %vm987, %v984, 0
        %v991 = vsel %vm290, %v986, 0
        %993 = vmatprep.subr.mxu0 0.0
        %994 = vmatpush1.msra.mxu0 %v991
        %995 = vmatprep.subr.mxu0 0.0
        %996 = vmatpush1.msra.mxu0 0.0
        %997 = vmatprep.subr.mxu0 0.0
        %998 = vmatpush1.msra.mxu0 0.0
        %999 = vmatprep.subr.mxu0 0.0
        %1000 = vmatpush1.msra.mxu0 0.0
        %1001 = vmatprep.subr.mxu0 0.0
        %1002 = vmatpush1.msra.mxu0 0.0
        %1003 = vmatprep.subr.mxu0 0.0
        %1004 = vmatpush1.msra.mxu0 0.0
        %1005 = vmatprep.subr.mxu0 0.0
        %1006 = vmatpush1.msra.mxu0 0.0
        %1007 = vmatprep.subr.mxu0 0.0
        %1008 = vmatpush1.msra.mxu0 0.0
        %1009 = vmatprep.subr.mxu0 0.0
        %1010 = vmatpush1.msra.mxu0 0.0
        %1011 = vmatprep.subr.mxu0 0.0
        %1012 = vmatpush1.msra.mxu0 0.0
        %1013 = vmatprep.subr.mxu0 0.0
        %1014 = vmatpush1.msra.mxu0 0.0
        %1015 = vmatprep.subr.mxu0 0.0
        %1016 = vmatpush1.msra.mxu0 0.0
        %1017 = vmatprep.subr.mxu0 0.0
        %1018 = vmatpush1.msra.mxu0 0.0
        %1019 = vmatprep.subr.mxu0 0.0
        %1020 = vmatpush1.msra.mxu0 0.0
        %1021 = vmatprep.subr.mxu0 0.0
        %1022 = vmatpush1.msra.mxu0 0.0
        %1023 = vmatprep.subr.mxu0 0.0
        %1024 = vmatpush1.msra.mxu0 0.0
        %1025 = vmatprep.subr.mxu0 0.0
        %1026 = vmatpush1.msra.mxu0 0.0
        %1027 = vmatprep.subr.mxu0 0.0
        %1028 = vmatpush1.msra.mxu0 0.0
        %1029 = vmatprep.subr.mxu0 0.0
        %1030 = vmatpush1.msra.mxu0 0.0
        %1031 = vmatprep.subr.mxu0 0.0
        %1032 = vmatpush1.msra.mxu0 0.0
        %1033 = vmatprep.subr.mxu0 0.0
        %1034 = vmatpush1.msra.mxu0 0.0
        %1035 = vmatprep.subr.mxu0 0.0
        %1036 = vmatpush1.msra.mxu0 0.0
        %1037 = vmatprep.subr.mxu0 0.0
        %1038 = vmatpush1.msra.mxu0 0.0
        %1039 = vmatprep.subr.mxu0 0.0
        %1040 = vmatpush1.msra.mxu0 0.0
        %1041 = vmatprep.subr.mxu0 0.0
        %1042 = vmatpush1.msra.mxu0 0.0
        %1043 = vmatprep.subr.mxu0 0.0
        %1044 = vmatpush1.msra.mxu0 0.0
        %1045 = vmatprep.subr.mxu0 0.0
        %1046 = vmatpush1.msra.mxu0 0.0
        %1047 = vmatprep.subr.mxu0 0.0
        %1048 = vmatpush1.msra.mxu0 0.0
        %1049 = vmatprep.subr.mxu0 0.0
        %1050 = vmatpush1.msra.mxu0 0.0
        %1051 = vmatprep.subr.mxu0 0.0
        %1052 = vmatpush1.msra.mxu0 0.0
        %1053 = vmatprep.subr.mxu0 0.0
        %1054 = vmatpush1.msra.mxu0 0.0
        %1055 = vmatprep.subr.mxu0 0.0
        %1056 = vmatpush1.msra.mxu0 0.0
        %1057 = vmatprep.mubr.f32.mxu0 0.0
        %1058 = vmatmul.mubr.f32.gmra.mrb[0].mxu0 %v989
        %v1059 = vpop.f32.mrb[0].mxu0
        %v1060 = vadd.f32 0.0, %v1059
        %v1061 = vpop.f32.mrb[0].mxu0
        %1062 = vdwg.mxu0
        %1063 = vrot.lane.b32.xlu0 %v892, 124
        %v1064 = vpop.permute.xlu0 %1063
        %1065 = vrot.lane.b32.xlu0 %v892, 116
        %v1066 = vpop.permute.xlu0 %1065
        %v1067 = vsel %vm421, %v1064, 0
        %v1069 = vsel %vm421, %v1066, 0
        %1071 = vmatprep.subr.mxu0 0.0
        %1072 = vmatpush1.xpose.msra.mxu0 %v1069
        %1073 = vmatprep.subr.mxu0 0.0
        %1074 = vmatpush1.xpose.msra.mxu0 0.0
        %1075 = vmatprep.subr.mxu0 0.0
        %1076 = vmatpush1.xpose.msra.mxu0 0.0
        %1077 = vmatprep.subr.mxu0 0.0
        %1078 = vmatpush1.xpose.msra.mxu0 0.0
        %1079 = vmatprep.subr.mxu0 0.0
        %1080 = vmatpush1.xpose.msra.mxu0 0.0
        %1081 = vmatprep.subr.mxu0 0.0
        %1082 = vmatpush1.xpose.msra.mxu0 0.0
        %1083 = vmatprep.subr.mxu0 0.0
        %1084 = vmatpush1.xpose.msra.mxu0 0.0
        %1085 = vmatprep.subr.mxu0 0.0
        %1086 = vmatpush1.xpose.msra.mxu0 0.0
        %1087 = vmatprep.subr.mxu0 0.0
        %1088 = vmatpush1.xpose.msra.mxu0 0.0
        %1089 = vmatprep.subr.mxu0 0.0
        %1090 = vmatpush1.xpose.msra.mxu0 0.0
        %1091 = vmatprep.subr.mxu0 0.0
        %1092 = vmatpush1.xpose.msra.mxu0 0.0
        %1093 = vmatprep.subr.mxu0 0.0
        %1094 = vmatpush1.xpose.msra.mxu0 0.0
        %1095 = vmatprep.subr.mxu0 0.0
        %1096 = vmatpush1.xpose.msra.mxu0 0.0
        %1097 = vmatprep.subr.mxu0 0.0
        %1098 = vmatpush1.xpose.msra.mxu0 0.0
        %1099 = vmatprep.subr.mxu0 0.0
        %1100 = vmatpush1.xpose.msra.mxu0 0.0
        %1101 = vmatprep.subr.mxu0 0.0
        %1102 = vmatpush1.xpose.msra.mxu0 0.0
        %1103 = vmatprep.subr.mxu0 0.0
        %1104 = vmatpush1.xpose.msra.mxu0 0.0
        %1105 = vmatprep.subr.mxu0 0.0
        %1106 = vmatpush1.xpose.msra.mxu0 0.0
        %1107 = vmatprep.subr.mxu0 0.0
        %1108 = vmatpush1.xpose.msra.mxu0 0.0
        %1109 = vmatprep.subr.mxu0 0.0
        %1110 = vmatpush1.xpose.msra.mxu0 0.0
        %1111 = vmatprep.subr.mxu0 0.0
        %1112 = vmatpush1.xpose.msra.mxu0 0.0
        %1113 = vmatprep.subr.mxu0 0.0
        %1114 = vmatpush1.xpose.msra.mxu0 0.0
        %1115 = vmatprep.subr.mxu0 0.0
        %1116 = vmatpush1.xpose.msra.mxu0 0.0
        %1117 = vmatprep.subr.mxu0 0.0
        %1118 = vmatpush1.xpose.msra.mxu0 0.0
        %1119 = vmatprep.subr.mxu0 0.0
        %1120 = vmatpush1.xpose.msra.mxu0 0.0
        %1121 = vmatprep.subr.mxu0 0.0
        %1122 = vmatpush1.xpose.msra.mxu0 0.0
        %1123 = vmatprep.subr.mxu0 0.0
        %1124 = vmatpush1.xpose.msra.mxu0 0.0
        %1125 = vmatprep.subr.mxu0 0.0
        %1126 = vmatpush1.xpose.msra.mxu0 0.0
        %1127 = vmatprep.subr.mxu0 0.0
        %1128 = vmatpush1.xpose.msra.mxu0 0.0
        %1129 = vmatprep.subr.mxu0 0.0
        %1130 = vmatpush1.xpose.msra.mxu0 0.0
        %1131 = vmatprep.subr.mxu0 0.0
        %1132 = vmatpush1.xpose.msra.mxu0 0.0
        %1133 = vmatprep.subr.mxu0 0.0
        %1134 = vmatpush1.xpose.msra.mxu0 0.0
        %1135 = vmatprep.mubr.f32.mxu0 0.0
        %1136 = vmatmul.mubr.f32.gmra.mrb[0].mxu0 %v1067
        %v1137 = vpop.f32.mrb[0].mxu0
        %v1138 = vadd.f32 0.0, %v1137
        %v1139 = vpop.f32.mrb[0].mxu0
        %1140 = vdwg.mxu0
        %v1141 = vmul.f32 %v1138, 0.5
        %v1142 = vsel %vm973, %v1141, -inf
        %1143 = vmax.xlane.f32.xlu0 %v1142
        %v1144 = vpop.xlane.xlu0 %1143
        %v1145 = vsub.f32 %v1141, %v1144
        %v1146 = vmul.f32 %v1145, 1.442695
        %v1147 = vpow.pop %v1146
        %v1148 = vsel %vm973, %v1147, 0.0
        %1149 = vadd.xlane.f32.xlu0 %v1148
        %v1150 = vpop.xlane.xlu0 %1149
        %v1151 = vrcp.pop %v1150
        %v1152 = vmul.f32 %v1147, %v1151
        %1153 = vrot.lane.b32.xlu0 %v892, 108
        %v1154 = vpop.permute.xlu0 %1153
        %v1156 = vsel %vm987, %v1152, 0
        %v1158 = vsel %vm290, %v1154, 0
        %1160 = vmatprep.subr.mxu0 0.0
        %1161 = vmatpush1.msra.mxu0 %v1158
        %1162 = vmatprep.subr.mxu0 0.0
        %1163 = vmatpush1.msra.mxu0 0.0
        %1164 = vmatprep.subr.mxu0 0.0
        %1165 = vmatpush1.msra.mxu0 0.0
        %1166 = vmatprep.subr.mxu0 0.0
        %1167 = vmatpush1.msra.mxu0 0.0
        %1168 = vmatprep.subr.mxu0 0.0
        %1169 = vmatpush1.msra.mxu0 0.0
        %1170 = vmatprep.subr.mxu0 0.0
        %1171 = vmatpush1.msra.mxu0 0.0
        %1172 = vmatprep.subr.mxu0 0.0
        %1173 = vmatpush1.msra.mxu0 0.0
        %1174 = vmatprep.subr.mxu0 0.0
        %1175 = vmatpush1.msra.mxu0 0.0
        %1176 = vmatprep.subr.mxu0 0.0
        %1177 = vmatpush1.msra.mxu0 0.0
        %1178 = vmatprep.subr.mxu0 0.0
        %1179 = vmatpush1.msra.mxu0 0.0
        %1180 = vmatprep.subr.mxu0 0.0
        %1181 = vmatpush1.msra.mxu0 0.0
        %1182 = vmatprep.subr.mxu0 0.0
        %1183 = vmatpush1.msra.mxu0 0.0
        %1184 = vmatprep.subr.mxu0 0.0
        %1185 = vmatpush1.msra.mxu0 0.0
        %1186 = vmatprep.subr.mxu0 0.0
        %1187 = vmatpush1.msra.mxu0 0.0
        %1188 = vmatprep.subr.mxu0 0.0
        %1189 = vmatpush1.msra.mxu0 0.0
        %1190 = vmatprep.subr.mxu0 0.0
        %1191 = vmatpush1.msra.mxu0 0.0
        %1192 = vmatprep.subr.mxu0 0.0
        %1193 = vmatpush1.msra.mxu0 0.0
        %1194 = vmatprep.subr.mxu0 0.0
        %1195 = vmatpush1.msra.mxu0 0.0
        %1196 = vmatprep.subr.mxu0 0.0
        %1197 = vmatpush1.msra.mxu0 0.0
        %1198 = vmatprep.subr.mxu0 0.0
        %1199 = vmatpush1.msra.mxu0 0.0
        %1200 = vmatprep.subr.mxu0 0.0
        %1201 = vmatpush1.msra.mxu0 0.0
        %1202 = vmatprep.subr.mxu0 0.0
        %1203 = vmatpush1.msra.mxu0 0.0
        %1204 = vmatprep.subr.mxu0 0.0
        %1205 = vmatpush1.msra.mxu0 0.0
        %1206 = vmatprep.subr.mxu0 0.0
        %1207 = vmatpush1.msra.mxu0 0.0
        %1208 = vmatprep.subr.mxu0 0.0
        %1209 = vmatpush1.msra.mxu0 0.0
        %1210 = vmatprep.subr.mxu0 0.0
        %1211 = vmatpush1.msra.mxu0 0.0
        %1212 = vmatprep.subr.mxu0 0.0
        %1213 = vmatpush1.msra.mxu0 0.0
        %1214 = vmatprep.subr.mxu0 0.0
        %1215 = vmatpush1.msra.mxu0 0.0
        %1216 = vmatprep.subr.mxu0 0.0
        %1217 = vmatpush1.msra.mxu0 0.0
        %1218 = vmatprep.subr.mxu0 0.0
        %1219 = vmatpush1.msra.mxu0 0.0
        %1220 = vmatprep.subr.mxu0 0.0
        %1221 = vmatpush1.msra.mxu0 0.0
        %1222 = vmatprep.subr.mxu0 0.0
        %1223 = vmatpush1.msra.mxu0 0.0
        %1224 = vmatprep.mubr.f32.mxu0 0.0
        %1225 = vmatmul.mubr.f32.gmra.mrb[0].mxu0 %v1156
        %v1226 = vpop.f32.mrb[0].mxu0
        %v1227 = vadd.f32 0.0, %v1226
        %v1228 = vpop.f32.mrb[0].mxu0
        %1229 = vdwg.mxu0
        %1231 = vrot.lane.b32.xlu0 %v1227, 4
        %v1232 = vpop.permute.xlu0 %1231
        %v1234 = vsel %vm421, %v1060, %v1232
        %1236 = vrot.lane.b32.xlu0 %v787, 104
        %v1237 = vpop.permute.xlu0 %1236
        %1239 = vrot.lane.b32.xlu0 %v812, 88
        %v1240 = vpop.permute.xlu0 %1239
        %v1243 = vsel %vm426, %v1234, 0
        %1245 = vmatprep.subr.mxu0 0.0
        %1246 = vmatpush1.msra.mxu0 %v1237
        %1247 = vmatprep.subr.mxu0 0.0
        %1248 = vmatpush1.msra.mxu0 0.0
        %1249 = vmatprep.subr.mxu0 0.0
        %1250 = vmatpush1.msra.mxu0 0.0
        %1251 = vmatprep.subr.mxu0 0.0
        %1252 = vmatpush1.msra.mxu0 0.0
        %1253 = vmatprep.subr.mxu0 0.0
        %1254 = vmatpush1.msra.mxu0 0.0
        %1255 = vmatprep.subr.mxu0 0.0
        %1256 = vmatpush1.msra.mxu0 0.0
        %1257 = vmatprep.subr.mxu0 0.0
        %1258 = vmatpush1.msra.mxu0 0.0
        %1259 = vmatprep.subr.mxu0 0.0
        %1260 = vmatpush1.msra.mxu0 0.0
        %1261 = vmatprep.subr.mxu0 0.0
        %1262 = vmatpush1.msra.mxu0 0.0
        %1263 = vmatprep.subr.mxu0 0.0
        %1264 = vmatpush1.msra.mxu0 0.0
        %1265 = vmatprep.subr.mxu0 0.0
        %1266 = vmatpush1.msra.mxu0 0.0
        %1267 = vmatprep.subr.mxu0 0.0
        %1268 = vmatpush1.msra.mxu0 0.0
        %1269 = vmatprep.subr.mxu0 0.0
        %1270 = vmatpush1.msra.mxu0 0.0
        %1271 = vmatprep.subr.mxu0 0.0
        %1272 = vmatpush1.msra.mxu0 0.0
        %1273 = vmatprep.subr.mxu0 0.0
        %1274 = vmatpush1.msra.mxu0 0.0
        %1275 = vmatprep.subr.mxu0 0.0
        %1276 = vmatpush1.msra.mxu0 0.0
        %1277 = vmatprep.subr.mxu0 0.0
        %1278 = vmatpush1.msra.mxu0 0.0
        %1279 = vmatprep.subr.mxu0 0.0
        %1280 = vmatpush1.msra.mxu0 0.0
        %1281 = vmatprep.subr.mxu0 0.0
        %1282 = vmatpush1.msra.mxu0 0.0
        %1283 = vmatprep.subr.mxu0 0.0
        %1284 = vmatpush1.msra.mxu0 0.0
        %1285 = vmatprep.subr.mxu0 0.0
        %1286 = vmatpush1.msra.mxu0 0.0
        %1287 = vmatprep.subr.mxu0 0.0
        %1288 = vmatpush1.msra.mxu0 0.0
        %1289 = vmatprep.subr.mxu0 0.0
        %1290 = vmatpush1.msra.mxu0 0.0
        %1291 = vmatprep.subr.mxu0 0.0
        %1292 = vmatpush1.msra.mxu0 0.0
        %1293 = vmatprep.subr.mxu0 0.0
        %1294 = vmatpush1.msra.mxu0 0.0
        %1295 = vmatprep.subr.mxu0 0.0
        %1296 = vmatpush1.msra.mxu0 0.0
        %1297 = vmatprep.subr.mxu0 0.0
        %1298 = vmatpush1.msra.mxu0 0.0
        %1299 = vmatprep.subr.mxu0 0.0
        %1300 = vmatpush1.msra.mxu0 0.0
        %1301 = vmatprep.subr.mxu0 0.0
        %1302 = vmatpush1.msra.mxu0 0.0
        %1303 = vmatprep.subr.mxu0 0.0
        %1304 = vmatpush1.msra.mxu0 0.0
        %1305 = vmatprep.subr.mxu0 0.0
        %1306 = vmatpush1.msra.mxu0 0.0
        %1307 = vmatprep.subr.mxu0 0.0
        %1308 = vmatpush1.msra.mxu0 0.0
        %1309 = vmatprep.mubr.f32.mxu0 0.0
        %1310 = vmatmul.mubr.f32.gmra.mrb[0].mxu0 %v1243
        %v1311 = vpop.f32.mrb[0].mxu0
        %v1312 = vadd.f32 %v1240, %v1311
        %v1313 = vpop.f32.mrb[0].mxu0
        %1314 = vdwg.mxu0
        %v1315 = vadd.f32 %v786, %v1312
        %v1317 = vrot.slane %v1315, 5
        %v1319 = vsel %vm251, 0.0, %v1317
        %v1321 = vrot.slane %v1319, 1
        %1322 = vrot.lane.b32.xlu0 %v1321, 8
        %v1323 = vpop.permute.xlu0 %1322
        %v1325 = vrot.slane %v1319, 2
        %1326 = vrot.lane.b32.xlu0 %v1325, 16
        %v1327 = vpop.permute.xlu0 %1326
        %v1329 = vrot.slane %v1319, 3
        %v1330 = vrot.slane %v1317, 3
        %v1331 = vsel %vm312, %v1329, %v1330
        %1332 = vrot.lane.b32.xlu0 %v1331, 24
        %v1333 = vpop.permute.xlu0 %1332
        %v1335 = vsel %vm426, %v1319, %v1323
        %v1336 = vsel %vm436, %v1335, %v1327
        %v1337 = vsel %vm446, %v1336, %v1333
        %v1339 = vsel %vm456, %v1337, 0
        %1341 = vmatprep.subr.mxu0 0.0
        %1342 = vmatpush1.msra.mxu0 %v788
        %1343 = vmatprep.subr.mxu0 0.0
        %1344 = vmatpush1.msra.mxu0 %v789
        %1345 = vmatprep.subr.mxu0 0.0
        %1346 = vmatpush1.msra.mxu0 %v790
        %1347 = vmatprep.subr.mxu0 0.0
        %1348 = vmatpush1.msra.mxu0 %v791
        %1349 = vmatprep.subr.mxu0 0.0
        %1350 = vmatpush1.msra.mxu0 0.0
        %1351 = vmatprep.subr.mxu0 0.0
        %1352 = vmatpush1.msra.mxu0 0.0
        %1353 = vmatprep.subr.mxu0 0.0
        %1354 = vmatpush1.msra.mxu0 0.0
        %1355 = vmatprep.subr.mxu0 0.0
        %1356 = vmatpush1.msra.mxu0 0.0
        %1357 = vmatprep.subr.mxu0 0.0
        %1358 = vmatpush1.msra.mxu0 0.0
        %1359 = vmatprep.subr.mxu0 0.0
        %1360 = vmatpush1.msra.mxu0 0.0
        %1361 = vmatprep.subr.mxu0 0.0
        %1362 = vmatpush1.msra.mxu0 0.0
        %1363 = vmatprep.subr.mxu0 0.0
        %1364 = vmatpush1.msra.mxu0 0.0
        %1365 = vmatprep.subr.mxu0 0.0
        %1366 = vmatpush1.msra.mxu0 0.0
        %1367 = vmatprep.subr.mxu0 0.0
        %1368 = vmatpush1.msra.mxu0 0.0
        %1369 = vmatprep.subr.mxu0 0.0
        %1370 = vmatpush1.msra.mxu0 0.0
        %1371 = vmatprep.subr.mxu0 0.0
        %1372 = vmatpush1.msra.mxu0 0.0
        %1373 = vmatprep.subr.mxu0 0.0
        %1374 = vmatpush1.msra.mxu0 0.0
        %1375 = vmatprep.subr.mxu0 0.0
        %1376 = vmatpush1.msra.mxu0 0.0
        %1377 = vmatprep.subr.mxu0 0.0
        %1378 = vmatpush1.msra.mxu0 0.0
        %1379 = vmatprep.subr.mxu0 0.0
        %1380 = vmatpush1.msra.mxu0 0.0
        %1381 = vmatprep.subr.mxu0 0.0
        %1382 = vmatpush1.msra.mxu0 0.0
        %1383 = vmatprep.subr.mxu0 0.0
        %1384 = vmatpush1.msra.mxu0 0.0
        %1385 = vmatprep.subr.mxu0 0.0
        %1386 = vmatpush1.msra.mxu0 0.0
        %1387 = vmatprep.subr.mxu0 0.0
        %1388 = vmatpush1.msra.mxu0 0.0
        %1389 = vmatprep.subr.mxu0 0.0
        %1390 = vmatpush1.msra.mxu0 0.0
        %1391 = vmatprep.subr.mxu0 0.0
        %1392 = vmatpush1.msra.mxu0 0.0
        %1393 = vmatprep.subr.mxu0 0.0
        %1394 = vmatpush1.msra.mxu0 0.0
        %1395 = vmatprep.subr.mxu0 0.0
        %1396 = vmatpush1.msra.mxu0 0.0
        %1397 = vmatprep.subr.mxu0 0.0
        %1398 = vmatpush1.msra.mxu0 0.0
        %1399 = vmatprep.subr.mxu0 0.0
        %1400 = vmatpush1.msra.mxu0 0.0
        %1401 = vmatprep.subr.mxu0 0.0
        %1402 = vmatpush1.msra.mxu0 0.0
        %1403 = vmatprep.subr.mxu0 0.0
        %1404 = vmatpush1.msra.mxu0 0.0
        %1405 = vmatprep.mubr.f32.mxu0 0.0
        %1406 = vmatmul.mubr.f32.gmra.mrb[0].mxu0 %v1339
        %v1407 = vpop.f32.mrb[0].mxu0
        %v1408 = vadd.f32 0.0, %v1407
        %v1409 = vpop.f32.mrb[0].mxu0
        %1410 = vdwg.mxu0
        %v1411 = vlaneseq
        %v1412 = vshrl.u32 %v1411, 7
        %v1413 = vsub.s32 0, %v1412
        %v1414 = vrot.slane %v788, %v1413
        %1416 = vrot.lane.b32.xlu0 %v1414, 96
        %v1417 = vpop.permute.xlu0 %1416
        %v1419 = vmul.f32 %v1408, %v1417
        %1420 = vrot.lane.b32.xlu0 %v1414, 88
        %v1421 = vpop.permute.xlu0 %1420
        %v1423 = vadd.f32 %v1419, %v1421
        %vm1424 = vcmp.gt.f32.partialorder %v1423, 0.0
        %v1425 = vmin.f32 %v1423, 0.0
        %v1426 = vmul.f32 %v1425, 1.442695
        %v1427 = vpow.pop %v1426
        %v1428 = vsub.f32 %v1427, 1.0
        %v1429 = vsel %vm1424, %v1423, %v1428
        %v1431 = vrot.slane %v1429, 5
        %v1433 = vsel %vm251, 0.0, %v1431
        %v1435 = vrot.slane %v1433, 1
        %1436 = vrot.lane.b32.xlu0 %v1435, 8
        %v1437 = vpop.permute.xlu0 %1436
        %v1439 = vrot.slane %v1433, 2
        %1440 = vrot.lane.b32.xlu0 %v1439, 16
        %v1441 = vpop.permute.xlu0 %1440
        %v1443 = vrot.slane %v1433, 3
        %v1444 = vrot.slane %v1431, 3
        %v1445 = vsel %vm312, %v1443, %v1444
        %1446 = vrot.lane.b32.xlu0 %v1445, 24
        %v1447 = vpop.permute.xlu0 %1446
        %v1449 = vsel %vm426, %v1433, %v1437
        %v1450 = vsel %vm436, %v1449, %v1441
        %v1451 = vsel %vm446, %v1450, %v1447
        %1456 = vrot.lane.b32.xlu0 %v788, 120
        %v1457 = vpop.permute.xlu0 %1456
        %1458 = vrot.lane.b32.xlu0 %v789, 120
        %v1459 = vpop.permute.xlu0 %1458
        %1460 = vrot.lane.b32.xlu0 %v790, 120
        %v1461 = vpop.permute.xlu0 %1460
        %1462 = vrot.lane.b32.xlu0 %v791, 120
        %v1463 = vpop.permute.xlu0 %1462
        %v1469 = vsel %vm456, %v1451, 0
        %1471 = vmatprep.subr.mxu0 0.0
        %1472 = vmatpush1.msra.mxu0 %v1457
        %1473 = vmatprep.subr.mxu0 0.0
        %1474 = vmatpush1.msra.mxu0 %v1459
        %1475 = vmatprep.subr.mxu0 0.0
        %1476 = vmatpush1.msra.mxu0 %v1461
        %1477 = vmatprep.subr.mxu0 0.0
        %1478 = vmatpush1.msra.mxu0 %v1463
        %1479 = vmatprep.subr.mxu0 0.0
        %1480 = vmatpush1.msra.mxu0 0.0
        %1481 = vmatprep.subr.mxu0 0.0
        %1482 = vmatpush1.msra.mxu0 0.0
        %1483 = vmatprep.subr.mxu0 0.0
        %1484 = vmatpush1.msra.mxu0 0.0
        %1485 = vmatprep.subr.mxu0 0.0
        %1486 = vmatpush1.msra.mxu0 0.0
        %1487 = vmatprep.subr.mxu0 0.0
        %1488 = vmatpush1.msra.mxu0 0.0
        %1489 = vmatprep.subr.mxu0 0.0
        %1490 = vmatpush1.msra.mxu0 0.0
        %1491 = vmatprep.subr.mxu0 0.0
        %1492 = vmatpush1.msra.mxu0 0.0
        %1493 = vmatprep.subr.mxu0 0.0
        %1494 = vmatpush1.msra.mxu0 0.0
        %1495 = vmatprep.subr.mxu0 0.0
        %1496 = vmatpush1.msra.mxu0 0.0
        %1497 = vmatprep.subr.mxu0 0.0
        %1498 = vmatpush1.msra.mxu0 0.0
        %1499 = vmatprep.subr.mxu0 0.0
        %1500 = vmatpush1.msra.mxu0 0.0
        %1501 = vmatprep.subr.mxu0 0.0
        %1502 = vmatpush1.msra.mxu0 0.0
        %1503 = vmatprep.subr.mxu0 0.0
        %1504 = vmatpush1.msra.mxu0 0.0
        %1505 = vmatprep.subr.mxu0 0.0
        %1506 = vmatpush1.msra.mxu0 0.0
        %1507 = vmatprep.subr.mxu0 0.0
        %1508 = vmatpush1.msra.mxu0 0.0
        %1509 = vmatprep.subr.mxu0 0.0
        %1510 = vmatpush1.msra.mxu0 0.0
        %1511 = vmatprep.subr.mxu0 0.0
        %1512 = vmatpush1.msra.mxu0 0.0
        %1513 = vmatprep.subr.mxu0 0.0
        %1514 = vmatpush1.msra.mxu0 0.0
        %1515 = vmatprep.subr.mxu0 0.0
        %1516 = vmatpush1.msra.mxu0 0.0
        %1517 = vmatprep.subr.mxu0 0.0
        %1518 = vmatpush1.msra.mxu0 0.0
        %1519 = vmatprep.subr.mxu0 0.0
        %1520 = vmatpush1.msra.mxu0 0.0
        %1521 = vmatprep.subr.mxu0 0.0
        %1522 = vmatpush1.msra.mxu0 0.0
        %1523 = vmatprep.subr.mxu0 0.0
        %1524 = vmatpush1.msra.mxu0 0.0
        %1525 = vmatprep.subr.mxu0 0.0
        %1526 = vmatpush1.msra.mxu0 0.0
        %1527 = vmatprep.subr.mxu0 0.0
        %1528 = vmatpush1.msra.mxu0 0.0
        %1529 = vmatprep.subr.mxu0 0.0
        %1530 = vmatpush1.msra.mxu0 0.0
        %1531 = vmatprep.subr.mxu0 0.0
        %1532 = vmatpush1.msra.mxu0 0.0
        %1533 = vmatprep.subr.mxu0 0.0
        %1534 = vmatpush1.msra.mxu0 0.0
        %1535 = vmatprep.mubr.f32.mxu0 0.0
        %1536 = vmatmul.mubr.f32.gmra.mrb[0].mxu0 %v1469
        %v1537 = vpop.f32.mrb[0].mxu0
        %v1538 = vadd.f32 0.0, %v1537
        %v1539 = vpop.f32.mrb[0].mxu0
        %1540 = vdwg.mxu0
        %v1541 = vlaneseq
        %v1542 = vshrl.u32 %v1541, 7
        %v1543 = vsub.s32 1, %v1542
        %v1544 = vrot.slane %v788, %v1543
        %1546 = vrot.lane.b32.xlu0 %v1544, 96
        %v1547 = vpop.permute.xlu0 %1546
        %v1549 = vmul.f32 %v1538, %v1547
        %1550 = vrot.lane.b32.xlu0 %v1544, 88
        %v1551 = vpop.permute.xlu0 %1550
        %v1553 = vadd.f32 %v1549, %v1551
        %vm1554 = vcmp.gt.f32.partialorder %v1553, 0.0
        %v1555 = vmin.f32 %v1553, 0.0
        %v1556 = vmul.f32 %v1555, 1.442695
        %v1557 = vpow.pop %v1556
        %v1558 = vsub.f32 %v1557, 1.0
        %v1559 = vsel %vm1554, %v1553, %v1558
        %v1560 = vadd.f32 %v1315, %v1559
        %vm1561 = vcmp.gt.f32.partialorder %v1560, 0.0
        %v1562 = vmin.f32 %v1560, 0.0
        %v1563 = vmul.f32 %v1562, 1.442695
        %v1564 = vpow.pop %v1563
        %v1565 = vsub.f32 %v1564, 1.0
        %v1566 = vsel %vm1561, %v1560, %v1565
        %v1568 = vrot.slane %v1566, 2
        %v1570 = vsel %vm290, 0.0, %v1568
        %v1572 = vrot.slane %v1570, 2
        %1573 = vrot.lane.b32.xlu0 %v1572, 8
        %v1574 = vpop.permute.xlu0 %1573
        %v1576 = vrot.slane %v1570, 4
        %v1577 = vrot.slane %v1568, 4
        %v1578 = vsel %vm334, %v1576, %v1577
        %1579 = vrot.lane.b32.xlu0 %v1578, 16
        %v1580 = vpop.permute.xlu0 %1579
        %v1582 = vrot.slane %v1570, 6
        %v1583 = vrot.slane %v1568, 6
        %v1584 = vsel %vm377, %v1582, %v1583
        %1585 = vrot.lane.b32.xlu0 %v1584, 24
        %v1586 = vpop.permute.xlu0 %1585
        %v1588 = vsel %vm426, %v1570, %v1574
        %v1589 = vsel %vm436, %v1588, %v1580
        %v1590 = vsel %vm446, %v1589, %v1586
        %1591 = vrot.lane.b32.xlu0 %v788, 112
        %v1592 = vpop.permute.xlu0 %1591
        %1593 = vrot.lane.b32.xlu0 %v789, 112
        %v1594 = vpop.permute.xlu0 %1593
        %1595 = vrot.lane.b32.xlu0 %v790, 112
        %v1596 = vpop.permute.xlu0 %1595
        %1597 = vrot.lane.b32.xlu0 %v791, 112
        %v1598 = vpop.permute.xlu0 %1597
        %v1604 = vsel %vm456, %v1590, 0
        %1606 = vmatprep.subr.mxu0 0.0
        %1607 = vmatpush1.msra.mxu0 %v1592
        %1608 = vmatprep.subr.mxu0 0.0
        %1609 = vmatpush1.msra.mxu0 %v1594
        %1610 = vmatprep.subr.mxu0 0.0
        %1611 = vmatpush1.msra.mxu0 %v1596
        %1612 = vmatprep.subr.mxu0 0.0
        %1613 = vmatpush1.msra.mxu0 %v1598
        %1614 = vmatprep.subr.mxu0 0.0
        %1615 = vmatpush1.msra.mxu0 0.0
        %1616 = vmatprep.subr.mxu0 0.0
        %1617 = vmatpush1.msra.mxu0 0.0
        %1618 = vmatprep.subr.mxu0 0.0
        %1619 = vmatpush1.msra.mxu0 0.0
        %1620 = vmatprep.subr.mxu0 0.0
        %1621 = vmatpush1.msra.mxu0 0.0
        %1622 = vmatprep.subr.mxu0 0.0
        %1623 = vmatpush1.msra.mxu0 0.0
        %1624 = vmatprep.subr.mxu0 0.0
        %1625 = vmatpush1.msra.mxu0 0.0
        %1626 = vmatprep.subr.mxu0 0.0
        %1627 = vmatpush1.msra.mxu0 0.0
        %1628 = vmatprep.subr.mxu0 0.0
        %1629 = vmatpush1.msra.mxu0 0.0
        %1630 = vmatprep.subr.mxu0 0.0
        %1631 = vmatpush1.msra.mxu0 0.0
        %1632 = vmatprep.subr.mxu0 0.0
        %1633 = vmatpush1.msra.mxu0 0.0
        %1634 = vmatprep.subr.mxu0 0.0
        %1635 = vmatpush1.msra.mxu0 0.0
        %1636 = vmatprep.subr.mxu0 0.0
        %1637 = vmatpush1.msra.mxu0 0.0
        %1638 = vmatprep.subr.mxu0 0.0
        %1639 = vmatpush1.msra.mxu0 0.0
        %1640 = vmatprep.subr.mxu0 0.0
        %1641 = vmatpush1.msra.mxu0 0.0
        %1642 = vmatprep.subr.mxu0 0.0
        %1643 = vmatpush1.msra.mxu0 0.0
        %1644 = vmatprep.subr.mxu0 0.0
        %1645 = vmatpush1.msra.mxu0 0.0
        %1646 = vmatprep.subr.mxu0 0.0
        %1647 = vmatpush1.msra.mxu0 0.0
        %1648 = vmatprep.subr.mxu0 0.0
        %1649 = vmatpush1.msra.mxu0 0.0
        %1650 = vmatprep.subr.mxu0 0.0
        %1651 = vmatpush1.msra.mxu0 0.0
        %1652 = vmatprep.subr.mxu0 0.0
        %1653 = vmatpush1.msra.mxu0 0.0
        %1654 = vmatprep.subr.mxu0 0.0
        %1655 = vmatpush1.msra.mxu0 0.0
        %1656 = vmatprep.subr.mxu0 0.0
        %1657 = vmatpush1.msra.mxu0 0.0
        %1658 = vmatprep.subr.mxu0 0.0
        %1659 = vmatpush1.msra.mxu0 0.0
        %1660 = vmatprep.subr.mxu0 0.0
        %1661 = vmatpush1.msra.mxu0 0.0
        %1662 = vmatprep.subr.mxu0 0.0
        %1663 = vmatpush1.msra.mxu0 0.0
        %1664 = vmatprep.subr.mxu0 0.0
        %1665 = vmatpush1.msra.mxu0 0.0
        %1666 = vmatprep.subr.mxu0 0.0
        %1667 = vmatpush1.msra.mxu0 0.0
        %1668 = vmatprep.subr.mxu0 0.0
        %1669 = vmatpush1.msra.mxu0 0.0
        %1670 = vmatprep.mubr.f32.mxu0 0.0
        %1671 = vmatmul.mubr.f32.gmra.mrb[0].mxu0 %v1604
        %v1672 = vpop.f32.mrb[0].mxu0
        %v1673 = vadd.f32 0.0, %v1672
        %v1674 = vpop.f32.mrb[0].mxu0
        %1675 = vdwg.mxu0
        %v1676 = vlaneseq
        %v1677 = vshrl.u32 %v1676, 7
        %v1678 = vsub.s32 2, %v1677
        %v1679 = vrot.slane %v788, %v1678
        %1681 = vrot.lane.b32.xlu0 %v1679, 96
        %v1682 = vpop.permute.xlu0 %1681
        %v1684 = vmul.f32 %v1673, %v1682
        %1685 = vrot.lane.b32.xlu0 %v1679, 88
        %v1686 = vpop.permute.xlu0 %1685
        %v1688 = vadd.f32 %v1684, %v1686
        %vm1689 = vcmp.gt.f32.partialorder %v1688, 0.0
        %v1690 = vmin.f32 %v1688, 0.0
        %v1691 = vmul.f32 %v1690, 1.442695
        %v1692 = vpow.pop %v1691
        %v1693 = vsub.f32 %v1692, 1.0
        %v1694 = vsel %vm1689, %v1688, %v1693
        %v1696 = vrot.slane %v1694, 2
        %v1698 = vsel %vm290, 0.0, %v1696
        %v1700 = vrot.slane %v1698, 2
        %1701 = vrot.lane.b32.xlu0 %v1700, 8
        %v1702 = vpop.permute.xlu0 %1701
        %v1704 = vrot.slane %v1698, 4
        %v1705 = vrot.slane %v1696, 4
        %v1706 = vsel %vm334, %v1704, %v1705
        %1707 = vrot.lane.b32.xlu0 %v1706, 16
        %v1708 = vpop.permute.xlu0 %1707
        %v1710 = vrot.slane %v1698, 6
        %v1711 = vrot.slane %v1696, 6
        %v1712 = vsel %vm377, %v1710, %v1711
        %1713 = vrot.lane.b32.xlu0 %v1712, 24
        %v1714 = vpop.permute.xlu0 %1713
        %v1716 = vsel %vm426, %v1698, %v1702
        %v1717 = vsel %vm436, %v1716, %v1708
        %v1718 = vsel %vm446, %v1717, %v1714
        %1719 = vrot.lane.b32.xlu0 %v788, 104
        %v1720 = vpop.permute.xlu0 %1719
        %1721 = vrot.lane.b32.xlu0 %v789, 104
        %v1722 = vpop.permute.xlu0 %1721
        %1723 = vrot.lane.b32.xlu0 %v790, 104
        %v1724 = vpop.permute.xlu0 %1723
        %1725 = vrot.lane.b32.xlu0 %v791, 104
        %v1726 = vpop.permute.xlu0 %1725
        %v1732 = vsel %vm456, %v1718, 0
        %1734 = vmatprep.subr.mxu0 0.0
        %1735 = vmatpush1.msra.mxu0 %v1720
        %1736 = vmatprep.subr.mxu0 0.0
        %1737 = vmatpush1.msra.mxu0 %v1722
        %1738 = vmatprep.subr.mxu0 0.0
        %1739 = vmatpush1.msra.mxu0 %v1724
        %1740 = vmatprep.subr.mxu0 0.0
        %1741 = vmatpush1.msra.mxu0 %v1726
        %1742 = vmatprep.subr.mxu0 0.0
        %1743 = vmatpush1.msra.mxu0 0.0
        %1744 = vmatprep.subr.mxu0 0.0
        %1745 = vmatpush1.msra.mxu0 0.0
        %1746 = vmatprep.subr.mxu0 0.0
        %1747 = vmatpush1.msra.mxu0 0.0
        %1748 = vmatprep.subr.mxu0 0.0
        %1749 = vmatpush1.msra.mxu0 0.0
        %1750 = vmatprep.subr.mxu0 0.0
        %1751 = vmatpush1.msra.mxu0 0.0
        %1752 = vmatprep.subr.mxu0 0.0
        %1753 = vmatpush1.msra.mxu0 0.0
        %1754 = vmatprep.subr.mxu0 0.0
        %1755 = vmatpush1.msra.mxu0 0.0
        %1756 = vmatprep.subr.mxu0 0.0
        %1757 = vmatpush1.msra.mxu0 0.0
        %1758 = vmatprep.subr.mxu0 0.0
        %1759 = vmatpush1.msra.mxu0 0.0
        %1760 = vmatprep.subr.mxu0 0.0
        %1761 = vmatpush1.msra.mxu0 0.0
        %1762 = vmatprep.subr.mxu0 0.0
        %1763 = vmatpush1.msra.mxu0 0.0
        %1764 = vmatprep.subr.mxu0 0.0
        %1765 = vmatpush1.msra.mxu0 0.0
        %1766 = vmatprep.subr.mxu0 0.0
        %1767 = vmatpush1.msra.mxu0 0.0
        %1768 = vmatprep.subr.mxu0 0.0
        %1769 = vmatpush1.msra.mxu0 0.0
        %1770 = vmatprep.subr.mxu0 0.0
        %1771 = vmatpush1.msra.mxu0 0.0
        %1772 = vmatprep.subr.mxu0 0.0
        %1773 = vmatpush1.msra.mxu0 0.0
        %1774 = vmatprep.subr.mxu0 0.0
        %1775 = vmatpush1.msra.mxu0 0.0
        %1776 = vmatprep.subr.mxu0 0.0
        %1777 = vmatpush1.msra.mxu0 0.0
        %1778 = vmatprep.subr.mxu0 0.0
        %1779 = vmatpush1.msra.mxu0 0.0
        %1780 = vmatprep.subr.mxu0 0.0
        %1781 = vmatpush1.msra.mxu0 0.0
        %1782 = vmatprep.subr.mxu0 0.0
        %1783 = vmatpush1.msra.mxu0 0.0
        %1784 = vmatprep.subr.mxu0 0.0
        %1785 = vmatpush1.msra.mxu0 0.0
        %1786 = vmatprep.subr.mxu0 0.0
        %1787 = vmatpush1.msra.mxu0 0.0
        %1788 = vmatprep.subr.mxu0 0.0
        %1789 = vmatpush1.msra.mxu0 0.0
        %1790 = vmatprep.subr.mxu0 0.0
        %1791 = vmatpush1.msra.mxu0 0.0
        %1792 = vmatprep.subr.mxu0 0.0
        %1793 = vmatpush1.msra.mxu0 0.0
        %1794 = vmatprep.subr.mxu0 0.0
        %1795 = vmatpush1.msra.mxu0 0.0
        %1796 = vmatprep.subr.mxu0 0.0
        %1797 = vmatpush1.msra.mxu0 0.0
        %1798 = vmatprep.mubr.f32.mxu0 0.0
        %1799 = vmatmul.mubr.f32.gmra.mrb[0].mxu0 %v1732
        %v1800 = vpop.f32.mrb[0].mxu0
        %v1801 = vadd.f32 0.0, %v1800
        %v1802 = vpop.f32.mrb[0].mxu0
        %1803 = vdwg.mxu0
        %v1804 = vlaneseq
        %v1805 = vshrl.u32 %v1804, 7
        %v1806 = vsub.s32 3, %v1805
        %v1807 = vrot.slane %v788, %v1806
        %1809 = vrot.lane.b32.xlu0 %v1807, 96
        %v1810 = vpop.permute.xlu0 %1809
        %v1812 = vmul.f32 %v1801, %v1810
        %1813 = vrot.lane.b32.xlu0 %v1807, 88
        %v1814 = vpop.permute.xlu0 %1813
        %v1816 = vadd.f32 %v1812, %v1814
        %vm1817 = vcmp.gt.f32.partialorder %v1816, 0.0
        %v1818 = vmin.f32 %v1816, 0.0
        %v1819 = vmul.f32 %v1818, 1.442695
        %v1820 = vpow.pop %v1819
        %v1821 = vsub.f32 %v1820, 1.0
        %v1822 = vsel %vm1817, %v1816, %v1821
        %v1823 = vadd.f32 %v1566, %v1822
        %vm1824 = vcmp.gt.f32.partialorder %v1823, 0.0
        %v1825 = vmin.f32 %v1823, 0.0
        %v1826 = vmul.f32 %v1825, 1.442695
        %v1827 = vpow.pop %v1826
        %v1828 = vsub.f32 %v1827, 1.0
        %v1829 = vsel %vm1824, %v1823, %v1828
        %v1831 = vrot.slane %v1829, 5
        %1832 = vrot.lane.b32.xlu0 %v787, 96
        %v1833 = vpop.permute.xlu0 %1832
        %1835 = vrot.lane.b32.xlu0 %v812, 80
        %v1836 = vpop.permute.xlu0 %1835
        %v1838 = vsel %vm426, %v1831, 0
        %1840 = vmatprep.subr.mxu0 0.0
        %1841 = vmatpush1.msra.mxu0 %v1833
        %1842 = vmatprep.subr.mxu0 0.0
        %1843 = vmatpush1.msra.mxu0 0.0
        %1844 = vmatprep.subr.mxu0 0.0
        %1845 = vmatpush1.msra.mxu0 0.0
        %1846 = vmatprep.subr.mxu0 0.0
        %1847 = vmatpush1.msra.mxu0 0.0
        %1848 = vmatprep.subr.mxu0 0.0
        %1849 = vmatpush1.msra.mxu0 0.0
        %1850 = vmatprep.subr.mxu0 0.0
        %1851 = vmatpush1.msra.mxu0 0.0
        %1852 = vmatprep.subr.mxu0 0.0
        %1853 = vmatpush1.msra.mxu0 0.0
        %1854 = vmatprep.subr.mxu0 0.0
        %1855 = vmatpush1.msra.mxu0 0.0
        %1856 = vmatprep.subr.mxu0 0.0
        %1857 = vmatpush1.msra.mxu0 0.0
        %1858 = vmatprep.subr.mxu0 0.0
        %1859 = vmatpush1.msra.mxu0 0.0
        %1860 = vmatprep.subr.mxu0 0.0
        %1861 = vmatpush1.msra.mxu0 0.0
        %1862 = vmatprep.subr.mxu0 0.0
        %1863 = vmatpush1.msra.mxu0 0.0
        %1864 = vmatprep.subr.mxu0 0.0
        %1865 = vmatpush1.msra.mxu0 0.0
        %1866 = vmatprep.subr.mxu0 0.0
        %1867 = vmatpush1.msra.mxu0 0.0
        %1868 = vmatprep.subr.mxu0 0.0
        %1869 = vmatpush1.msra.mxu0 0.0
        %1870 = vmatprep.subr.mxu0 0.0
        %1871 = vmatpush1.msra.mxu0 0.0
        %1872 = vmatprep.subr.mxu0 0.0
        %1873 = vmatpush1.msra.mxu0 0.0
        %1874 = vmatprep.subr.mxu0 0.0
        %1875 = vmatpush1.msra.mxu0 0.0
        %1876 = vmatprep.subr.mxu0 0.0
        %1877 = vmatpush1.msra.mxu0 0.0
        %1878 = vmatprep.subr.mxu0 0.0
        %1879 = vmatpush1.msra.mxu0 0.0
        %1880 = vmatprep.subr.mxu0 0.0
        %1881 = vmatpush1.msra.mxu0 0.0
        %1882 = vmatprep.subr.mxu0 0.0
        %1883 = vmatpush1.msra.mxu0 0.0
        %1884 = vmatprep.subr.mxu0 0.0
        %1885 = vmatpush1.msra.mxu0 0.0
        %1886 = vmatprep.subr.mxu0 0.0
        %1887 = vmatpush1.msra.mxu0 0.0
        %1888 = vmatprep.subr.mxu0 0.0
        %1889 = vmatpush1.msra.mxu0 0.0
        %1890 = vmatprep.subr.mxu0 0.0
        %1891 = vmatpush1.msra.mxu0 0.0
        %1892 = vmatprep.subr.mxu0 0.0
        %1893 = vmatpush1.msra.mxu0 0.0
        %1894 = vmatprep.subr.mxu0 0.0
        %1895 = vmatpush1.msra.mxu0 0.0
        %1896 = vmatprep.subr.mxu0 0.0
        %1897 = vmatpush1.msra.mxu0 0.0
        %1898 = vmatprep.subr.mxu0 0.0
        %1899 = vmatpush1.msra.mxu0 0.0
        %1900 = vmatprep.subr.mxu0 0.0
        %1901 = vmatpush1.msra.mxu0 0.0
        %1902 = vmatprep.subr.mxu0 0.0
        %1903 = vmatpush1.msra.mxu0 0.0
        %1904 = vmatprep.mubr.f32.mxu0 0.0
        %1905 = vmatmul.mubr.f32.gmra.mrb[0].mxu0 %v1838
        %v1906 = vpop.f32.mrb[0].mxu0
        %v1907 = vadd.f32 %v1836, %v1906
        %v1908 = vpop.f32.mrb[0].mxu0
        %1909 = vdwg.mxu0
        %s1910 = scalar_lea.vmem %s2, 8
        %v1911 = vld [vmem:[%s1910] sm:$0xff]
        %s1912 = scalar_lea.vmem [#allocation3], 32
        %v1913 = vld [vmem:[%s1912] sm:$0xff]
        %v1914 = vld [vmem:[%s1912 + $0x8] sm:$0xff]
        %v1915 = vld [vmem:[%s1912 + $0x10] sm:$0xff]
        %v1916 = vld [vmem:[%s1912 + $0x18] sm:$0xff]
        %s1917 = scalar_lea.vmem %s4, 1
        %v1918 = vld [vmem:[%s1917] sm:$0x1]
        %vm1919 = vcmask 63489
        %v1920 = vsel %vm1919, %v786, 0.0
        %1921 = vadd.xlane.f32.xlu0 %v1920
        %v1922 = vpop.xlane.xlu0 %1921
        %v1923 = vmul.f32 %v1922, %v797
        %v1924 = vsub.f32 %v786, %v1923
        %v1925 = vmul.f32 %v1924, %v1924
        %v1926 = vsel %vm1919, %v1925, 0.0
        %1927 = vadd.xlane.f32.xlu0 %v1926
        %v1928 = vpop.xlane.xlu0 %1927
        %v1929 = vmul.f32 %v1928, %v797
        %v1930 = vadd.f32 %v1929, 1e-06
        %v1931 = vrsqrt.pop %v1930
        %v1932 = vmul.f32 %v1924, %v1931
        %v1934 = vlaneseq
        %v1935 = vshrl.u32 %v1934, 7
        %v1936 = vsub.s32 0, %v1935
        %v1937 = vrot.slane %v1918, %v1936
        %v1939 = vmul.f32 %v1932, %v1937
        %1940 = vrot.lane.b32.xlu0 %v1937, 120
        %v1941 = vpop.permute.xlu0 %1940
        %v1943 = vadd.f32 %v1939, %v1941
        %v1945 = vrot.slane %v1943, 1
        %1946 = vrot.lane.b32.xlu0 %v1937, 112
        %v1947 = vpop.permute.xlu0 %1946
        %v1949 = vsel %vm426, %v1945, 0
        %1951 = vmatprep.subr.mxu0 0.0
        %1952 = vmatpush1.msra.mxu0 %v1911
        %1953 = vmatprep.subr.mxu0 0.0
        %1954 = vmatpush1.msra.mxu0 0.0
        %1955 = vmatprep.subr.mxu0 0.0
        %1956 = vmatpush1.msra.mxu0 0.0
        %1957 = vmatprep.subr.mxu0 0.0
        %1958 = vmatpush1.msra.mxu0 0.0
        %1959 = vmatprep.subr.mxu0 0.0
        %1960 = vmatpush1.msra.mxu0 0.0
        %1961 = vmatprep.subr.mxu0 0.0
        %1962 = vmatpush1.msra.mxu0 0.0
        %1963 = vmatprep.subr.mxu0 0.0
        %1964 = vmatpush1.msra.mxu0 0.0
        %1965 = vmatprep.subr.mxu0 0.0
        %1966 = vmatpush1.msra.mxu0 0.0
        %1967 = vmatprep.subr.mxu0 0.0
        %1968 = vmatpush1.msra.mxu0 0.0
        %1969 = vmatprep.subr.mxu0 0.0
        %1970 = vmatpush1.msra.mxu0 0.0
        %1971 = vmatprep.subr.mxu0 0.0
        %1972 = vmatpush1.msra.mxu0 0.0
        %1973 = vmatprep.subr.mxu0 0.0
        %1974 = vmatpush1.msra.mxu0 0.0
        %1975 = vmatprep.subr.mxu0 0.0
        %1976 = vmatpush1.msra.mxu0 0.0
        %1977 = vmatprep.subr.mxu0 0.0
        %1978 = vmatpush1.msra.mxu0 0.0
        %1979 = vmatprep.subr.mxu0 0.0
        %1980 = vmatpush1.msra.mxu0 0.0
        %1981 = vmatprep.subr.mxu0 0.0
        %1982 = vmatpush1.msra.mxu0 0.0
        %1983 = vmatprep.subr.mxu0 0.0
        %1984 = vmatpush1.msra.mxu0 0.0
        %1985 = vmatprep.subr.mxu0 0.0
        %1986 = vmatpush1.msra.mxu0 0.0
        %1987 = vmatprep.subr.mxu0 0.0
        %1988 = vmatpush1.msra.mxu0 0.0
        %1989 = vmatprep.subr.mxu0 0.0
        %1990 = vmatpush1.msra.mxu0 0.0
        %1991 = vmatprep.subr.mxu0 0.0
        %1992 = vmatpush1.msra.mxu0 0.0
        %1993 = vmatprep.subr.mxu0 0.0
        %1994 = vmatpush1.msra.mxu0 0.0
        %1995 = vmatprep.subr.mxu0 0.0
        %1996 = vmatpush1.msra.mxu0 0.0
        %1997 = vmatprep.subr.mxu0 0.0
        %1998 = vmatpush1.msra.mxu0 0.0
        %1999 = vmatprep.subr.mxu0 0.0
        %2000 = vmatpush1.msra.mxu0 0.0
        %2001 = vmatprep.subr.mxu0 0.0
        %2002 = vmatpush1.msra.mxu0 0.0
        %2003 = vmatprep.subr.mxu0 0.0
        %2004 = vmatpush1.msra.mxu0 0.0
        %2005 = vmatprep.subr.mxu0 0.0
        %2006 = vmatpush1.msra.mxu0 0.0
        %2007 = vmatprep.subr.mxu0 0.0
        %2008 = vmatpush1.msra.mxu0 0.0
        %2009 = vmatprep.subr.mxu0 0.0
        %2010 = vmatpush1.msra.mxu0 0.0
        %2011 = vmatprep.subr.mxu0 0.0
        %2012 = vmatpush1.msra.mxu0 0.0
        %2013 = vmatprep.subr.mxu0 0.0
        %2014 = vmatpush1.msra.mxu0 0.0
        %2015 = vmatprep.mubr.f32.mxu0 0.0
        %2016 = vmatmul.mubr.f32.gmra.mrb[0].mxu0 %v1949
        %v2017 = vpop.f32.mrb[0].mxu0
        %v2018 = vadd.f32 %v1947, %v2017
        %v2019 = vpop.f32.mrb[0].mxu0
        %2020 = vdwg.mxu0
        %2022 = vrot.lane.b32.xlu0 %v2018, 120
        %v2023 = vpop.permute.xlu0 %2022
        %v2024 = vsel %vm421, %v2018, 0
        %v2026 = vsel %vm421, %v2023, 0
        %2028 = vmatprep.subr.mxu0 0.0
        %2029 = vmatpush1.xpose.msra.mxu0 %v2026
        %2030 = vmatprep.subr.mxu0 0.0
        %2031 = vmatpush1.xpose.msra.mxu0 0.0
        %2032 = vmatprep.subr.mxu0 0.0
        %2033 = vmatpush1.xpose.msra.mxu0 0.0
        %2034 = vmatprep.subr.mxu0 0.0
        %2035 = vmatpush1.xpose.msra.mxu0 0.0
        %2036 = vmatprep.subr.mxu0 0.0
        %2037 = vmatpush1.xpose.msra.mxu0 0.0
        %2038 = vmatprep.subr.mxu0 0.0
        %2039 = vmatpush1.xpose.msra.mxu0 0.0
        %2040 = vmatprep.subr.mxu0 0.0
        %2041 = vmatpush1.xpose.msra.mxu0 0.0
        %2042 = vmatprep.subr.mxu0 0.0
        %2043 = vmatpush1.xpose.msra.mxu0 0.0
        %2044 = vmatprep.subr.mxu0 0.0
        %2045 = vmatpush1.xpose.msra.mxu0 0.0
        %2046 = vmatprep.subr.mxu0 0.0
        %2047 = vmatpush1.xpose.msra.mxu0 0.0
        %2048 = vmatprep.subr.mxu0 0.0
        %2049 = vmatpush1.xpose.msra.mxu0 0.0
        %2050 = vmatprep.subr.mxu0 0.0
        %2051 = vmatpush1.xpose.msra.mxu0 0.0
        %2052 = vmatprep.subr.mxu0 0.0
        %2053 = vmatpush1.xpose.msra.mxu0 0.0
        %2054 = vmatprep.subr.mxu0 0.0
        %2055 = vmatpush1.xpose.msra.mxu0 0.0
        %2056 = vmatprep.subr.mxu0 0.0
        %2057 = vmatpush1.xpose.msra.mxu0 0.0
        %2058 = vmatprep.subr.mxu0 0.0
        %2059 = vmatpush1.xpose.msra.mxu0 0.0
        %2060 = vmatprep.subr.mxu0 0.0
        %2061 = vmatpush1.xpose.msra.mxu0 0.0
        %2062 = vmatprep.subr.mxu0 0.0
        %2063 = vmatpush1.xpose.msra.mxu0 0.0
        %2064 = vmatprep.subr.mxu0 0.0
        %2065 = vmatpush1.xpose.msra.mxu0 0.0
        %2066 = vmatprep.subr.mxu0 0.0
        %2067 = vmatpush1.xpose.msra.mxu0 0.0
        %2068 = vmatprep.subr.mxu0 0.0
        %2069 = vmatpush1.xpose.msra.mxu0 0.0
        %2070 = vmatprep.subr.mxu0 0.0
        %2071 = vmatpush1.xpose.msra.mxu0 0.0
        %2072 = vmatprep.subr.mxu0 0.0
        %2073 = vmatpush1.xpose.msra.mxu0 0.0
        %2074 = vmatprep.subr.mxu0 0.0
        %2075 = vmatpush1.xpose.msra.mxu0 0.0
        %2076 = vmatprep.subr.mxu0 0.0
        %2077 = vmatpush1.xpose.msra.mxu0 0.0
        %2078 = vmatprep.subr.mxu0 0.0
        %2079 = vmatpush1.xpose.msra.mxu0 0.0
        %2080 = vmatprep.subr.mxu0 0.0
        %2081 = vmatpush1.xpose.msra.mxu0 0.0
        %2082 = vmatprep.subr.mxu0 0.0
        %2083 = vmatpush1.xpose.msra.mxu0 0.0
        %2084 = vmatprep.subr.mxu0 0.0
        %2085 = vmatpush1.xpose.msra.mxu0 0.0
        %2086 = vmatprep.subr.mxu0 0.0
        %2087 = vmatpush1.xpose.msra.mxu0 0.0
        %2088 = vmatprep.subr.mxu0 0.0
        %2089 = vmatpush1.xpose.msra.mxu0 0.0
        %2090 = vmatprep.subr.mxu0 0.0
        %2091 = vmatpush1.xpose.msra.mxu0 0.0
        %2092 = vmatprep.mubr.f32.mxu0 0.0
        %2093 = vmatmul.mubr.f32.gmra.mrb[0].mxu0 %v2024
        %v2094 = vpop.f32.mrb[0].mxu0
        %v2095 = vadd.f32 0.0, %v2094
        %v2096 = vpop.f32.mrb[0].mxu0
        %2097 = vdwg.mxu0
        %v2098 = vmul.f32 %v2095, 0.5
        %v2099 = vsel %vm973, %v2098, -inf
        %2100 = vmax.xlane.f32.xlu0 %v2099
        %v2101 = vpop.xlane.xlu0 %2100
        %v2102 = vsub.f32 %v2098, %v2101
        %v2103 = vmul.f32 %v2102, 1.442695
        %v2104 = vpow.pop %v2103
        %v2105 = vsel %vm973, %v2104, 0.0
        %2106 = vadd.xlane.f32.xlu0 %v2105
        %v2107 = vpop.xlane.xlu0 %2106
        %v2108 = vrcp.pop %v2107
        %v2109 = vmul.f32 %v2104, %v2108
        %2110 = vrot.lane.b32.xlu0 %v2018, 112
        %v2111 = vpop.permute.xlu0 %2110
        %v2113 = vsel %vm987, %v2109, 0
        %v2115 = vsel %vm290, %v2111, 0
        %2117 = vmatprep.subr.mxu0 0.0
        %2118 = vmatpush1.msra.mxu0 %v2115
        %2119 = vmatprep.subr.mxu0 0.0
        %2120 = vmatpush1.msra.mxu0 0.0
        %2121 = vmatprep.subr.mxu0 0.0
        %2122 = vmatpush1.msra.mxu0 0.0
        %2123 = vmatprep.subr.mxu0 0.0
        %2124 = vmatpush1.msra.mxu0 0.0
        %2125 = vmatprep.subr.mxu0 0.0
        %2126 = vmatpush1.msra.mxu0 0.0
        %2127 = vmatprep.subr.mxu0 0.0
        %2128 = vmatpush1.msra.mxu0 0.0
        %2129 = vmatprep.subr.mxu0 0.0
        %2130 = vmatpush1.msra.mxu0 0.0
        %2131 = vmatprep.subr.mxu0 0.0
        %2132 = vmatpush1.msra.mxu0 0.0
        %2133 = vmatprep.subr.mxu0 0.0
        %2134 = vmatpush1.msra.mxu0 0.0
        %2135 = vmatprep.subr.mxu0 0.0
        %2136 = vmatpush1.msra.mxu0 0.0
        %2137 = vmatprep.subr.mxu0 0.0
        %2138 = vmatpush1.msra.mxu0 0.0
        %2139 = vmatprep.subr.mxu0 0.0
        %2140 = vmatpush1.msra.mxu0 0.0
        %2141 = vmatprep.subr.mxu0 0.0
        %2142 = vmatpush1.msra.mxu0 0.0
        %2143 = vmatprep.subr.mxu0 0.0
        %2144 = vmatpush1.msra.mxu0 0.0
        %2145 = vmatprep.subr.mxu0 0.0
        %2146 = vmatpush1.msra.mxu0 0.0
        %2147 = vmatprep.subr.mxu0 0.0
        %2148 = vmatpush1.msra.mxu0 0.0
        %2149 = vmatprep.subr.mxu0 0.0
        %2150 = vmatpush1.msra.mxu0 0.0
        %2151 = vmatprep.subr.mxu0 0.0
        %2152 = vmatpush1.msra.mxu0 0.0
        %2153 = vmatprep.subr.mxu0 0.0
        %2154 = vmatpush1.msra.mxu0 0.0
        %2155 = vmatprep.subr.mxu0 0.0
        %2156 = vmatpush1.msra.mxu0 0.0
        %2157 = vmatprep.subr.mxu0 0.0
        %2158 = vmatpush1.msra.mxu0 0.0
        %2159 = vmatprep.subr.mxu0 0.0
        %2160 = vmatpush1.msra.mxu0 0.0
        %2161 = vmatprep.subr.mxu0 0.0
        %2162 = vmatpush1.msra.mxu0 0.0
        %2163 = vmatprep.subr.mxu0 0.0
        %2164 = vmatpush1.msra.mxu0 0.0
        %2165 = vmatprep.subr.mxu0 0.0
        %2166 = vmatpush1.msra.mxu0 0.0
        %2167 = vmatprep.subr.mxu0 0.0
        %2168 = vmatpush1.msra.mxu0 0.0
        %2169 = vmatprep.subr.mxu0 0.0
        %2170 = vmatpush1.msra.mxu0 0.0
        %2171 = vmatprep.subr.mxu0 0.0
        %2172 = vmatpush1.msra.mxu0 0.0
        %2173 = vmatprep.subr.mxu0 0.0
        %2174 = vmatpush1.msra.mxu0 0.0
        %2175 = vmatprep.subr.mxu0 0.0
        %2176 = vmatpush1.msra.mxu0 0.0
        %2177 = vmatprep.subr.mxu0 0.0
        %2178 = vmatpush1.msra.mxu0 0.0
        %2179 = vmatprep.subr.mxu0 0.0
        %2180 = vmatpush1.msra.mxu0 0.0
        %2181 = vmatprep.mubr.f32.mxu0 0.0
        %2182 = vmatmul.mubr.f32.gmra.mrb[0].mxu0 %v2113
        %v2183 = vpop.f32.mrb[0].mxu0
        %v2184 = vadd.f32 0.0, %v2183
        %v2185 = vpop.f32.mrb[0].mxu0
        %2186 = vdwg.mxu0
        %2187 = vrot.lane.b32.xlu0 %v2018, 124
        %v2188 = vpop.permute.xlu0 %2187
        %2189 = vrot.lane.b32.xlu0 %v2018, 116
        %v2190 = vpop.permute.xlu0 %2189
        %v2191 = vsel %vm421, %v2188, 0
        %v2193 = vsel %vm421, %v2190, 0
        %2195 = vmatprep.subr.mxu0 0.0
        %2196 = vmatpush1.xpose.msra.mxu0 %v2193
        %2197 = vmatprep.subr.mxu0 0.0
        %2198 = vmatpush1.xpose.msra.mxu0 0.0
        %2199 = vmatprep.subr.mxu0 0.0
        %2200 = vmatpush1.xpose.msra.mxu0 0.0
        %2201 = vmatprep.subr.mxu0 0.0
        %2202 = vmatpush1.xpose.msra.mxu0 0.0
        %2203 = vmatprep.subr.mxu0 0.0
        %2204 = vmatpush1.xpose.msra.mxu0 0.0
        %2205 = vmatprep.subr.mxu0 0.0
        %2206 = vmatpush1.xpose.msra.mxu0 0.0
        %2207 = vmatprep.subr.mxu0 0.0
        %2208 = vmatpush1.xpose.msra.mxu0 0.0
        %2209 = vmatprep.subr.mxu0 0.0
        %2210 = vmatpush1.xpose.msra.mxu0 0.0
        %2211 = vmatprep.subr.mxu0 0.0
        %2212 = vmatpush1.xpose.msra.mxu0 0.0
        %2213 = vmatprep.subr.mxu0 0.0
        %2214 = vmatpush1.xpose.msra.mxu0 0.0
        %2215 = vmatprep.subr.mxu0 0.0
        %2216 = vmatpush1.xpose.msra.mxu0 0.0
        %2217 = vmatprep.subr.mxu0 0.0
        %2218 = vmatpush1.xpose.msra.mxu0 0.0
        %2219 = vmatprep.subr.mxu0 0.0
        %2220 = vmatpush1.xpose.msra.mxu0 0.0
        %2221 = vmatprep.subr.mxu0 0.0
        %2222 = vmatpush1.xpose.msra.mxu0 0.0
        %2223 = vmatprep.subr.mxu0 0.0
        %2224 = vmatpush1.xpose.msra.mxu0 0.0
        %2225 = vmatprep.subr.mxu0 0.0
        %2226 = vmatpush1.xpose.msra.mxu0 0.0
        %2227 = vmatprep.subr.mxu0 0.0
        %2228 = vmatpush1.xpose.msra.mxu0 0.0
        %2229 = vmatprep.subr.mxu0 0.0
        %2230 = vmatpush1.xpose.msra.mxu0 0.0
        %2231 = vmatprep.subr.mxu0 0.0
        %2232 = vmatpush1.xpose.msra.mxu0 0.0
        %2233 = vmatprep.subr.mxu0 0.0
        %2234 = vmatpush1.xpose.msra.mxu0 0.0
        %2235 = vmatprep.subr.mxu0 0.0
        %2236 = vmatpush1.xpose.msra.mxu0 0.0
        %2237 = vmatprep.subr.mxu0 0.0
        %2238 = vmatpush1.xpose.msra.mxu0 0.0
        %2239 = vmatprep.subr.mxu0 0.0
        %2240 = vmatpush1.xpose.msra.mxu0 0.0
        %2241 = vmatprep.subr.mxu0 0.0
        %2242 = vmatpush1.xpose.msra.mxu0 0.0
        %2243 = vmatprep.subr.mxu0 0.0
        %2244 = vmatpush1.xpose.msra.mxu0 0.0
        %2245 = vmatprep.subr.mxu0 0.0
        %2246 = vmatpush1.xpose.msra.mxu0 0.0
        %2247 = vmatprep.subr.mxu0 0.0
        %2248 = vmatpush1.xpose.msra.mxu0 0.0
        %2249 = vmatprep.subr.mxu0 0.0
        %2250 = vmatpush1.xpose.msra.mxu0 0.0
        %2251 = vmatprep.subr.mxu0 0.0
        %2252 = vmatpush1.xpose.msra.mxu0 0.0
        %2253 = vmatprep.subr.mxu0 0.0
        %2254 = vmatpush1.xpose.msra.mxu0 0.0
        %2255 = vmatprep.subr.mxu0 0.0
        %2256 = vmatpush1.xpose.msra.mxu0 0.0
        %2257 = vmatprep.subr.mxu0 0.0
        %2258 = vmatpush1.xpose.msra.mxu0 0.0
        %2259 = vmatprep.mubr.f32.mxu0 0.0
        %2260 = vmatmul.mubr.f32.gmra.mrb[0].mxu0 %v2191
        %v2261 = vpop.f32.mrb[0].mxu0
        %v2262 = vadd.f32 0.0, %v2261
        %v2263 = vpop.f32.mrb[0].mxu0
        %2264 = vdwg.mxu0
        %v2265 = vmul.f32 %v2262, 0.5
        %v2266 = vsel %vm973, %v2265, -inf
        %2267 = vmax.xlane.f32.xlu0 %v2266
        %v2268 = vpop.xlane.xlu0 %2267
        %v2269 = vsub.f32 %v2265, %v2268
        %v2270 = vmul.f32 %v2269, 1.442695
        %v2271 = vpow.pop %v2270
        %v2272 = vsel %vm973, %v2271, 0.0
        %2273 = vadd.xlane.f32.xlu0 %v2272
        %v2274 = vpop.xlane.xlu0 %2273
        %v2275 = vrcp.pop %v2274
        %v2276 = vmul.f32 %v2271, %v2275
        %2277 = vrot.lane.b32.xlu0 %v2018, 108
        %v2278 = vpop.permute.xlu0 %2277
        %v2280 = vsel %vm987, %v2276, 0
        %v2282 = vsel %vm290, %v2278, 0
        %2284 = vmatprep.subr.mxu0 0.0
        %2285 = vmatpush1.msra.mxu0 %v2282
        %2286 = vmatprep.subr.mxu0 0.0
        %2287 = vmatpush1.msra.mxu0 0.0
        %2288 = vmatprep.subr.mxu0 0.0
        %2289 = vmatpush1.msra.mxu0 0.0
        %2290 = vmatprep.subr.mxu0 0.0
        %2291 = vmatpush1.msra.mxu0 0.0
        %2292 = vmatprep.subr.mxu0 0.0
        %2293 = vmatpush1.msra.mxu0 0.0
        %2294 = vmatprep.subr.mxu0 0.0
        %2295 = vmatpush1.msra.mxu0 0.0
        %2296 = vmatprep.subr.mxu0 0.0
        %2297 = vmatpush1.msra.mxu0 0.0
        %2298 = vmatprep.subr.mxu0 0.0
        %2299 = vmatpush1.msra.mxu0 0.0
        %2300 = vmatprep.subr.mxu0 0.0
        %2301 = vmatpush1.msra.mxu0 0.0
        %2302 = vmatprep.subr.mxu0 0.0
        %2303 = vmatpush1.msra.mxu0 0.0
        %2304 = vmatprep.subr.mxu0 0.0
        %2305 = vmatpush1.msra.mxu0 0.0
        %2306 = vmatprep.subr.mxu0 0.0
        %2307 = vmatpush1.msra.mxu0 0.0
        %2308 = vmatprep.subr.mxu0 0.0
        %2309 = vmatpush1.msra.mxu0 0.0
        %2310 = vmatprep.subr.mxu0 0.0
        %2311 = vmatpush1.msra.mxu0 0.0
        %2312 = vmatprep.subr.mxu0 0.0
        %2313 = vmatpush1.msra.mxu0 0.0
        %2314 = vmatprep.subr.mxu0 0.0
        %2315 = vmatpush1.msra.mxu0 0.0
        %2316 = vmatprep.subr.mxu0 0.0
        %2317 = vmatpush1.msra.mxu0 0.0
        %2318 = vmatprep.subr.mxu0 0.0
        %2319 = vmatpush1.msra.mxu0 0.0
        %2320 = vmatprep.subr.mxu0 0.0
        %2321 = vmatpush1.msra.mxu0 0.0
        %2322 = vmatprep.subr.mxu0 0.0
        %2323 = vmatpush1.msra.mxu0 0.0
        %2324 = vmatprep.subr.mxu0 0.0
        %2325 = vmatpush1.msra.mxu0 0.0
        %2326 = vmatprep.subr.mxu0 0.0
        %2327 = vmatpush1.msra.mxu0 0.0
        %2328 = vmatprep.subr.mxu0 0.0
        %2329 = vmatpush1.msra.mxu0 0.0
        %2330 = vmatprep.subr.mxu0 0.0
        %2331 = vmatpush1.msra.mxu0 0.0
        %2332 = vmatprep.subr.mxu0 0.0
        %2333 = vmatpush1.msra.mxu0 0.0
        %2334 = vmatprep.subr.mxu0 0.0
        %2335 = vmatpush1.msra.mxu0 0.0
        %2336 = vmatprep.subr.mxu0 0.0
        %2337 = vmatpush1.msra.mxu0 0.0
        %2338 = vmatprep.subr.mxu0 0.0
        %2339 = vmatpush1.msra.mxu0 0.0
        %2340 = vmatprep.subr.mxu0 0.0
        %2341 = vmatpush1.msra.mxu0 0.0
        %2342 = vmatprep.subr.mxu0 0.0
        %2343 = vmatpush1.msra.mxu0 0.0
        %2344 = vmatprep.subr.mxu0 0.0
        %2345 = vmatpush1.msra.mxu0 0.0
        %2346 = vmatprep.subr.mxu0 0.0
        %2347 = vmatpush1.msra.mxu0 0.0
        %2348 = vmatprep.mubr.f32.mxu0 0.0
        %2349 = vmatmul.mubr.f32.gmra.mrb[0].mxu0 %v2280
        %v2350 = vpop.f32.mrb[0].mxu0
        %v2351 = vadd.f32 0.0, %v2350
        %v2352 = vpop.f32.mrb[0].mxu0
        %2353 = vdwg.mxu0
        %2355 = vrot.lane.b32.xlu0 %v2351, 4
        %v2356 = vpop.permute.xlu0 %2355
        %v2358 = vsel %vm421, %v2184, %v2356
        %2360 = vrot.lane.b32.xlu0 %v1911, 104
        %v2361 = vpop.permute.xlu0 %2360
        %2363 = vrot.lane.b32.xlu0 %v1937, 88
        %v2364 = vpop.permute.xlu0 %2363
        %v2367 = vsel %vm426, %v2358, 0
        %2369 = vmatprep.subr.mxu0 0.0
        %2370 = vmatpush1.msra.mxu0 %v2361
        %2371 = vmatprep.subr.mxu0 0.0
        %2372 = vmatpush1.msra.mxu0 0.0
        %2373 = vmatprep.subr.mxu0 0.0
        %2374 = vmatpush1.msra.mxu0 0.0
        %2375 = vmatprep.subr.mxu0 0.0
        %2376 = vmatpush1.msra.mxu0 0.0
        %2377 = vmatprep.subr.mxu0 0.0
        %2378 = vmatpush1.msra.mxu0 0.0
        %2379 = vmatprep.subr.mxu0 0.0
        %2380 = vmatpush1.msra.mxu0 0.0
        %2381 = vmatprep.subr.mxu0 0.0
        %2382 = vmatpush1.msra.mxu0 0.0
        %2383 = vmatprep.subr.mxu0 0.0
        %2384 = vmatpush1.msra.mxu0 0.0
        %2385 = vmatprep.subr.mxu0 0.0
        %2386 = vmatpush1.msra.mxu0 0.0
        %2387 = vmatprep.subr.mxu0 0.0
        %2388 = vmatpush1.msra.mxu0 0.0
        %2389 = vmatprep.subr.mxu0 0.0
        %2390 = vmatpush1.msra.mxu0 0.0
        %2391 = vmatprep.subr.mxu0 0.0
        %2392 = vmatpush1.msra.mxu0 0.0
        %2393 = vmatprep.subr.mxu0 0.0
        %2394 = vmatpush1.msra.mxu0 0.0
        %2395 = vmatprep.subr.mxu0 0.0
        %2396 = vmatpush1.msra.mxu0 0.0
        %2397 = vmatprep.subr.mxu0 0.0
        %2398 = vmatpush1.msra.mxu0 0.0
        %2399 = vmatprep.subr.mxu0 0.0
        %2400 = vmatpush1.msra.mxu0 0.0
        %2401 = vmatprep.subr.mxu0 0.0
        %2402 = vmatpush1.msra.mxu0 0.0
        %2403 = vmatprep.subr.mxu0 0.0
        %2404 = vmatpush1.msra.mxu0 0.0
        %2405 = vmatprep.subr.mxu0 0.0
        %2406 = vmatpush1.msra.mxu0 0.0
        %2407 = vmatprep.subr.mxu0 0.0
        %2408 = vmatpush1.msra.mxu0 0.0
        %2409 = vmatprep.subr.mxu0 0.0
        %2410 = vmatpush1.msra.mxu0 0.0
        %2411 = vmatprep.subr.mxu0 0.0
        %2412 = vmatpush1.msra.mxu0 0.0
        %2413 = vmatprep.subr.mxu0 0.0
        %2414 = vmatpush1.msra.mxu0 0.0
        %2415 = vmatprep.subr.mxu0 0.0
        %2416 = vmatpush1.msra.mxu0 0.0
        %2417 = vmatprep.subr.mxu0 0.0
        %2418 = vmatpush1.msra.mxu0 0.0
        %2419 = vmatprep.subr.mxu0 0.0
        %2420 = vmatpush1.msra.mxu0 0.0
        %2421 = vmatprep.subr.mxu0 0.0
        %2422 = vmatpush1.msra.mxu0 0.0
        %2423 = vmatprep.subr.mxu0 0.0
        %2424 = vmatpush1.msra.mxu0 0.0
        %2425 = vmatprep.subr.mxu0 0.0
        %2426 = vmatpush1.msra.mxu0 0.0
        %2427 = vmatprep.subr.mxu0 0.0
        %2428 = vmatpush1.msra.mxu0 0.0
        %2429 = vmatprep.subr.mxu0 0.0
        %2430 = vmatpush1.msra.mxu0 0.0
        %2431 = vmatprep.subr.mxu0 0.0
        %2432 = vmatpush1.msra.mxu0 0.0
        %2433 = vmatprep.mubr.f32.mxu0 0.0
        %2434 = vmatmul.mubr.f32.gmra.mrb[0].mxu0 %v2367
        %v2435 = vpop.f32.mrb[0].mxu0
        %v2436 = vadd.f32 %v2364, %v2435
        %v2437 = vpop.f32.mrb[0].mxu0
        %2438 = vdwg.mxu0
        %v2440 = vrot.slane %v2436, 7
        %v2442 = vadd.f32 %v786, %v2440
        %v2444 = vrot.slane %v2442, 6
        %v2446 = vsel %vm251, 0.0, %v2444
        %v2448 = vrot.slane %v2446, 1
        %2449 = vrot.lane.b32.xlu0 %v2448, 8
        %v2450 = vpop.permute.xlu0 %2449
        %v2452 = vrot.slane %v2446, 2
        %2453 = vrot.lane.b32.xlu0 %v2452, 16
        %v2454 = vpop.permute.xlu0 %2453
        %v2456 = vrot.slane %v2446, 3
        %v2457 = vrot.slane %v2444, 3
        %v2458 = vsel %vm312, %v2456, %v2457
        %2459 = vrot.lane.b32.xlu0 %v2458, 24
        %v2460 = vpop.permute.xlu0 %2459
        %v2462 = vsel %vm426, %v2446, %v2450
        %v2463 = vsel %vm436, %v2462, %v2454
        %v2464 = vsel %vm446, %v2463, %v2460
        %v2466 = vsel %vm456, %v2464, 0
        %2468 = vmatprep.subr.mxu0 0.0
        %2469 = vmatpush1.msra.mxu0 %v1913
        %2470 = vmatprep.subr.mxu0 0.0
        %2471 = vmatpush1.msra.mxu0 %v1914
        %2472 = vmatprep.subr.mxu0 0.0
        %2473 = vmatpush1.msra.mxu0 %v1915
        %2474 = vmatprep.subr.mxu0 0.0
        %2475 = vmatpush1.msra.mxu0 %v1916
        %2476 = vmatprep.subr.mxu0 0.0
        %2477 = vmatpush1.msra.mxu0 0.0
        %2478 = vmatprep.subr.mxu0 0.0
        %2479 = vmatpush1.msra.mxu0 0.0
        %2480 = vmatprep.subr.mxu0 0.0
        %2481 = vmatpush1.msra.mxu0 0.0
        %2482 = vmatprep.subr.mxu0 0.0
        %2483 = vmatpush1.msra.mxu0 0.0
        %2484 = vmatprep.subr.mxu0 0.0
        %2485 = vmatpush1.msra.mxu0 0.0
        %2486 = vmatprep.subr.mxu0 0.0
        %2487 = vmatpush1.msra.mxu0 0.0
        %2488 = vmatprep.subr.mxu0 0.0
        %2489 = vmatpush1.msra.mxu0 0.0
        %2490 = vmatprep.subr.mxu0 0.0
        %2491 = vmatpush1.msra.mxu0 0.0
        %2492 = vmatprep.subr.mxu0 0.0
        %2493 = vmatpush1.msra.mxu0 0.0
        %2494 = vmatprep.subr.mxu0 0.0
        %2495 = vmatpush1.msra.mxu0 0.0
        %2496 = vmatprep.subr.mxu0 0.0
        %2497 = vmatpush1.msra.mxu0 0.0
        %2498 = vmatprep.subr.mxu0 0.0
        %2499 = vmatpush1.msra.mxu0 0.0
        %2500 = vmatprep.subr.mxu0 0.0
        %2501 = vmatpush1.msra.mxu0 0.0
        %2502 = vmatprep.subr.mxu0 0.0
        %2503 = vmatpush1.msra.mxu0 0.0
        %2504 = vmatprep.subr.mxu0 0.0
        %2505 = vmatpush1.msra.mxu0 0.0
        %2506 = vmatprep.subr.mxu0 0.0
        %2507 = vmatpush1.msra.mxu0 0.0
        %2508 = vmatprep.subr.mxu0 0.0
        %2509 = vmatpush1.msra.mxu0 0.0
        %2510 = vmatprep.subr.mxu0 0.0
        %2511 = vmatpush1.msra.mxu0 0.0
        %2512 = vmatprep.subr.mxu0 0.0
        %2513 = vmatpush1.msra.mxu0 0.0
        %2514 = vmatprep.subr.mxu0 0.0
        %2515 = vmatpush1.msra.mxu0 0.0
        %2516 = vmatprep.subr.mxu0 0.0
        %2517 = vmatpush1.msra.mxu0 0.0
        %2518 = vmatprep.subr.mxu0 0.0
        %2519 = vmatpush1.msra.mxu0 0.0
        %2520 = vmatprep.subr.mxu0 0.0
        %2521 = vmatpush1.msra.mxu0 0.0
        %2522 = vmatprep.subr.mxu0 0.0
        %2523 = vmatpush1.msra.mxu0 0.0
        %2524 = vmatprep.subr.mxu0 0.0
        %2525 = vmatpush1.msra.mxu0 0.0
        %2526 = vmatprep.subr.mxu0 0.0
        %2527 = vmatpush1.msra.mxu0 0.0
        %2528 = vmatprep.subr.mxu0 0.0
        %2529 = vmatpush1.msra.mxu0 0.0
        %2530 = vmatprep.subr.mxu0 0.0
        %2531 = vmatpush1.msra.mxu0 0.0
        %2532 = vmatprep.mubr.f32.mxu0 0.0
        %2533 = vmatmul.mubr.f32.gmra.mrb[0].mxu0 %v2466
        %v2534 = vpop.f32.mrb[0].mxu0
        %v2535 = vadd.f32 0.0, %v2534
        %v2536 = vpop.f32.mrb[0].mxu0
        %2537 = vdwg.mxu0
        %v2538 = vlaneseq
        %v2539 = vshrl.u32 %v2538, 7
        %v2540 = vsub.s32 0, %v2539
        %v2541 = vrot.slane %v1913, %v2540
        %2543 = vrot.lane.b32.xlu0 %v2541, 96
        %v2544 = vpop.permute.xlu0 %2543
        %v2546 = vmul.f32 %v2535, %v2544
        %2547 = vrot.lane.b32.xlu0 %v2541, 88
        %v2548 = vpop.permute.xlu0 %2547
        %v2550 = vadd.f32 %v2546, %v2548
        %vm2551 = vcmp.gt.f32.partialorder %v2550, 0.0
        %v2552 = vmin.f32 %v2550, 0.0
        %v2553 = vmul.f32 %v2552, 1.442695
        %v2554 = vpow.pop %v2553
        %v2555 = vsub.f32 %v2554, 1.0
        %v2556 = vsel %vm2551, %v2550, %v2555
        %v2558 = vrot.slane %v2556, 5
        %v2560 = vsel %vm251, 0.0, %v2558
        %v2562 = vrot.slane %v2560, 1
        %2563 = vrot.lane.b32.xlu0 %v2562, 8
        %v2564 = vpop.permute.xlu0 %2563
        %v2566 = vrot.slane %v2560, 2
        %2567 = vrot.lane.b32.xlu0 %v2566, 16
        %v2568 = vpop.permute.xlu0 %2567
        %v2570 = vrot.slane %v2560, 3
        %v2571 = vrot.slane %v2558, 3
        %v2572 = vsel %vm312, %v2570, %v2571
        %2573 = vrot.lane.b32.xlu0 %v2572, 24
        %v2574 = vpop.permute.xlu0 %2573
        %v2576 = vsel %vm426, %v2560, %v2564
        %v2577 = vsel %vm436, %v2576, %v2568
        %v2578 = vsel %vm446, %v2577, %v2574
        %2583 = vrot.lane.b32.xlu0 %v1913, 120
        %v2584 = vpop.permute.xlu0 %2583
        %2585 = vrot.lane.b32.xlu0 %v1914, 120
        %v2586 = vpop.permute.xlu0 %2585
        %2587 = vrot.lane.b32.xlu0 %v1915, 120
        %v2588 = vpop.permute.xlu0 %2587
        %2589 = vrot.lane.b32.xlu0 %v1916, 120
        %v2590 = vpop.permute.xlu0 %2589
        %v2596 = vsel %vm456, %v2578, 0
        %2598 = vmatprep.subr.mxu0 0.0
        %2599 = vmatpush1.msra.mxu0 %v2584
        %2600 = vmatprep.subr.mxu0 0.0
        %2601 = vmatpush1.msra.mxu0 %v2586
        %2602 = vmatprep.subr.mxu0 0.0
        %2603 = vmatpush1.msra.mxu0 %v2588
        %2604 = vmatprep.subr.mxu0 0.0
        %2605 = vmatpush1.msra.mxu0 %v2590
        %2606 = vmatprep.subr.mxu0 0.0
        %2607 = vmatpush1.msra.mxu0 0.0
        %2608 = vmatprep.subr.mxu0 0.0
        %2609 = vmatpush1.msra.mxu0 0.0
        %2610 = vmatprep.subr.mxu0 0.0
        %2611 = vmatpush1.msra.mxu0 0.0
        %2612 = vmatprep.subr.mxu0 0.0
        %2613 = vmatpush1.msra.mxu0 0.0
        %2614 = vmatprep.subr.mxu0 0.0
        %2615 = vmatpush1.msra.mxu0 0.0
        %2616 = vmatprep.subr.mxu0 0.0
        %2617 = vmatpush1.msra.mxu0 0.0
        %2618 = vmatprep.subr.mxu0 0.0
        %2619 = vmatpush1.msra.mxu0 0.0
        %2620 = vmatprep.subr.mxu0 0.0
        %2621 = vmatpush1.msra.mxu0 0.0
        %2622 = vmatprep.subr.mxu0 0.0
        %2623 = vmatpush1.msra.mxu0 0.0
        %2624 = vmatprep.subr.mxu0 0.0
        %2625 = vmatpush1.msra.mxu0 0.0
        %2626 = vmatprep.subr.mxu0 0.0
        %2627 = vmatpush1.msra.mxu0 0.0
        %2628 = vmatprep.subr.mxu0 0.0
        %2629 = vmatpush1.msra.mxu0 0.0
        %2630 = vmatprep.subr.mxu0 0.0
        %2631 = vmatpush1.msra.mxu0 0.0
        %2632 = vmatprep.subr.mxu0 0.0
        %2633 = vmatpush1.msra.mxu0 0.0
        %2634 = vmatprep.subr.mxu0 0.0
        %2635 = vmatpush1.msra.mxu0 0.0
        %2636 = vmatprep.subr.mxu0 0.0
        %2637 = vmatpush1.msra.mxu0 0.0
        %2638 = vmatprep.subr.mxu0 0.0
        %2639 = vmatpush1.msra.mxu0 0.0
        %2640 = vmatprep.subr.mxu0 0.0
        %2641 = vmatpush1.msra.mxu0 0.0
        %2642 = vmatprep.subr.mxu0 0.0
        %2643 = vmatpush1.msra.mxu0 0.0
        %2644 = vmatprep.subr.mxu0 0.0
        %2645 = vmatpush1.msra.mxu0 0.0
        %2646 = vmatprep.subr.mxu0 0.0
        %2647 = vmatpush1.msra.mxu0 0.0
        %2648 = vmatprep.subr.mxu0 0.0
        %2649 = vmatpush1.msra.mxu0 0.0
        %2650 = vmatprep.subr.mxu0 0.0
        %2651 = vmatpush1.msra.mxu0 0.0
        %2652 = vmatprep.subr.mxu0 0.0
        %2653 = vmatpush1.msra.mxu0 0.0
        %2654 = vmatprep.subr.mxu0 0.0
        %2655 = vmatpush1.msra.mxu0 0.0
        %2656 = vmatprep.subr.mxu0 0.0
        %2657 = vmatpush1.msra.mxu0 0.0
        %2658 = vmatprep.subr.mxu0 0.0
        %2659 = vmatpush1.msra.mxu0 0.0
        %2660 = vmatprep.subr.mxu0 0.0
        %2661 = vmatpush1.msra.mxu0 0.0
        %2662 = vmatprep.mubr.f32.mxu0 0.0
        %2663 = vmatmul.mubr.f32.gmra.mrb[0].mxu0 %v2596
        %v2664 = vpop.f32.mrb[0].mxu0
        %v2665 = vadd.f32 0.0, %v2664
        %v2666 = vpop.f32.mrb[0].mxu0
        %2667 = vdwg.mxu0
        %v2668 = vlaneseq
        %v2669 = vshrl.u32 %v2668, 7
        %v2670 = vsub.s32 1, %v2669
        %v2671 = vrot.slane %v1913, %v2670
        %2673 = vrot.lane.b32.xlu0 %v2671, 96
        %v2674 = vpop.permute.xlu0 %2673
        %v2676 = vmul.f32 %v2665, %v2674
        %2677 = vrot.lane.b32.xlu0 %v2671, 88
        %v2678 = vpop.permute.xlu0 %2677
        %v2680 = vadd.f32 %v2676, %v2678
        %vm2681 = vcmp.gt.f32.partialorder %v2680, 0.0
        %v2682 = vmin.f32 %v2680, 0.0
        %v2683 = vmul.f32 %v2682, 1.442695
        %v2684 = vpow.pop %v2683
        %v2685 = vsub.f32 %v2684, 1.0
        %v2686 = vsel %vm2681, %v2680, %v2685
        %v2688 = vrot.slane %v2686, 7
        %v2690 = vadd.f32 %v2442, %v2688
        %vm2691 = vcmp.gt.f32.partialorder %v2690, 0.0
        %v2692 = vmin.f32 %v2690, 0.0
        %v2693 = vmul.f32 %v2692, 1.442695
        %v2694 = vpow.pop %v2693
        %v2695 = vsub.f32 %v2694, 1.0
        %v2696 = vsel %vm2691, %v2690, %v2695
        %v2698 = vrot.slane %v2696, 3
        %v2700 = vsel %vm290, 0.0, %v2698
        %v2702 = vrot.slane %v2700, 2
        %2703 = vrot.lane.b32.xlu0 %v2702, 8
        %v2704 = vpop.permute.xlu0 %2703
        %v2706 = vrot.slane %v2700, 4
        %v2707 = vrot.slane %v2698, 4
        %v2708 = vsel %vm334, %v2706, %v2707
        %2709 = vrot.lane.b32.xlu0 %v2708, 16
        %v2710 = vpop.permute.xlu0 %2709
        %v2712 = vrot.slane %v2700, 6
        %v2713 = vrot.slane %v2698, 6
        %v2714 = vsel %vm377, %v2712, %v2713
        %2715 = vrot.lane.b32.xlu0 %v2714, 24
        %v2716 = vpop.permute.xlu0 %2715
        %v2718 = vsel %vm426, %v2700, %v2704
        %v2719 = vsel %vm436, %v2718, %v2710
        %v2720 = vsel %vm446, %v2719, %v2716
        %2721 = vrot.lane.b32.xlu0 %v1913, 112
        %v2722 = vpop.permute.xlu0 %2721
        %2723 = vrot.lane.b32.xlu0 %v1914, 112
        %v2724 = vpop.permute.xlu0 %2723
        %2725 = vrot.lane.b32.xlu0 %v1915, 112
        %v2726 = vpop.permute.xlu0 %2725
        %2727 = vrot.lane.b32.xlu0 %v1916, 112
        %v2728 = vpop.permute.xlu0 %2727
        %v2734 = vsel %vm456, %v2720, 0
        %2736 = vmatprep.subr.mxu0 0.0
        %2737 = vmatpush1.msra.mxu0 %v2722
        %2738 = vmatprep.subr.mxu0 0.0
        %2739 = vmatpush1.msra.mxu0 %v2724
        %2740 = vmatprep.subr.mxu0 0.0
        %2741 = vmatpush1.msra.mxu0 %v2726
        %2742 = vmatprep.subr.mxu0 0.0
        %2743 = vmatpush1.msra.mxu0 %v2728
        %2744 = vmatprep.subr.mxu0 0.0
        %2745 = vmatpush1.msra.mxu0 0.0
        %2746 = vmatprep.subr.mxu0 0.0
        %2747 = vmatpush1.msra.mxu0 0.0
        %2748 = vmatprep.subr.mxu0 0.0
        %2749 = vmatpush1.msra.mxu0 0.0
        %2750 = vmatprep.subr.mxu0 0.0
        %2751 = vmatpush1.msra.mxu0 0.0
        %2752 = vmatprep.subr.mxu0 0.0
        %2753 = vmatpush1.msra.mxu0 0.0
        %2754 = vmatprep.subr.mxu0 0.0
        %2755 = vmatpush1.msra.mxu0 0.0
        %2756 = vmatprep.subr.mxu0 0.0
        %2757 = vmatpush1.msra.mxu0 0.0
        %2758 = vmatprep.subr.mxu0 0.0
        %2759 = vmatpush1.msra.mxu0 0.0
        %2760 = vmatprep.subr.mxu0 0.0
        %2761 = vmatpush1.msra.mxu0 0.0
        %2762 = vmatprep.subr.mxu0 0.0
        %2763 = vmatpush1.msra.mxu0 0.0
        %2764 = vmatprep.subr.mxu0 0.0
        %2765 = vmatpush1.msra.mxu0 0.0
        %2766 = vmatprep.subr.mxu0 0.0
        %2767 = vmatpush1.msra.mxu0 0.0
        %2768 = vmatprep.subr.mxu0 0.0
        %2769 = vmatpush1.msra.mxu0 0.0
        %2770 = vmatprep.subr.mxu0 0.0
        %2771 = vmatpush1.msra.mxu0 0.0
        %2772 = vmatprep.subr.mxu0 0.0
        %2773 = vmatpush1.msra.mxu0 0.0
        %2774 = vmatprep.subr.mxu0 0.0
        %2775 = vmatpush1.msra.mxu0 0.0
        %2776 = vmatprep.subr.mxu0 0.0
        %2777 = vmatpush1.msra.mxu0 0.0
        %2778 = vmatprep.subr.mxu0 0.0
        %2779 = vmatpush1.msra.mxu0 0.0
        %2780 = vmatprep.subr.mxu0 0.0
        %2781 = vmatpush1.msra.mxu0 0.0
        %2782 = vmatprep.subr.mxu0 0.0
        %2783 = vmatpush1.msra.mxu0 0.0
        %2784 = vmatprep.subr.mxu0 0.0
        %2785 = vmatpush1.msra.mxu0 0.0
        %2786 = vmatprep.subr.mxu0 0.0
        %2787 = vmatpush1.msra.mxu0 0.0
        %2788 = vmatprep.subr.mxu0 0.0
        %2789 = vmatpush1.msra.mxu0 0.0
        %2790 = vmatprep.subr.mxu0 0.0
        %2791 = vmatpush1.msra.mxu0 0.0
        %2792 = vmatprep.subr.mxu0 0.0
        %2793 = vmatpush1.msra.mxu0 0.0
        %2794 = vmatprep.subr.mxu0 0.0
        %2795 = vmatpush1.msra.mxu0 0.0
        %2796 = vmatprep.subr.mxu0 0.0
        %2797 = vmatpush1.msra.mxu0 0.0
        %2798 = vmatprep.subr.mxu0 0.0
        %2799 = vmatpush1.msra.mxu0 0.0
        %2800 = vmatprep.mubr.f32.mxu0 0.0
        %2801 = vmatmul.mubr.f32.gmra.mrb[0].mxu0 %v2734
        %v2802 = vpop.f32.mrb[0].mxu0
        %v2803 = vadd.f32 0.0, %v2802
        %v2804 = vpop.f32.mrb[0].mxu0
        %2805 = vdwg.mxu0
        %v2806 = vlaneseq
        %v2807 = vshrl.u32 %v2806, 7
        %v2808 = vsub.s32 2, %v2807
        %v2809 = vrot.slane %v1913, %v2808
        %2811 = vrot.lane.b32.xlu0 %v2809, 96
        %v2812 = vpop.permute.xlu0 %2811
        %v2814 = vmul.f32 %v2803, %v2812
        %2815 = vrot.lane.b32.xlu0 %v2809, 88
        %v2816 = vpop.permute.xlu0 %2815
        %v2818 = vadd.f32 %v2814, %v2816
        %vm2819 = vcmp.gt.f32.partialorder %v2818, 0.0
        %v2820 = vmin.f32 %v2818, 0.0
        %v2821 = vmul.f32 %v2820, 1.442695
        %v2822 = vpow.pop %v2821
        %v2823 = vsub.f32 %v2822, 1.0
        %v2824 = vsel %vm2819, %v2818, %v2823
        %v2826 = vrot.slane %v2824, 2
        %v2828 = vsel %vm290, 0.0, %v2826
        %v2830 = vrot.slane %v2828, 2
        %2831 = vrot.lane.b32.xlu0 %v2830, 8
        %v2832 = vpop.permute.xlu0 %2831
        %v2834 = vrot.slane %v2828, 4
        %v2835 = vrot.slane %v2826, 4
        %v2836 = vsel %vm334, %v2834, %v2835
        %2837 = vrot.lane.b32.xlu0 %v2836, 16
        %v2838 = vpop.permute.xlu0 %2837
        %v2840 = vrot.slane %v2828, 6
        %v2841 = vrot.slane %v2826, 6
        %v2842 = vsel %vm377, %v2840, %v2841
        %2843 = vrot.lane.b32.xlu0 %v2842, 24
        %v2844 = vpop.permute.xlu0 %2843
        %v2846 = vsel %vm426, %v2828, %v2832
        %v2847 = vsel %vm436, %v2846, %v2838
        %v2848 = vsel %vm446, %v2847, %v2844
        %2849 = vrot.lane.b32.xlu0 %v1913, 104
        %v2850 = vpop.permute.xlu0 %2849
        %2851 = vrot.lane.b32.xlu0 %v1914, 104
        %v2852 = vpop.permute.xlu0 %2851
        %2853 = vrot.lane.b32.xlu0 %v1915, 104
        %v2854 = vpop.permute.xlu0 %2853
        %2855 = vrot.lane.b32.xlu0 %v1916, 104
        %v2856 = vpop.permute.xlu0 %2855
        %v2862 = vsel %vm456, %v2848, 0
        %2864 = vmatprep.subr.mxu0 0.0
        %2865 = vmatpush1.msra.mxu0 %v2850
        %2866 = vmatprep.subr.mxu0 0.0
        %2867 = vmatpush1.msra.mxu0 %v2852
        %2868 = vmatprep.subr.mxu0 0.0
        %2869 = vmatpush1.msra.mxu0 %v2854
        %2870 = vmatprep.subr.mxu0 0.0
        %2871 = vmatpush1.msra.mxu0 %v2856
        %2872 = vmatprep.subr.mxu0 0.0
        %2873 = vmatpush1.msra.mxu0 0.0
        %2874 = vmatprep.subr.mxu0 0.0
        %2875 = vmatpush1.msra.mxu0 0.0
        %2876 = vmatprep.subr.mxu0 0.0
        %2877 = vmatpush1.msra.mxu0 0.0
        %2878 = vmatprep.subr.mxu0 0.0
        %2879 = vmatpush1.msra.mxu0 0.0
        %2880 = vmatprep.subr.mxu0 0.0
        %2881 = vmatpush1.msra.mxu0 0.0
        %2882 = vmatprep.subr.mxu0 0.0
        %2883 = vmatpush1.msra.mxu0 0.0
        %2884 = vmatprep.subr.mxu0 0.0
        %2885 = vmatpush1.msra.mxu0 0.0
        %2886 = vmatprep.subr.mxu0 0.0
        %2887 = vmatpush1.msra.mxu0 0.0
        %2888 = vmatprep.subr.mxu0 0.0
        %2889 = vmatpush1.msra.mxu0 0.0
        %2890 = vmatprep.subr.mxu0 0.0
        %2891 = vmatpush1.msra.mxu0 0.0
        %2892 = vmatprep.subr.mxu0 0.0
        %2893 = vmatpush1.msra.mxu0 0.0
        %2894 = vmatprep.subr.mxu0 0.0
        %2895 = vmatpush1.msra.mxu0 0.0
        %2896 = vmatprep.subr.mxu0 0.0
        %2897 = vmatpush1.msra.mxu0 0.0
        %2898 = vmatprep.subr.mxu0 0.0
        %2899 = vmatpush1.msra.mxu0 0.0
        %2900 = vmatprep.subr.mxu0 0.0
        %2901 = vmatpush1.msra.mxu0 0.0
        %2902 = vmatprep.subr.mxu0 0.0
        %2903 = vmatpush1.msra.mxu0 0.0
        %2904 = vmatprep.subr.mxu0 0.0
        %2905 = vmatpush1.msra.mxu0 0.0
        %2906 = vmatprep.subr.mxu0 0.0
        %2907 = vmatpush1.msra.mxu0 0.0
        %2908 = vmatprep.subr.mxu0 0.0
        %2909 = vmatpush1.msra.mxu0 0.0
        %2910 = vmatprep.subr.mxu0 0.0
        %2911 = vmatpush1.msra.mxu0 0.0
        %2912 = vmatprep.subr.mxu0 0.0
        %2913 = vmatpush1.msra.mxu0 0.0
        %2914 = vmatprep.subr.mxu0 0.0
        %2915 = vmatpush1.msra.mxu0 0.0
        %2916 = vmatprep.subr.mxu0 0.0
        %2917 = vmatpush1.msra.mxu0 0.0
        %2918 = vmatprep.subr.mxu0 0.0
        %2919 = vmatpush1.msra.mxu0 0.0
        %2920 = vmatprep.subr.mxu0 0.0
        %2921 = vmatpush1.msra.mxu0 0.0
        %2922 = vmatprep.subr.mxu0 0.0
        %2923 = vmatpush1.msra.mxu0 0.0
        %2924 = vmatprep.subr.mxu0 0.0
        %2925 = vmatpush1.msra.mxu0 0.0
        %2926 = vmatprep.subr.mxu0 0.0
        %2927 = vmatpush1.msra.mxu0 0.0
        %2928 = vmatprep.mubr.f32.mxu0 0.0
        %2929 = vmatmul.mubr.f32.gmra.mrb[0].mxu0 %v2862
        %v2930 = vpop.f32.mrb[0].mxu0
        %v2931 = vadd.f32 0.0, %v2930
        %v2932 = vpop.f32.mrb[0].mxu0
        %2933 = vdwg.mxu0
        %v2934 = vlaneseq
        %v2935 = vshrl.u32 %v2934, 7
        %v2936 = vsub.s32 3, %v2935
        %v2937 = vrot.slane %v1913, %v2936
        %2939 = vrot.lane.b32.xlu0 %v2937, 96
        %v2940 = vpop.permute.xlu0 %2939
        %v2942 = vmul.f32 %v2931, %v2940
        %2943 = vrot.lane.b32.xlu0 %v2937, 88
        %v2944 = vpop.permute.xlu0 %2943
        %v2946 = vadd.f32 %v2942, %v2944
        %vm2947 = vcmp.gt.f32.partialorder %v2946, 0.0
        %v2948 = vmin.f32 %v2946, 0.0
        %v2949 = vmul.f32 %v2948, 1.442695
        %v2950 = vpow.pop %v2949
        %v2951 = vsub.f32 %v2950, 1.0
        %v2952 = vsel %vm2947, %v2946, %v2951
        %v2954 = vrot.slane %v2952, 7
        %v2956 = vadd.f32 %v2696, %v2954
        %vm2957 = vcmp.gt.f32.partialorder %v2956, 0.0
        %v2958 = vmin.f32 %v2956, 0.0
        %v2959 = vmul.f32 %v2958, 1.442695
        %v2960 = vpow.pop %v2959
        %v2961 = vsub.f32 %v2960, 1.0
        %v2962 = vsel %vm2957, %v2956, %v2961
        %v2964 = vrot.slane %v2962, 6
        %2965 = vrot.lane.b32.xlu0 %v1911, 96
        %v2966 = vpop.permute.xlu0 %2965
        %v2968 = vsel %vm426, %v2964, 0
        %2970 = vmatprep.subr.mxu0 0.0
        %2971 = vmatpush1.msra.mxu0 %v2966
        %2972 = vmatprep.subr.mxu0 0.0
        %2973 = vmatpush1.msra.mxu0 0.0
        %2974 = vmatprep.subr.mxu0 0.0
        %2975 = vmatpush1.msra.mxu0 0.0
        %2976 = vmatprep.subr.mxu0 0.0
        %2977 = vmatpush1.msra.mxu0 0.0
        %2978 = vmatprep.subr.mxu0 0.0
        %2979 = vmatpush1.msra.mxu0 0.0
        %2980 = vmatprep.subr.mxu0 0.0
        %2981 = vmatpush1.msra.mxu0 0.0
        %2982 = vmatprep.subr.mxu0 0.0
        %2983 = vmatpush1.msra.mxu0 0.0
        %2984 = vmatprep.subr.mxu0 0.0
        %2985 = vmatpush1.msra.mxu0 0.0
        %2986 = vmatprep.subr.mxu0 0.0
        %2987 = vmatpush1.msra.mxu0 0.0
        %2988 = vmatprep.subr.mxu0 0.0
        %2989 = vmatpush1.msra.mxu0 0.0
        %2990 = vmatprep.subr.mxu0 0.0
        %2991 = vmatpush1.msra.mxu0 0.0
        %2992 = vmatprep.subr.mxu0 0.0
        %2993 = vmatpush1.msra.mxu0 0.0
        %2994 = vmatprep.subr.mxu0 0.0
        %2995 = vmatpush1.msra.mxu0 0.0
        %2996 = vmatprep.subr.mxu0 0.0
        %2997 = vmatpush1.msra.mxu0 0.0
        %2998 = vmatprep.subr.mxu0 0.0
        %2999 = vmatpush1.msra.mxu0 0.0
        %3000 = vmatprep.subr.mxu0 0.0
        %3001 = vmatpush1.msra.mxu0 0.0
        %3002 = vmatprep.subr.mxu0 0.0
        %3003 = vmatpush1.msra.mxu0 0.0
        %3004 = vmatprep.subr.mxu0 0.0
        %3005 = vmatpush1.msra.mxu0 0.0
        %3006 = vmatprep.subr.mxu0 0.0
        %3007 = vmatpush1.msra.mxu0 0.0
        %3008 = vmatprep.subr.mxu0 0.0
        %3009 = vmatpush1.msra.mxu0 0.0
        %3010 = vmatprep.subr.mxu0 0.0
        %3011 = vmatpush1.msra.mxu0 0.0
        %3012 = vmatprep.subr.mxu0 0.0
        %3013 = vmatpush1.msra.mxu0 0.0
        %3014 = vmatprep.subr.mxu0 0.0
        %3015 = vmatpush1.msra.mxu0 0.0
        %3016 = vmatprep.subr.mxu0 0.0
        %3017 = vmatpush1.msra.mxu0 0.0
        %3018 = vmatprep.subr.mxu0 0.0
        %3019 = vmatpush1.msra.mxu0 0.0
        %3020 = vmatprep.subr.mxu0 0.0
        %3021 = vmatpush1.msra.mxu0 0.0
        %3022 = vmatprep.subr.mxu0 0.0
        %3023 = vmatpush1.msra.mxu0 0.0
        %3024 = vmatprep.subr.mxu0 0.0
        %3025 = vmatpush1.msra.mxu0 0.0
        %3026 = vmatprep.subr.mxu0 0.0
        %3027 = vmatpush1.msra.mxu0 0.0
        %3028 = vmatprep.subr.mxu0 0.0
        %3029 = vmatpush1.msra.mxu0 0.0
        %3030 = vmatprep.subr.mxu0 0.0
        %3031 = vmatpush1.msra.mxu0 0.0
        %3032 = vmatprep.subr.mxu0 0.0
        %3033 = vmatpush1.msra.mxu0 0.0
        %3034 = vmatprep.mubr.f32.mxu0 0.0
        %3035 = vmatmul.mubr.f32.gmra.mrb[0].mxu0 %v2968
        %v3036 = vpop.f32.mrb[0].mxu0
        %v3037 = vadd.f32 0.0, %v3036
        %v3038 = vpop.f32.mrb[0].mxu0
        %3039 = vdwg.mxu0
        %v3040 = vadd.f32 %v1907, %v3037
        %3041 = vrot.lane.b32.xlu0 %v1937, 80
        %v3042 = vpop.permute.xlu0 %3041
        %v3044 = vadd.f32 %v3040, %v3042
        %s3045 = scalar_lea.vmem %s2, 16
        %v3046 = vld [vmem:[%s3045] sm:$0xff]
        %s3047 = scalar_lea.vmem [#allocation3], 64
        %v3048 = vld [vmem:[%s3047] sm:$0xff]
        %v3049 = vld [vmem:[%s3047 + $0x8] sm:$0xff]
        %v3050 = vld [vmem:[%s3047 + $0x10] sm:$0xff]
        %v3051 = vld [vmem:[%s3047 + $0x18] sm:$0xff]
        %s3052 = scalar_lea.vmem %s4, 2
        %v3053 = vld [vmem:[%s3052] sm:$0x1]
        %vm3054 = vcmask 64514
        %v3055 = vsel %vm3054, %v786, 0.0
        %3056 = vadd.xlane.f32.xlu0 %v3055
        %v3057 = vpop.xlane.xlu0 %3056
        %v3058 = vmul.f32 %v3057, %v797
        %v3059 = vsub.f32 %v786, %v3058
        %v3060 = vmul.f32 %v3059, %v3059
        %v3061 = vsel %vm3054, %v3060, 0.0
        %3062 = vadd.xlane.f32.xlu0 %v3061
        %v3063 = vpop.xlane.xlu0 %3062
        %v3064 = vmul.f32 %v3063, %v797
        %v3065 = vadd.f32 %v3064, 1e-06
        %v3066 = vrsqrt.pop %v3065
        %v3067 = vmul.f32 %v3059, %v3066
        %v3069 = vlaneseq
        %v3070 = vshrl.u32 %v3069, 7
        %v3071 = vsub.s32 0, %v3070
        %v3072 = vrot.slane %v3053, %v3071
        %v3074 = vmul.f32 %v3067, %v3072
        %3075 = vrot.lane.b32.xlu0 %v3072, 120
        %v3076 = vpop.permute.xlu0 %3075
        %v3078 = vadd.f32 %v3074, %v3076
        %v3080 = vrot.slane %v3078, 2
        %3081 = vrot.lane.b32.xlu0 %v3072, 112
        %v3082 = vpop.permute.xlu0 %3081
        %v3084 = vsel %vm426, %v3080, 0
        %3086 = vmatprep.subr.mxu0 0.0
        %3087 = vmatpush1.msra.mxu0 %v3046
        %3088 = vmatprep.subr.mxu0 0.0
        %3089 = vmatpush1.msra.mxu0 0.0
        %3090 = vmatprep.subr.mxu0 0.0
        %3091 = vmatpush1.msra.mxu0 0.0
        %3092 = vmatprep.subr.mxu0 0.0
        %3093 = vmatpush1.msra.mxu0 0.0
        %3094 = vmatprep.subr.mxu0 0.0
        %3095 = vmatpush1.msra.mxu0 0.0
        %3096 = vmatprep.subr.mxu0 0.0
        %3097 = vmatpush1.msra.mxu0 0.0
        %3098 = vmatprep.subr.mxu0 0.0
        %3099 = vmatpush1.msra.mxu0 0.0
        %3100 = vmatprep.subr.mxu0 0.0
        %3101 = vmatpush1.msra.mxu0 0.0
        %3102 = vmatprep.subr.mxu0 0.0
        %3103 = vmatpush1.msra.mxu0 0.0
        %3104 = vmatprep.subr.mxu0 0.0
        %3105 = vmatpush1.msra.mxu0 0.0
        %3106 = vmatprep.subr.mxu0 0.0
        %3107 = vmatpush1.msra.mxu0 0.0
        %3108 = vmatprep.subr.mxu0 0.0
        %3109 = vmatpush1.msra.mxu0 0.0
        %3110 = vmatprep.subr.mxu0 0.0
        %3111 = vmatpush1.msra.mxu0 0.0
        %3112 = vmatprep.subr.mxu0 0.0
        %3113 = vmatpush1.msra.mxu0 0.0
        %3114 = vmatprep.subr.mxu0 0.0
        %3115 = vmatpush1.msra.mxu0 0.0
        %3116 = vmatprep.subr.mxu0 0.0
        %3117 = vmatpush1.msra.mxu0 0.0
        %3118 = vmatprep.subr.mxu0 0.0
        %3119 = vmatpush1.msra.mxu0 0.0
        %3120 = vmatprep.subr.mxu0 0.0
        %3121 = vmatpush1.msra.mxu0 0.0
        %3122 = vmatprep.subr.mxu0 0.0
        %3123 = vmatpush1.msra.mxu0 0.0
        %3124 = vmatprep.subr.mxu0 0.0
        %3125 = vmatpush1.msra.mxu0 0.0
        %3126 = vmatprep.subr.mxu0 0.0
        %3127 = vmatpush1.msra.mxu0 0.0
        %3128 = vmatprep.subr.mxu0 0.0
        %3129 = vmatpush1.msra.mxu0 0.0
        %3130 = vmatprep.subr.mxu0 0.0
        %3131 = vmatpush1.msra.mxu0 0.0
        %3132 = vmatprep.subr.mxu0 0.0
        %3133 = vmatpush1.msra.mxu0 0.0
        %3134 = vmatprep.subr.mxu0 0.0
        %3135 = vmatpush1.msra.mxu0 0.0
        %3136 = vmatprep.subr.mxu0 0.0
        %3137 = vmatpush1.msra.mxu0 0.0
        %3138 = vmatprep.subr.mxu0 0.0
        %3139 = vmatpush1.msra.mxu0 0.0
        %3140 = vmatprep.subr.mxu0 0.0
        %3141 = vmatpush1.msra.mxu0 0.0
        %3142 = vmatprep.subr.mxu0 0.0
        %3143 = vmatpush1.msra.mxu0 0.0
        %3144 = vmatprep.subr.mxu0 0.0
        %3145 = vmatpush1.msra.mxu0 0.0
        %3146 = vmatprep.subr.mxu0 0.0
        %3147 = vmatpush1.msra.mxu0 0.0
        %3148 = vmatprep.subr.mxu0 0.0
        %3149 = vmatpush1.msra.mxu0 0.0
        %3150 = vmatprep.mubr.f32.mxu0 0.0
        %3151 = vmatmul.mubr.f32.gmra.mrb[0].mxu0 %v3084
        %v3152 = vpop.f32.mrb[0].mxu0
        %v3153 = vadd.f32 %v3082, %v3152
        %v3154 = vpop.f32.mrb[0].mxu0
        %3155 = vdwg.mxu0
        %3157 = vrot.lane.b32.xlu0 %v3153, 120
        %v3158 = vpop.permute.xlu0 %3157
        %v3159 = vsel %vm421, %v3153, 0
        %v3161 = vsel %vm421, %v3158, 0
        %3163 = vmatprep.subr.mxu0 0.0
        %3164 = vmatpush1.xpose.msra.mxu0 %v3161
        %3165 = vmatprep.subr.mxu0 0.0
        %3166 = vmatpush1.xpose.msra.mxu0 0.0
        %3167 = vmatprep.subr.mxu0 0.0
        %3168 = vmatpush1.xpose.msra.mxu0 0.0
        %3169 = vmatprep.subr.mxu0 0.0
        %3170 = vmatpush1.xpose.msra.mxu0 0.0
        %3171 = vmatprep.subr.mxu0 0.0
        %3172 = vmatpush1.xpose.msra.mxu0 0.0
        %3173 = vmatprep.subr.mxu0 0.0
        %3174 = vmatpush1.xpose.msra.mxu0 0.0
        %3175 = vmatprep.subr.mxu0 0.0
        %3176 = vmatpush1.xpose.msra.mxu0 0.0
        %3177 = vmatprep.subr.mxu0 0.0
        %3178 = vmatpush1.xpose.msra.mxu0 0.0
        %3179 = vmatprep.subr.mxu0 0.0
        %3180 = vmatpush1.xpose.msra.mxu0 0.0
        %3181 = vmatprep.subr.mxu0 0.0
        %3182 = vmatpush1.xpose.msra.mxu0 0.0
        %3183 = vmatprep.subr.mxu0 0.0
        %3184 = vmatpush1.xpose.msra.mxu0 0.0
        %3185 = vmatprep.subr.mxu0 0.0
        %3186 = vmatpush1.xpose.msra.mxu0 0.0
        %3187 = vmatprep.subr.mxu0 0.0
        %3188 = vmatpush1.xpose.msra.mxu0 0.0
        %3189 = vmatprep.subr.mxu0 0.0
        %3190 = vmatpush1.xpose.msra.mxu0 0.0
        %3191 = vmatprep.subr.mxu0 0.0
        %3192 = vmatpush1.xpose.msra.mxu0 0.0
        %3193 = vmatprep.subr.mxu0 0.0
        %3194 = vmatpush1.xpose.msra.mxu0 0.0
        %3195 = vmatprep.subr.mxu0 0.0
        %3196 = vmatpush1.xpose.msra.mxu0 0.0
        %3197 = vmatprep.subr.mxu0 0.0
        %3198 = vmatpush1.xpose.msra.mxu0 0.0
        %3199 = vmatprep.subr.mxu0 0.0
        %3200 = vmatpush1.xpose.msra.mxu0 0.0
        %3201 = vmatprep.subr.mxu0 0.0
        %3202 = vmatpush1.xpose.msra.mxu0 0.0
        %3203 = vmatprep.subr.mxu0 0.0
        %3204 = vmatpush1.xpose.msra.mxu0 0.0
        %3205 = vmatprep.subr.mxu0 0.0
        %3206 = vmatpush1.xpose.msra.mxu0 0.0
        %3207 = vmatprep.subr.mxu0 0.0
        %3208 = vmatpush1.xpose.msra.mxu0 0.0
        %3209 = vmatprep.subr.mxu0 0.0
        %3210 = vmatpush1.xpose.msra.mxu0 0.0
        %3211 = vmatprep.subr.mxu0 0.0
        %3212 = vmatpush1.xpose.msra.mxu0 0.0
        %3213 = vmatprep.subr.mxu0 0.0
        %3214 = vmatpush1.xpose.msra.mxu0 0.0
        %3215 = vmatprep.subr.mxu0 0.0
        %3216 = vmatpush1.xpose.msra.mxu0 0.0
        %3217 = vmatprep.subr.mxu0 0.0
        %3218 = vmatpush1.xpose.msra.mxu0 0.0
        %3219 = vmatprep.subr.mxu0 0.0
        %3220 = vmatpush1.xpose.msra.mxu0 0.0
        %3221 = vmatprep.subr.mxu0 0.0
        %3222 = vmatpush1.xpose.msra.mxu0 0.0
        %3223 = vmatprep.subr.mxu0 0.0
        %3224 = vmatpush1.xpose.msra.mxu0 0.0
        %3225 = vmatprep.subr.mxu0 0.0
        %3226 = vmatpush1.xpose.msra.mxu0 0.0
        %3227 = vmatprep.mubr.f32.mxu0 0.0
        %3228 = vmatmul.mubr.f32.gmra.mrb[0].mxu0 %v3159
        %v3229 = vpop.f32.mrb[0].mxu0
        %v3230 = vadd.f32 0.0, %v3229
        %v3231 = vpop.f32.mrb[0].mxu0
        %3232 = vdwg.mxu0
        %v3233 = vmul.f32 %v3230, 0.5
        %v3234 = vsel %vm973, %v3233, -inf
        %3235 = vmax.xlane.f32.xlu0 %v3234
        %v3236 = vpop.xlane.xlu0 %3235
        %v3237 = vsub.f32 %v3233, %v3236
        %v3238 = vmul.f32 %v3237, 1.442695
        %v3239 = vpow.pop %v3238
        %v3240 = vsel %vm973, %v3239, 0.0
        %3241 = vadd.xlane.f32.xlu0 %v3240
        %v3242 = vpop.xlane.xlu0 %3241
        %v3243 = vrcp.pop %v3242
        %v3244 = vmul.f32 %v3239, %v3243
        %3245 = vrot.lane.b32.xlu0 %v3153, 112
        %v3246 = vpop.permute.xlu0 %3245
        %v3248 = vsel %vm987, %v3244, 0
        %v3250 = vsel %vm290, %v3246, 0
        %3252 = vmatprep.subr.mxu0 0.0
        %3253 = vmatpush1.msra.mxu0 %v3250
        %3254 = vmatprep.subr.mxu0 0.0
        %3255 = vmatpush1.msra.mxu0 0.0
        %3256 = vmatprep.subr.mxu0 0.0
        %3257 = vmatpush1.msra.mxu0 0.0
        %3258 = vmatprep.subr.mxu0 0.0
        %3259 = vmatpush1.msra.mxu0 0.0
        %3260 = vmatprep.subr.mxu0 0.0
        %3261 = vmatpush1.msra.mxu0 0.0
        %3262 = vmatprep.subr.mxu0 0.0
        %3263 = vmatpush1.msra.mxu0 0.0
        %3264 = vmatprep.subr.mxu0 0.0
        %3265 = vmatpush1.msra.mxu0 0.0
        %3266 = vmatprep.subr.mxu0 0.0
        %3267 = vmatpush1.msra.mxu0 0.0
        %3268 = vmatprep.subr.mxu0 0.0
        %3269 = vmatpush1.msra.mxu0 0.0
        %3270 = vmatprep.subr.mxu0 0.0
        %3271 = vmatpush1.msra.mxu0 0.0
        %3272 = vmatprep.subr.mxu0 0.0
        %3273 = vmatpush1.msra.mxu0 0.0
        %3274 = vmatprep.subr.mxu0 0.0
        %3275 = vmatpush1.msra.mxu0 0.0
        %3276 = vmatprep.subr.mxu0 0.0
        %3277 = vmatpush1.msra.mxu0 0.0
        %3278 = vmatprep.subr.mxu0 0.0
        %3279 = vmatpush1.msra.mxu0 0.0
        %3280 = vmatprep.subr.mxu0 0.0
        %3281 = vmatpush1.msra.mxu0 0.0
        %3282 = vmatprep.subr.mxu0 0.0
        %3283 = vmatpush1.msra.mxu0 0.0
        %3284 = vmatprep.subr.mxu0 0.0
        %3285 = vmatpush1.msra.mxu0 0.0
        %3286 = vmatprep.subr.mxu0 0.0
        %3287 = vmatpush1.msra.mxu0 0.0
        %3288 = vmatprep.subr.mxu0 0.0
        %3289 = vmatpush1.msra.mxu0 0.0
        %3290 = vmatprep.subr.mxu0 0.0
        %3291 = vmatpush1.msra.mxu0 0.0
        %3292 = vmatprep.subr.mxu0 0.0
        %3293 = vmatpush1.msra.mxu0 0.0
        %3294 = vmatprep.subr.mxu0 0.0
        %3295 = vmatpush1.msra.mxu0 0.0
        %3296 = vmatprep.subr.mxu0 0.0
        %3297 = vmatpush1.msra.mxu0 0.0
        %3298 = vmatprep.subr.mxu0 0.0
        %3299 = vmatpush1.msra.mxu0 0.0
        %3300 = vmatprep.subr.mxu0 0.0
        %3301 = vmatpush1.msra.mxu0 0.0
        %3302 = vmatprep.subr.mxu0 0.0
        %3303 = vmatpush1.msra.mxu0 0.0
        %3304 = vmatprep.subr.mxu0 0.0
        %3305 = vmatpush1.msra.mxu0 0.0
        %3306 = vmatprep.subr.mxu0 0.0
        %3307 = vmatpush1.msra.mxu0 0.0
        %3308 = vmatprep.subr.mxu0 0.0
        %3309 = vmatpush1.msra.mxu0 0.0
        %3310 = vmatprep.subr.mxu0 0.0
        %3311 = vmatpush1.msra.mxu0 0.0
        %3312 = vmatprep.subr.mxu0 0.0
        %3313 = vmatpush1.msra.mxu0 0.0
        %3314 = vmatprep.subr.mxu0 0.0
        %3315 = vmatpush1.msra.mxu0 0.0
        %3316 = vmatprep.mubr.f32.mxu0 0.0
        %3317 = vmatmul.mubr.f32.gmra.mrb[0].mxu0 %v3248
        %v3318 = vpop.f32.mrb[0].mxu0
        %v3319 = vadd.f32 0.0, %v3318
        %v3320 = vpop.f32.mrb[0].mxu0
        %3321 = vdwg.mxu0
        %3322 = vrot.lane.b32.xlu0 %v3153, 124
        %v3323 = vpop.permute.xlu0 %3322
        %3324 = vrot.lane.b32.xlu0 %v3153, 116
        %v3325 = vpop.permute.xlu0 %3324
        %v3326 = vsel %vm421, %v3323, 0
        %v3328 = vsel %vm421, %v3325, 0
        %3330 = vmatprep.subr.mxu0 0.0
        %3331 = vmatpush1.xpose.msra.mxu0 %v3328
        %3332 = vmatprep.subr.mxu0 0.0
        %3333 = vmatpush1.xpose.msra.mxu0 0.0
        %3334 = vmatprep.subr.mxu0 0.0
        %3335 = vmatpush1.xpose.msra.mxu0 0.0
        %3336 = vmatprep.subr.mxu0 0.0
        %3337 = vmatpush1.xpose.msra.mxu0 0.0
        %3338 = vmatprep.subr.mxu0 0.0
        %3339 = vmatpush1.xpose.msra.mxu0 0.0
        %3340 = vmatprep.subr.mxu0 0.0
        %3341 = vmatpush1.xpose.msra.mxu0 0.0
        %3342 = vmatprep.subr.mxu0 0.0
        %3343 = vmatpush1.xpose.msra.mxu0 0.0
        %3344 = vmatprep.subr.mxu0 0.0
        %3345 = vmatpush1.xpose.msra.mxu0 0.0
        %3346 = vmatprep.subr.mxu0 0.0
        %3347 = vmatpush1.xpose.msra.mxu0 0.0
        %3348 = vmatprep.subr.mxu0 0.0
        %3349 = vmatpush1.xpose.msra.mxu0 0.0
        %3350 = vmatprep.subr.mxu0 0.0
        %3351 = vmatpush1.xpose.msra.mxu0 0.0
        %3352 = vmatprep.subr.mxu0 0.0
        %3353 = vmatpush1.xpose.msra.mxu0 0.0
        %3354 = vmatprep.subr.mxu0 0.0
        %3355 = vmatpush1.xpose.msra.mxu0 0.0
        %3356 = vmatprep.subr.mxu0 0.0
        %3357 = vmatpush1.xpose.msra.mxu0 0.0
        %3358 = vmatprep.subr.mxu0 0.0
        %3359 = vmatpush1.xpose.msra.mxu0 0.0
        %3360 = vmatprep.subr.mxu0 0.0
        %3361 = vmatpush1.xpose.msra.mxu0 0.0
        %3362 = vmatprep.subr.mxu0 0.0
        %3363 = vmatpush1.xpose.msra.mxu0 0.0
        %3364 = vmatprep.subr.mxu0 0.0
        %3365 = vmatpush1.xpose.msra.mxu0 0.0
        %3366 = vmatprep.subr.mxu0 0.0
        %3367 = vmatpush1.xpose.msra.mxu0 0.0
        %3368 = vmatprep.subr.mxu0 0.0
        %3369 = vmatpush1.xpose.msra.mxu0 0.0
        %3370 = vmatprep.subr.mxu0 0.0
        %3371 = vmatpush1.xpose.msra.mxu0 0.0
        %3372 = vmatprep.subr.mxu0 0.0
        %3373 = vmatpush1.xpose.msra.mxu0 0.0
        %3374 = vmatprep.subr.mxu0 0.0
        %3375 = vmatpush1.xpose.msra.mxu0 0.0
        %3376 = vmatprep.subr.mxu0 0.0
        %3377 = vmatpush1.xpose.msra.mxu0 0.0
        %3378 = vmatprep.subr.mxu0 0.0
        %3379 = vmatpush1.xpose.msra.mxu0 0.0
        %3380 = vmatprep.subr.mxu0 0.0
        %3381 = vmatpush1.xpose.msra.mxu0 0.0
        %3382 = vmatprep.subr.mxu0 0.0
        %3383 = vmatpush1.xpose.msra.mxu0 0.0
        %3384 = vmatprep.subr.mxu0 0.0
        %3385 = vmatpush1.xpose.msra.mxu0 0.0
        %3386 = vmatprep.subr.mxu0 0.0
        %3387 = vmatpush1.xpose.msra.mxu0 0.0
        %3388 = vmatprep.subr.mxu0 0.0
        %3389 = vmatpush1.xpose.msra.mxu0 0.0
        %3390 = vmatprep.subr.mxu0 0.0
        %3391 = vmatpush1.xpose.msra.mxu0 0.0
        %3392 = vmatprep.subr.mxu0 0.0
        %3393 = vmatpush1.xpose.msra.mxu0 0.0
        %3394 = vmatprep.mubr.f32.mxu0 0.0
        %3395 = vmatmul.mubr.f32.gmra.mrb[0].mxu0 %v3326
        %v3396 = vpop.f32.mrb[0].mxu0
        %v3397 = vadd.f32 0.0, %v3396
        %v3398 = vpop.f32.mrb[0].mxu0
        %3399 = vdwg.mxu0
        %v3400 = vmul.f32 %v3397, 0.5
        %v3401 = vsel %vm973, %v3400, -inf
        %3402 = vmax.xlane.f32.xlu0 %v3401
        %v3403 = vpop.xlane.xlu0 %3402
        %v3404 = vsub.f32 %v3400, %v3403
        %v3405 = vmul.f32 %v3404, 1.442695
        %v3406 = vpow.pop %v3405
        %v3407 = vsel %vm973, %v3406, 0.0
        %3408 = vadd.xlane.f32.xlu0 %v3407
        %v3409 = vpop.xlane.xlu0 %3408
        %v3410 = vrcp.pop %v3409
        %v3411 = vmul.f32 %v3406, %v3410
        %3412 = vrot.lane.b32.xlu0 %v3153, 108
        %v3413 = vpop.permute.xlu0 %3412
        %v3415 = vsel %vm987, %v3411, 0
        %v3417 = vsel %vm290, %v3413, 0
        %3419 = vmatprep.subr.mxu0 0.0
        %3420 = vmatpush1.msra.mxu0 %v3417
        %3421 = vmatprep.subr.mxu0 0.0
        %3422 = vmatpush1.msra.mxu0 0.0
        %3423 = vmatprep.subr.mxu0 0.0
        %3424 = vmatpush1.msra.mxu0 0.0
        %3425 = vmatprep.subr.mxu0 0.0
        %3426 = vmatpush1.msra.mxu0 0.0
        %3427 = vmatprep.subr.mxu0 0.0
        %3428 = vmatpush1.msra.mxu0 0.0
        %3429 = vmatprep.subr.mxu0 0.0
        %3430 = vmatpush1.msra.mxu0 0.0
        %3431 = vmatprep.subr.mxu0 0.0
        %3432 = vmatpush1.msra.mxu0 0.0
        %3433 = vmatprep.subr.mxu0 0.0
        %3434 = vmatpush1.msra.mxu0 0.0
        %3435 = vmatprep.subr.mxu0 0.0
        %3436 = vmatpush1.msra.mxu0 0.0
        %3437 = vmatprep.subr.mxu0 0.0
        %3438 = vmatpush1.msra.mxu0 0.0
        %3439 = vmatprep.subr.mxu0 0.0
        %3440 = vmatpush1.msra.mxu0 0.0
        %3441 = vmatprep.subr.mxu0 0.0
        %3442 = vmatpush1.msra.mxu0 0.0
        %3443 = vmatprep.subr.mxu0 0.0
        %3444 = vmatpush1.msra.mxu0 0.0
        %3445 = vmatprep.subr.mxu0 0.0
        %3446 = vmatpush1.msra.mxu0 0.0
        %3447 = vmatprep.subr.mxu0 0.0
        %3448 = vmatpush1.msra.mxu0 0.0
        %3449 = vmatprep.subr.mxu0 0.0
        %3450 = vmatpush1.msra.mxu0 0.0
        %3451 = vmatprep.subr.mxu0 0.0
        %3452 = vmatpush1.msra.mxu0 0.0
        %3453 = vmatprep.subr.mxu0 0.0
        %3454 = vmatpush1.msra.mxu0 0.0
        %3455 = vmatprep.subr.mxu0 0.0
        %3456 = vmatpush1.msra.mxu0 0.0
        %3457 = vmatprep.subr.mxu0 0.0
        %3458 = vmatpush1.msra.mxu0 0.0
        %3459 = vmatprep.subr.mxu0 0.0
        %3460 = vmatpush1.msra.mxu0 0.0
        %3461 = vmatprep.subr.mxu0 0.0
        %3462 = vmatpush1.msra.mxu0 0.0
        %3463 = vmatprep.subr.mxu0 0.0
        %3464 = vmatpush1.msra.mxu0 0.0
        %3465 = vmatprep.subr.mxu0 0.0
        %3466 = vmatpush1.msra.mxu0 0.0
        %3467 = vmatprep.subr.mxu0 0.0
        %3468 = vmatpush1.msra.mxu0 0.0
        %3469 = vmatprep.subr.mxu0 0.0
        %3470 = vmatpush1.msra.mxu0 0.0
        %3471 = vmatprep.subr.mxu0 0.0
        %3472 = vmatpush1.msra.mxu0 0.0
        %3473 = vmatprep.subr.mxu0 0.0
        %3474 = vmatpush1.msra.mxu0 0.0
        %3475 = vmatprep.subr.mxu0 0.0
        %3476 = vmatpush1.msra.mxu0 0.0
        %3477 = vmatprep.subr.mxu0 0.0
        %3478 = vmatpush1.msra.mxu0 0.0
        %3479 = vmatprep.subr.mxu0 0.0
        %3480 = vmatpush1.msra.mxu0 0.0
        %3481 = vmatprep.subr.mxu0 0.0
        %3482 = vmatpush1.msra.mxu0 0.0
        %3483 = vmatprep.mubr.f32.mxu0 0.0
        %3484 = vmatmul.mubr.f32.gmra.mrb[0].mxu0 %v3415
        %v3485 = vpop.f32.mrb[0].mxu0
        %v3486 = vadd.f32 0.0, %v3485
        %v3487 = vpop.f32.mrb[0].mxu0
        %3488 = vdwg.mxu0
        %3490 = vrot.lane.b32.xlu0 %v3486, 4
        %v3491 = vpop.permute.xlu0 %3490
        %v3493 = vsel %vm421, %v3319, %v3491
        %3495 = vrot.lane.b32.xlu0 %v3046, 104
        %v3496 = vpop.permute.xlu0 %3495
        %3498 = vrot.lane.b32.xlu0 %v3072, 88
        %v3499 = vpop.permute.xlu0 %3498
        %v3502 = vsel %vm426, %v3493, 0
        %3504 = vmatprep.subr.mxu0 0.0
        %3505 = vmatpush1.msra.mxu0 %v3496
        %3506 = vmatprep.subr.mxu0 0.0
        %3507 = vmatpush1.msra.mxu0 0.0
        %3508 = vmatprep.subr.mxu0 0.0
        %3509 = vmatpush1.msra.mxu0 0.0
        %3510 = vmatprep.subr.mxu0 0.0
        %3511 = vmatpush1.msra.mxu0 0.0
        %3512 = vmatprep.subr.mxu0 0.0
        %3513 = vmatpush1.msra.mxu0 0.0
        %3514 = vmatprep.subr.mxu0 0.0
        %3515 = vmatpush1.msra.mxu0 0.0
        %3516 = vmatprep.subr.mxu0 0.0
        %3517 = vmatpush1.msra.mxu0 0.0
        %3518 = vmatprep.subr.mxu0 0.0
        %3519 = vmatpush1.msra.mxu0 0.0
        %3520 = vmatprep.subr.mxu0 0.0
        %3521 = vmatpush1.msra.mxu0 0.0
        %3522 = vmatprep.subr.mxu0 0.0
        %3523 = vmatpush1.msra.mxu0 0.0
        %3524 = vmatprep.subr.mxu0 0.0
        %3525 = vmatpush1.msra.mxu0 0.0
        %3526 = vmatprep.subr.mxu0 0.0
        %3527 = vmatpush1.msra.mxu0 0.0
        %3528 = vmatprep.subr.mxu0 0.0
        %3529 = vmatpush1.msra.mxu0 0.0
        %3530 = vmatprep.subr.mxu0 0.0
        %3531 = vmatpush1.msra.mxu0 0.0
        %3532 = vmatprep.subr.mxu0 0.0
        %3533 = vmatpush1.msra.mxu0 0.0
        %3534 = vmatprep.subr.mxu0 0.0
        %3535 = vmatpush1.msra.mxu0 0.0
        %3536 = vmatprep.subr.mxu0 0.0
        %3537 = vmatpush1.msra.mxu0 0.0
        %3538 = vmatprep.subr.mxu0 0.0
        %3539 = vmatpush1.msra.mxu0 0.0
        %3540 = vmatprep.subr.mxu0 0.0
        %3541 = vmatpush1.msra.mxu0 0.0
        %3542 = vmatprep.subr.mxu0 0.0
        %3543 = vmatpush1.msra.mxu0 0.0
        %3544 = vmatprep.subr.mxu0 0.0
        %3545 = vmatpush1.msra.mxu0 0.0
        %3546 = vmatprep.subr.mxu0 0.0
        %3547 = vmatpush1.msra.mxu0 0.0
        %3548 = vmatprep.subr.mxu0 0.0
        %3549 = vmatpush1.msra.mxu0 0.0
        %3550 = vmatprep.subr.mxu0 0.0
        %3551 = vmatpush1.msra.mxu0 0.0
        %3552 = vmatprep.subr.mxu0 0.0
        %3553 = vmatpush1.msra.mxu0 0.0
        %3554 = vmatprep.subr.mxu0 0.0
        %3555 = vmatpush1.msra.mxu0 0.0
        %3556 = vmatprep.subr.mxu0 0.0
        %3557 = vmatpush1.msra.mxu0 0.0
        %3558 = vmatprep.subr.mxu0 0.0
        %3559 = vmatpush1.msra.mxu0 0.0
        %3560 = vmatprep.subr.mxu0 0.0
        %3561 = vmatpush1.msra.mxu0 0.0
        %3562 = vmatprep.subr.mxu0 0.0
        %3563 = vmatpush1.msra.mxu0 0.0
        %3564 = vmatprep.subr.mxu0 0.0
        %3565 = vmatpush1.msra.mxu0 0.0
        %3566 = vmatprep.subr.mxu0 0.0
        %3567 = vmatpush1.msra.mxu0 0.0
        %3568 = vmatprep.mubr.f32.mxu0 0.0
        %3569 = vmatmul.mubr.f32.gmra.mrb[0].mxu0 %v3502
        %v3570 = vpop.f32.mrb[0].mxu0
        %v3571 = vadd.f32 %v3499, %v3570
        %v3572 = vpop.f32.mrb[0].mxu0
        %3573 = vdwg.mxu0
        %v3575 = vrot.slane %v3571, 6
        %v3577 = vadd.f32 %v786, %v3575
        %v3579 = vrot.slane %v3577, 7
        %v3581 = vsel %vm251, 0.0, %v3579
        %v3583 = vrot.slane %v3581, 1
        %3584 = vrot.lane.b32.xlu0 %v3583, 8
        %v3585 = vpop.permute.xlu0 %3584
        %v3587 = vrot.slane %v3581, 2
        %3588 = vrot.lane.b32.xlu0 %v3587, 16
        %v3589 = vpop.permute.xlu0 %3588
        %v3591 = vrot.slane %v3581, 3
        %v3592 = vrot.slane %v3579, 3
        %v3593 = vsel %vm312, %v3591, %v3592
        %3594 = vrot.lane.b32.xlu0 %v3593, 24
        %v3595 = vpop.permute.xlu0 %3594
        %v3597 = vsel %vm426, %v3581, %v3585
        %v3598 = vsel %vm436, %v3597, %v3589
        %v3599 = vsel %vm446, %v3598, %v3595
        %v3601 = vsel %vm456, %v3599, 0
        %3603 = vmatprep.subr.mxu0 0.0
        %3604 = vmatpush1.msra.mxu0 %v3048
        %3605 = vmatprep.subr.mxu0 0.0
        %3606 = vmatpush1.msra.mxu0 %v3049
        %3607 = vmatprep.subr.mxu0 0.0
        %3608 = vmatpush1.msra.mxu0 %v3050
        %3609 = vmatprep.subr.mxu0 0.0
        %3610 = vmatpush1.msra.mxu0 %v3051
        %3611 = vmatprep.subr.mxu0 0.0
        %3612 = vmatpush1.msra.mxu0 0.0
        %3613 = vmatprep.subr.mxu0 0.0
        %3614 = vmatpush1.msra.mxu0 0.0
        %3615 = vmatprep.subr.mxu0 0.0
        %3616 = vmatpush1.msra.mxu0 0.0
        %3617 = vmatprep.subr.mxu0 0.0
        %3618 = vmatpush1.msra.mxu0 0.0
        %3619 = vmatprep.subr.mxu0 0.0
        %3620 = vmatpush1.msra.mxu0 0.0
        %3621 = vmatprep.subr.mxu0 0.0
        %3622 = vmatpush1.msra.mxu0 0.0
        %3623 = vmatprep.subr.mxu0 0.0
        %3624 = vmatpush1.msra.mxu0 0.0
        %3625 = vmatprep.subr.mxu0 0.0
        %3626 = vmatpush1.msra.mxu0 0.0
        %3627 = vmatprep.subr.mxu0 0.0
        %3628 = vmatpush1.msra.mxu0 0.0
        %3629 = vmatprep.subr.mxu0 0.0
        %3630 = vmatpush1.msra.mxu0 0.0
        %3631 = vmatprep.subr.mxu0 0.0
        %3632 = vmatpush1.msra.mxu0 0.0
        %3633 = vmatprep.subr.mxu0 0.0
        %3634 = vmatpush1.msra.mxu0 0.0
        %3635 = vmatprep.subr.mxu0 0.0
        %3636 = vmatpush1.msra.mxu0 0.0
        %3637 = vmatprep.subr.mxu0 0.0
        %3638 = vmatpush1.msra.mxu0 0.0
        %3639 = vmatprep.subr.mxu0 0.0
        %3640 = vmatpush1.msra.mxu0 0.0
        %3641 = vmatprep.subr.mxu0 0.0
        %3642 = vmatpush1.msra.mxu0 0.0
        %3643 = vmatprep.subr.mxu0 0.0
        %3644 = vmatpush1.msra.mxu0 0.0
        %3645 = vmatprep.subr.mxu0 0.0
        %3646 = vmatpush1.msra.mxu0 0.0
        %3647 = vmatprep.subr.mxu0 0.0
        %3648 = vmatpush1.msra.mxu0 0.0
        %3649 = vmatprep.subr.mxu0 0.0
        %3650 = vmatpush1.msra.mxu0 0.0
        %3651 = vmatprep.subr.mxu0 0.0
        %3652 = vmatpush1.msra.mxu0 0.0
        %3653 = vmatprep.subr.mxu0 0.0
        %3654 = vmatpush1.msra.mxu0 0.0
        %3655 = vmatprep.subr.mxu0 0.0
        %3656 = vmatpush1.msra.mxu0 0.0
        %3657 = vmatprep.subr.mxu0 0.0
        %3658 = vmatpush1.msra.mxu0 0.0
        %3659 = vmatprep.subr.mxu0 0.0
        %3660 = vmatpush1.msra.mxu0 0.0
        %3661 = vmatprep.subr.mxu0 0.0
        %3662 = vmatpush1.msra.mxu0 0.0
        %3663 = vmatprep.subr.mxu0 0.0
        %3664 = vmatpush1.msra.mxu0 0.0
        %3665 = vmatprep.subr.mxu0 0.0
        %3666 = vmatpush1.msra.mxu0 0.0
        %3667 = vmatprep.mubr.f32.mxu0 0.0
        %3668 = vmatmul.mubr.f32.gmra.mrb[0].mxu0 %v3601
        %v3669 = vpop.f32.mrb[0].mxu0
        %v3670 = vadd.f32 0.0, %v3669
        %v3671 = vpop.f32.mrb[0].mxu0
        %3672 = vdwg.mxu0
        %v3673 = vlaneseq
        %v3674 = vshrl.u32 %v3673, 7
        %v3675 = vsub.s32 0, %v3674
        %v3676 = vrot.slane %v3048, %v3675
        %3678 = vrot.lane.b32.xlu0 %v3676, 96
        %v3679 = vpop.permute.xlu0 %3678
        %v3681 = vmul.f32 %v3670, %v3679
        %3682 = vrot.lane.b32.xlu0 %v3676, 88
        %v3683 = vpop.permute.xlu0 %3682
        %v3685 = vadd.f32 %v3681, %v3683
        %vm3686 = vcmp.gt.f32.partialorder %v3685, 0.0
        %v3687 = vmin.f32 %v3685, 0.0
        %v3688 = vmul.f32 %v3687, 1.442695
        %v3689 = vpow.pop %v3688
        %v3690 = vsub.f32 %v3689, 1.0
        %v3691 = vsel %vm3686, %v3685, %v3690
        %v3693 = vrot.slane %v3691, 5
        %v3695 = vsel %vm251, 0.0, %v3693
        %v3697 = vrot.slane %v3695, 1
        %3698 = vrot.lane.b32.xlu0 %v3697, 8
        %v3699 = vpop.permute.xlu0 %3698
        %v3701 = vrot.slane %v3695, 2
        %3702 = vrot.lane.b32.xlu0 %v3701, 16
        %v3703 = vpop.permute.xlu0 %3702
        %v3705 = vrot.slane %v3695, 3
        %v3706 = vrot.slane %v3693, 3
        %v3707 = vsel %vm312, %v3705, %v3706
        %3708 = vrot.lane.b32.xlu0 %v3707, 24
        %v3709 = vpop.permute.xlu0 %3708
        %v3711 = vsel %vm426, %v3695, %v3699
        %v3712 = vsel %vm436, %v3711, %v3703
        %v3713 = vsel %vm446, %v3712, %v3709
        %3718 = vrot.lane.b32.xlu0 %v3048, 120
        %v3719 = vpop.permute.xlu0 %3718
        %3720 = vrot.lane.b32.xlu0 %v3049, 120
        %v3721 = vpop.permute.xlu0 %3720
        %3722 = vrot.lane.b32.xlu0 %v3050, 120
        %v3723 = vpop.permute.xlu0 %3722
        %3724 = vrot.lane.b32.xlu0 %v3051, 120
        %v3725 = vpop.permute.xlu0 %3724
        %v3731 = vsel %vm456, %v3713, 0
        %3733 = vmatprep.subr.mxu0 0.0
        %3734 = vmatpush1.msra.mxu0 %v3719
        %3735 = vmatprep.subr.mxu0 0.0
        %3736 = vmatpush1.msra.mxu0 %v3721
        %3737 = vmatprep.subr.mxu0 0.0
        %3738 = vmatpush1.msra.mxu0 %v3723
        %3739 = vmatprep.subr.mxu0 0.0
        %3740 = vmatpush1.msra.mxu0 %v3725
        %3741 = vmatprep.subr.mxu0 0.0
        %3742 = vmatpush1.msra.mxu0 0.0
        %3743 = vmatprep.subr.mxu0 0.0
        %3744 = vmatpush1.msra.mxu0 0.0
        %3745 = vmatprep.subr.mxu0 0.0
        %3746 = vmatpush1.msra.mxu0 0.0
        %3747 = vmatprep.subr.mxu0 0.0
        %3748 = vmatpush1.msra.mxu0 0.0
        %3749 = vmatprep.subr.mxu0 0.0
        %3750 = vmatpush1.msra.mxu0 0.0
        %3751 = vmatprep.subr.mxu0 0.0
        %3752 = vmatpush1.msra.mxu0 0.0
        %3753 = vmatprep.subr.mxu0 0.0
        %3754 = vmatpush1.msra.mxu0 0.0
        %3755 = vmatprep.subr.mxu0 0.0
        %3756 = vmatpush1.msra.mxu0 0.0
        %3757 = vmatprep.subr.mxu0 0.0
        %3758 = vmatpush1.msra.mxu0 0.0
        %3759 = vmatprep.subr.mxu0 0.0
        %3760 = vmatpush1.msra.mxu0 0.0
        %3761 = vmatprep.subr.mxu0 0.0
        %3762 = vmatpush1.msra.mxu0 0.0
        %3763 = vmatprep.subr.mxu0 0.0
        %3764 = vmatpush1.msra.mxu0 0.0
        %3765 = vmatprep.subr.mxu0 0.0
        %3766 = vmatpush1.msra.mxu0 0.0
        %3767 = vmatprep.subr.mxu0 0.0
        %3768 = vmatpush1.msra.mxu0 0.0
        %3769 = vmatprep.subr.mxu0 0.0
        %3770 = vmatpush1.msra.mxu0 0.0
        %3771 = vmatprep.subr.mxu0 0.0
        %3772 = vmatpush1.msra.mxu0 0.0
        %3773 = vmatprep.subr.mxu0 0.0
        %3774 = vmatpush1.msra.mxu0 0.0
        %3775 = vmatprep.subr.mxu0 0.0
        %3776 = vmatpush1.msra.mxu0 0.0
        %3777 = vmatprep.subr.mxu0 0.0
        %3778 = vmatpush1.msra.mxu0 0.0
        %3779 = vmatprep.subr.mxu0 0.0
        %3780 = vmatpush1.msra.mxu0 0.0
        %3781 = vmatprep.subr.mxu0 0.0
        %3782 = vmatpush1.msra.mxu0 0.0
        %3783 = vmatprep.subr.mxu0 0.0
        %3784 = vmatpush1.msra.mxu0 0.0
        %3785 = vmatprep.subr.mxu0 0.0
        %3786 = vmatpush1.msra.mxu0 0.0
        %3787 = vmatprep.subr.mxu0 0.0
        %3788 = vmatpush1.msra.mxu0 0.0
        %3789 = vmatprep.subr.mxu0 0.0
        %3790 = vmatpush1.msra.mxu0 0.0
        %3791 = vmatprep.subr.mxu0 0.0
        %3792 = vmatpush1.msra.mxu0 0.0
        %3793 = vmatprep.subr.mxu0 0.0
        %3794 = vmatpush1.msra.mxu0 0.0
        %3795 = vmatprep.subr.mxu0 0.0
        %3796 = vmatpush1.msra.mxu0 0.0
        %3797 = vmatprep.mubr.f32.mxu0 0.0
        %3798 = vmatmul.mubr.f32.gmra.mrb[0].mxu0 %v3731
        %v3799 = vpop.f32.mrb[0].mxu0
        %v3800 = vadd.f32 0.0, %v3799
        %v3801 = vpop.f32.mrb[0].mxu0
        %3802 = vdwg.mxu0
        %v3803 = vlaneseq
        %v3804 = vshrl.u32 %v3803, 7
        %v3805 = vsub.s32 1, %v3804
        %v3806 = vrot.slane %v3048, %v3805
        %3808 = vrot.lane.b32.xlu0 %v3806, 96
        %v3809 = vpop.permute.xlu0 %3808
        %v3811 = vmul.f32 %v3800, %v3809
        %3812 = vrot.lane.b32.xlu0 %v3806, 88
        %v3813 = vpop.permute.xlu0 %3812
        %v3815 = vadd.f32 %v3811, %v3813
        %vm3816 = vcmp.gt.f32.partialorder %v3815, 0.0
        %v3817 = vmin.f32 %v3815, 0.0
        %v3818 = vmul.f32 %v3817, 1.442695
        %v3819 = vpow.pop %v3818
        %v3820 = vsub.f32 %v3819, 1.0
        %v3821 = vsel %vm3816, %v3815, %v3820
        %v3823 = vrot.slane %v3821, 6
        %v3825 = vadd.f32 %v3577, %v3823
        %vm3826 = vcmp.gt.f32.partialorder %v3825, 0.0
        %v3827 = vmin.f32 %v3825, 0.0
        %v3828 = vmul.f32 %v3827, 1.442695
        %v3829 = vpow.pop %v3828
        %v3830 = vsub.f32 %v3829, 1.0
        %v3831 = vsel %vm3826, %v3825, %v3830
        %v3833 = vrot.slane %v3831, 4
        %v3835 = vsel %vm290, 0.0, %v3833
        %v3837 = vrot.slane %v3835, 2
        %3838 = vrot.lane.b32.xlu0 %v3837, 8
        %v3839 = vpop.permute.xlu0 %3838
        %v3841 = vrot.slane %v3835, 4
        %v3842 = vrot.slane %v3833, 4
        %v3843 = vsel %vm334, %v3841, %v3842
        %3844 = vrot.lane.b32.xlu0 %v3843, 16
        %v3845 = vpop.permute.xlu0 %3844
        %v3847 = vrot.slane %v3835, 6
        %v3848 = vrot.slane %v3833, 6
        %v3849 = vsel %vm377, %v3847, %v3848
        %3850 = vrot.lane.b32.xlu0 %v3849, 24
        %v3851 = vpop.permute.xlu0 %3850
        %v3853 = vsel %vm426, %v3835, %v3839
        %v3854 = vsel %vm436, %v3853, %v3845
        %v3855 = vsel %vm446, %v3854, %v3851
        %3856 = vrot.lane.b32.xlu0 %v3048, 112
        %v3857 = vpop.permute.xlu0 %3856
        %3858 = vrot.lane.b32.xlu0 %v3049, 112
        %v3859 = vpop.permute.xlu0 %3858
        %3860 = vrot.lane.b32.xlu0 %v3050, 112
        %v3861 = vpop.permute.xlu0 %3860
        %3862 = vrot.lane.b32.xlu0 %v3051, 112
        %v3863 = vpop.permute.xlu0 %3862
        %v3869 = vsel %vm456, %v3855, 0
        %3871 = vmatprep.subr.mxu0 0.0
        %3872 = vmatpush1.msra.mxu0 %v3857
        %3873 = vmatprep.subr.mxu0 0.0
        %3874 = vmatpush1.msra.mxu0 %v3859
        %3875 = vmatprep.subr.mxu0 0.0
        %3876 = vmatpush1.msra.mxu0 %v3861
        %3877 = vmatprep.subr.mxu0 0.0
        %3878 = vmatpush1.msra.mxu0 %v3863
        %3879 = vmatprep.subr.mxu0 0.0
        %3880 = vmatpush1.msra.mxu0 0.0
        %3881 = vmatprep.subr.mxu0 0.0
        %3882 = vmatpush1.msra.mxu0 0.0
        %3883 = vmatprep.subr.mxu0 0.0
        %3884 = vmatpush1.msra.mxu0 0.0
        %3885 = vmatprep.subr.mxu0 0.0
        %3886 = vmatpush1.msra.mxu0 0.0
        %3887 = vmatprep.subr.mxu0 0.0
        %3888 = vmatpush1.msra.mxu0 0.0
        %3889 = vmatprep.subr.mxu0 0.0
        %3890 = vmatpush1.msra.mxu0 0.0
        %3891 = vmatprep.subr.mxu0 0.0
        %3892 = vmatpush1.msra.mxu0 0.0
        %3893 = vmatprep.subr.mxu0 0.0
        %3894 = vmatpush1.msra.mxu0 0.0
        %3895 = vmatprep.subr.mxu0 0.0
        %3896 = vmatpush1.msra.mxu0 0.0
        %3897 = vmatprep.subr.mxu0 0.0
        %3898 = vmatpush1.msra.mxu0 0.0
        %3899 = vmatprep.subr.mxu0 0.0
        %3900 = vmatpush1.msra.mxu0 0.0
        %3901 = vmatprep.subr.mxu0 0.0
        %3902 = vmatpush1.msra.mxu0 0.0
        %3903 = vmatprep.subr.mxu0 0.0
        %3904 = vmatpush1.msra.mxu0 0.0
        %3905 = vmatprep.subr.mxu0 0.0
        %3906 = vmatpush1.msra.mxu0 0.0
        %3907 = vmatprep.subr.mxu0 0.0
        %3908 = vmatpush1.msra.mxu0 0.0
        %3909 = vmatprep.subr.mxu0 0.0
        %3910 = vmatpush1.msra.mxu0 0.0
        %3911 = vmatprep.subr.mxu0 0.0
        %3912 = vmatpush1.msra.mxu0 0.0
        %3913 = vmatprep.subr.mxu0 0.0
        %3914 = vmatpush1.msra.mxu0 0.0
        %3915 = vmatprep.subr.mxu0 0.0
        %3916 = vmatpush1.msra.mxu0 0.0
        %3917 = vmatprep.subr.mxu0 0.0
        %3918 = vmatpush1.msra.mxu0 0.0
        %3919 = vmatprep.subr.mxu0 0.0
        %3920 = vmatpush1.msra.mxu0 0.0
        %3921 = vmatprep.subr.mxu0 0.0
        %3922 = vmatpush1.msra.mxu0 0.0
        %3923 = vmatprep.subr.mxu0 0.0
        %3924 = vmatpush1.msra.mxu0 0.0
        %3925 = vmatprep.subr.mxu0 0.0
        %3926 = vmatpush1.msra.mxu0 0.0
        %3927 = vmatprep.subr.mxu0 0.0
        %3928 = vmatpush1.msra.mxu0 0.0
        %3929 = vmatprep.subr.mxu0 0.0
        %3930 = vmatpush1.msra.mxu0 0.0
        %3931 = vmatprep.subr.mxu0 0.0
        %3932 = vmatpush1.msra.mxu0 0.0
        %3933 = vmatprep.subr.mxu0 0.0
        %3934 = vmatpush1.msra.mxu0 0.0
        %3935 = vmatprep.mubr.f32.mxu0 0.0
        %3936 = vmatmul.mubr.f32.gmra.mrb[0].mxu0 %v3869
        %v3937 = vpop.f32.mrb[0].mxu0
        %v3938 = vadd.f32 0.0, %v3937
        %v3939 = vpop.f32.mrb[0].mxu0
        %3940 = vdwg.mxu0
        %v3941 = vlaneseq
        %v3942 = vshrl.u32 %v3941, 7
        %v3943 = vsub.s32 2, %v3942
        %v3944 = vrot.slane %v3048, %v3943
        %3946 = vrot.lane.b32.xlu0 %v3944, 96
        %v3947 = vpop.permute.xlu0 %3946
        %v3949 = vmul.f32 %v3938, %v3947
        %3950 = vrot.lane.b32.xlu0 %v3944, 88
        %v3951 = vpop.permute.xlu0 %3950
        %v3953 = vadd.f32 %v3949, %v3951
        %vm3954 = vcmp.gt.f32.partialorder %v3953, 0.0
        %v3955 = vmin.f32 %v3953, 0.0
        %v3956 = vmul.f32 %v3955, 1.442695
        %v3957 = vpow.pop %v3956
        %v3958 = vsub.f32 %v3957, 1.0
        %v3959 = vsel %vm3954, %v3953, %v3958
        %v3961 = vrot.slane %v3959, 2
        %v3963 = vsel %vm290, 0.0, %v3961
        %v3965 = vrot.slane %v3963, 2
        %3966 = vrot.lane.b32.xlu0 %v3965, 8
        %v3967 = vpop.permute.xlu0 %3966
        %v3969 = vrot.slane %v3963, 4
        %v3970 = vrot.slane %v3961, 4
        %v3971 = vsel %vm334, %v3969, %v3970
        %3972 = vrot.lane.b32.xlu0 %v3971, 16
        %v3973 = vpop.permute.xlu0 %3972
        %v3975 = vrot.slane %v3963, 6
        %v3976 = vrot.slane %v3961, 6
        %v3977 = vsel %vm377, %v3975, %v3976
        %3978 = vrot.lane.b32.xlu0 %v3977, 24
        %v3979 = vpop.permute.xlu0 %3978
        %v3981 = vsel %vm426, %v3963, %v3967
        %v3982 = vsel %vm436, %v3981, %v3973
        %v3983 = vsel %vm446, %v3982, %v3979
        %3984 = vrot.lane.b32.xlu0 %v3048, 104
        %v3985 = vpop.permute.xlu0 %3984
        %3986 = vrot.lane.b32.xlu0 %v3049, 104
        %v3987 = vpop.permute.xlu0 %3986
        %3988 = vrot.lane.b32.xlu0 %v3050, 104
        %v3989 = vpop.permute.xlu0 %3988
        %3990 = vrot.lane.b32.xlu0 %v3051, 104
        %v3991 = vpop.permute.xlu0 %3990
        %v3997 = vsel %vm456, %v3983, 0
        %3999 = vmatprep.subr.mxu0 0.0
        %4000 = vmatpush1.msra.mxu0 %v3985
        %4001 = vmatprep.subr.mxu0 0.0
        %4002 = vmatpush1.msra.mxu0 %v3987
        %4003 = vmatprep.subr.mxu0 0.0
        %4004 = vmatpush1.msra.mxu0 %v3989
        %4005 = vmatprep.subr.mxu0 0.0
        %4006 = vmatpush1.msra.mxu0 %v3991
        %4007 = vmatprep.subr.mxu0 0.0
        %4008 = vmatpush1.msra.mxu0 0.0
        %4009 = vmatprep.subr.mxu0 0.0
        %4010 = vmatpush1.msra.mxu0 0.0
        %4011 = vmatprep.subr.mxu0 0.0
        %4012 = vmatpush1.msra.mxu0 0.0
        %4013 = vmatprep.subr.mxu0 0.0
        %4014 = vmatpush1.msra.mxu0 0.0
        %4015 = vmatprep.subr.mxu0 0.0
        %4016 = vmatpush1.msra.mxu0 0.0
        %4017 = vmatprep.subr.mxu0 0.0
        %4018 = vmatpush1.msra.mxu0 0.0
        %4019 = vmatprep.subr.mxu0 0.0
        %4020 = vmatpush1.msra.mxu0 0.0
        %4021 = vmatprep.subr.mxu0 0.0
        %4022 = vmatpush1.msra.mxu0 0.0
        %4023 = vmatprep.subr.mxu0 0.0
        %4024 = vmatpush1.msra.mxu0 0.0
        %4025 = vmatprep.subr.mxu0 0.0
        %4026 = vmatpush1.msra.mxu0 0.0
        %4027 = vmatprep.subr.mxu0 0.0
        %4028 = vmatpush1.msra.mxu0 0.0
        %4029 = vmatprep.subr.mxu0 0.0
        %4030 = vmatpush1.msra.mxu0 0.0
        %4031 = vmatprep.subr.mxu0 0.0
        %4032 = vmatpush1.msra.mxu0 0.0
        %4033 = vmatprep.subr.mxu0 0.0
        %4034 = vmatpush1.msra.mxu0 0.0
        %4035 = vmatprep.subr.mxu0 0.0
        %4036 = vmatpush1.msra.mxu0 0.0
        %4037 = vmatprep.subr.mxu0 0.0
        %4038 = vmatpush1.msra.mxu0 0.0
        %4039 = vmatprep.subr.mxu0 0.0
        %4040 = vmatpush1.msra.mxu0 0.0
        %4041 = vmatprep.subr.mxu0 0.0
        %4042 = vmatpush1.msra.mxu0 0.0
        %4043 = vmatprep.subr.mxu0 0.0
        %4044 = vmatpush1.msra.mxu0 0.0
        %4045 = vmatprep.subr.mxu0 0.0
        %4046 = vmatpush1.msra.mxu0 0.0
        %4047 = vmatprep.subr.mxu0 0.0
        %4048 = vmatpush1.msra.mxu0 0.0
        %4049 = vmatprep.subr.mxu0 0.0
        %4050 = vmatpush1.msra.mxu0 0.0
        %4051 = vmatprep.subr.mxu0 0.0
        %4052 = vmatpush1.msra.mxu0 0.0
        %4053 = vmatprep.subr.mxu0 0.0
        %4054 = vmatpush1.msra.mxu0 0.0
        %4055 = vmatprep.subr.mxu0 0.0
        %4056 = vmatpush1.msra.mxu0 0.0
        %4057 = vmatprep.subr.mxu0 0.0
        %4058 = vmatpush1.msra.mxu0 0.0
        %4059 = vmatprep.subr.mxu0 0.0
        %4060 = vmatpush1.msra.mxu0 0.0
        %4061 = vmatprep.subr.mxu0 0.0
        %4062 = vmatpush1.msra.mxu0 0.0
        %4063 = vmatprep.mubr.f32.mxu0 0.0
        %4064 = vmatmul.mubr.f32.gmra.mrb[0].mxu0 %v3997
        %v4065 = vpop.f32.mrb[0].mxu0
        %v4066 = vadd.f32 0.0, %v4065
        %v4067 = vpop.f32.mrb[0].mxu0
        %4068 = vdwg.mxu0
        %v4069 = vlaneseq
        %v4070 = vshrl.u32 %v4069, 7
        %v4071 = vsub.s32 3, %v4070
        %v4072 = vrot.slane %v3048, %v4071
        %4074 = vrot.lane.b32.xlu0 %v4072, 96
        %v4075 = vpop.permute.xlu0 %4074
        %v4077 = vmul.f32 %v4066, %v4075
        %4078 = vrot.lane.b32.xlu0 %v4072, 88
        %v4079 = vpop.permute.xlu0 %4078
        %v4081 = vadd.f32 %v4077, %v4079
        %vm4082 = vcmp.gt.f32.partialorder %v4081, 0.0
        %v4083 = vmin.f32 %v4081, 0.0
        %v4084 = vmul.f32 %v4083, 1.442695
        %v4085 = vpow.pop %v4084
        %v4086 = vsub.f32 %v4085, 1.0
        %v4087 = vsel %vm4082, %v4081, %v4086
        %v4089 = vrot.slane %v4087, 6
        %v4091 = vadd.f32 %v3831, %v4089
        %vm4092 = vcmp.gt.f32.partialorder %v4091, 0.0
        %v4093 = vmin.f32 %v4091, 0.0
        %v4094 = vmul.f32 %v4093, 1.442695
        %v4095 = vpow.pop %v4094
        %v4096 = vsub.f32 %v4095, 1.0
        %v4097 = vsel %vm4092, %v4091, %v4096
        %v4099 = vrot.slane %v4097, 7
        %4100 = vrot.lane.b32.xlu0 %v3046, 96
        %v4101 = vpop.permute.xlu0 %4100
        %v4103 = vsel %vm426, %v4099, 0
        %4105 = vmatprep.subr.mxu0 0.0
        %4106 = vmatpush1.msra.mxu0 %v4101
        %4107 = vmatprep.subr.mxu0 0.0
        %4108 = vmatpush1.msra.mxu0 0.0
        %4109 = vmatprep.subr.mxu0 0.0
        %4110 = vmatpush1.msra.mxu0 0.0
        %4111 = vmatprep.subr.mxu0 0.0
        %4112 = vmatpush1.msra.mxu0 0.0
        %4113 = vmatprep.subr.mxu0 0.0
        %4114 = vmatpush1.msra.mxu0 0.0
        %4115 = vmatprep.subr.mxu0 0.0
        %4116 = vmatpush1.msra.mxu0 0.0
        %4117 = vmatprep.subr.mxu0 0.0
        %4118 = vmatpush1.msra.mxu0 0.0
        %4119 = vmatprep.subr.mxu0 0.0
        %4120 = vmatpush1.msra.mxu0 0.0
        %4121 = vmatprep.subr.mxu0 0.0
        %4122 = vmatpush1.msra.mxu0 0.0
        %4123 = vmatprep.subr.mxu0 0.0
        %4124 = vmatpush1.msra.mxu0 0.0
        %4125 = vmatprep.subr.mxu0 0.0
        %4126 = vmatpush1.msra.mxu0 0.0
        %4127 = vmatprep.subr.mxu0 0.0
        %4128 = vmatpush1.msra.mxu0 0.0
        %4129 = vmatprep.subr.mxu0 0.0
        %4130 = vmatpush1.msra.mxu0 0.0
        %4131 = vmatprep.subr.mxu0 0.0
        %4132 = vmatpush1.msra.mxu0 0.0
        %4133 = vmatprep.subr.mxu0 0.0
        %4134 = vmatpush1.msra.mxu0 0.0
        %4135 = vmatprep.subr.mxu0 0.0
        %4136 = vmatpush1.msra.mxu0 0.0
        %4137 = vmatprep.subr.mxu0 0.0
        %4138 = vmatpush1.msra.mxu0 0.0
        %4139 = vmatprep.subr.mxu0 0.0
        %4140 = vmatpush1.msra.mxu0 0.0
        %4141 = vmatprep.subr.mxu0 0.0
        %4142 = vmatpush1.msra.mxu0 0.0
        %4143 = vmatprep.subr.mxu0 0.0
        %4144 = vmatpush1.msra.mxu0 0.0
        %4145 = vmatprep.subr.mxu0 0.0
        %4146 = vmatpush1.msra.mxu0 0.0
        %4147 = vmatprep.subr.mxu0 0.0
        %4148 = vmatpush1.msra.mxu0 0.0
        %4149 = vmatprep.subr.mxu0 0.0
        %4150 = vmatpush1.msra.mxu0 0.0
        %4151 = vmatprep.subr.mxu0 0.0
        %4152 = vmatpush1.msra.mxu0 0.0
        %4153 = vmatprep.subr.mxu0 0.0
        %4154 = vmatpush1.msra.mxu0 0.0
        %4155 = vmatprep.subr.mxu0 0.0
        %4156 = vmatpush1.msra.mxu0 0.0
        %4157 = vmatprep.subr.mxu0 0.0
        %4158 = vmatpush1.msra.mxu0 0.0
        %4159 = vmatprep.subr.mxu0 0.0
        %4160 = vmatpush1.msra.mxu0 0.0
        %4161 = vmatprep.subr.mxu0 0.0
        %4162 = vmatpush1.msra.mxu0 0.0
        %4163 = vmatprep.subr.mxu0 0.0
        %4164 = vmatpush1.msra.mxu0 0.0
        %4165 = vmatprep.subr.mxu0 0.0
        %4166 = vmatpush1.msra.mxu0 0.0
        %4167 = vmatprep.subr.mxu0 0.0
        %4168 = vmatpush1.msra.mxu0 0.0
        %4169 = vmatprep.mubr.f32.mxu0 0.0
        %4170 = vmatmul.mubr.f32.gmra.mrb[0].mxu0 %v4103
        %v4171 = vpop.f32.mrb[0].mxu0
        %v4172 = vadd.f32 0.0, %v4171
        %v4173 = vpop.f32.mrb[0].mxu0
        %4174 = vdwg.mxu0
        %v4175 = vadd.f32 %v3044, %v4172
        %4176 = vrot.lane.b32.xlu0 %v3072, 80
        %v4177 = vpop.permute.xlu0 %4176
        %v4179 = vadd.f32 %v4175, %v4177
        %v4180 = vmul.f32 %v4179, 0.33333334
        %vm4181 = vcmask 16384
        %v4182 = vsel %vm4181, %v4180, -inf
        %4183 = vmax.xlane.f32.xlu0 %v4182
        %v4184 = vpop.xlane.xlu0 %4183
        %v4185 = vsub.f32 %v4180, %v4184
        %v4186 = vmul.f32 %v4185, 1.442695
        %v4187 = vpow.pop %v4186
        %v4188 = vsel %vm4181, %v4187, 0.0
        %4189 = vadd.xlane.f32.xlu0 %v4188
        %v4190 = vpop.xlane.xlu0 %4189
        %v4191 = vrcp.pop %v4190
        %v4192 = vmul.f32 %v4187, %v4191
        %4193 = vst.msk [vmem:[%s231] sm:$0x1] %vm4181, %v4192
        %s4194 = sand.u32 %s138, 1
        %s4195 = scalar_lea.sflag [#allocation5], %s4194
        %s4196 = sand.u32 %s138, 1
        %s4197 = scalar_lea.vmem [#allocation6], %s4196
        // Predicated region
        $region45: #{_lambda_.1} parent=39 // pred_check
          %p4198 = pneg %p148
        $region46: #{_lambda_.1} parent=39 // pred_check_branch
          %4200 = sbr.rel (%p4198) target = $region48
        $region47: #{_lambda_.1} parent=39 // pred_region
          %s4202 = ssub.s32 16, 16
          %4203 = vsyncadd %s4195, %s4202
          %s4204 = smul.addr %s20, 16
          %s4205 = scalar_lea.hbm %s5, %s4204
          %s4207 = sshll.u32 %s4197, 4
          %s4208 = int_to_ptr.vmem [resolvable:$true] %s4207
          %4210 = dma.vmem_to_hbm [thread:$0]  %s4208, 16, %s4205, %s4195
        $region48: #{_lambda_.1} parent=39 // pred_fallthru
          _
      $region40: #{_lambda_.1} parent=5 // pred_fallthru
        _
      %p4211 = scmp.le.s32.totalorder 2, %s15
      // Predicated region
      $region49: #{_lambda_.1} parent=5 // pred_check
        %p4212 = pneg %p4211
      $region50: #{_lambda_.1} parent=5 // pred_check_branch
        %4214 = sbr.rel (%p4212) target = $region52
      $region51: #{_lambda_.1} parent=5 // pred_region
        %s4215 = ssub.s32 %s15, 2
        // Predicated region
        $region53: #{_lambda_.1} parent=51 // pred_check
          %p4216 = pneg %p154
        $region54: #{_lambda_.1} parent=51 // pred_check_branch
          %4218 = sbr.rel (%p4216) target = $region56
        $region55: #{_lambda_.1} parent=51 // pred_region
          %s4219 = sand.u32 %s139, 1
          %s4220 = scalar_lea.sflag [#allocation5], %s4219
          %s4221 = sand.u32 %s139, 1
          %s4222 = scalar_lea.vmem [#allocation6], %s4221
          %4223 = dma.done %s4220, 16
        $region56: #{_lambda_.1} parent=51 // pred_fallthru
          _
      $region52: #{_lambda_.1} parent=5 // pred_fallthru
        _
    $region6: #{_lambda_.1} parent=1 // loop_footer
      %s19 = sadd.s32 1, %s15
    $region7: #{_lambda_.1} parent=1 // loop_footer_branch
      %14 = sbr.rel target = $region3
    $region8: #{_lambda_.1} parent=1 // loop_exit
      _
    %4224 = vsyncpa [#allocation4], 1
    %s4225 = scalar_lea.sflag [#allocation4], 1
    %4226 = vsyncpa %s4225, 1
    %4227 = vsyncpa [#allocation5], 1
    %s4228 = scalar_lea.sflag [#allocation5], 1
    %4229 = vsyncpa %s4228, 1

</llo_original>
